<compile_context>
chip_gen: v7x
topology: tpu7x:2x2x1
jax: 0.10.0
libtpu: 0.0.40
codegen_flags: <defaults>
</compile_context>

<pallas_src>
import functools

import jax
import jax.numpy as jnp
from jax.experimental import pallas as pl
from jax.experimental.pallas import tpu as pltpu


def rnn_forward_kernel(emb_ref, wih_x_ref, bih_ref, m_scan_ref,
                       wio_x_ref, wio_h_ref, bio_ref, out_ref, *, bp, t):
    """One batch block (bp sequences x t steps) of the fused RNN forward.

    emb_ref:    (t*bp, D)      bf16  rows are (time, batch) within the block
    wih_x_ref:  (D, Hp)        bf16  i2h weight, input part (lane padded)
    bih_ref:    (1, Hp)        f32   i2h bias (pad lanes = 0)
    m_scan_ref: (t*Hp, t*Hp)   bf16  block-upper-triangular Wh powers (the whole scan)
    wio_x_ref:  (D, Op)        bf16  i2o weight, input part (lane padded)
    wio_h_ref:  (Hp, Op)       bf16  i2o weight, hidden part (lane padded)
    bio_ref:    (1, Op)        f32   i2o bias (pad lanes = -1e30)
    out_ref:    (t*bp, Op)     f32   log-softmax outputs, time-major within the block
    """
    emb = emb_ref[...]                                                  # (t*bp, D)
    hp = m_scan_ref.shape[0] // t

    # Input-dependent parts of i2h / i2o: two large row-batched MXU matmuls.
    xh = jnp.dot(emb, wih_x_ref[...],
                 preferred_element_type=jnp.float32) + bih_ref[...]     # (t*bp, Hp)
    xo = jnp.dot(emb, wio_x_ref[...],
                 preferred_element_type=jnp.float32) + bio_ref[...]     # (t*bp, Op)

    # Move time onto the lane axis: each step's (bp, Hp) slab is a full (8,128) tile,
    # so these concatenations are plain vreg movement (no masked / sublane shuffles).
    xh_bm = jnp.concatenate(
        [xh[s * bp:(s + 1) * bp, :] for s in range(t)], axis=1)         # (bp, t*Hp)

    # The ENTIRE linear recurrence as one matmul (no serial chain, no per-step pops).
    h_bm = jnp.dot(xh_bm.astype(jnp.bfloat16), m_scan_ref[...],
                   preferred_element_type=jnp.float32)                  # (bp, t*Hp)

    # Back to time-major rows: block t' holds the PRE-update hidden h_{t'}.
    h_all = jnp.concatenate(
        [h_bm[:, s * hp:(s + 1) * hp] for s in range(t)], axis=0)       # (t*bp, Hp)

    # Hidden part of i2o, batched over every (step, batch) row at once.
    logits = xo + jnp.dot(h_all.astype(jnp.bfloat16), wio_h_ref[...],
                          preferred_element_type=jnp.float32)           # (t*bp, Op)

    # Single vectorized, numerically-stable f32 log-softmax + one lane-dense store.
    # Padded lanes carry bias -1e30 so they affect neither the max nor the sum.
    mx = jnp.max(logits, axis=-1, keepdims=True)
    shifted = logits - mx
    lse = jnp.log(jnp.sum(jnp.exp(shifted), axis=-1, keepdims=True))
    out_ref[...] = shifted - lse


def rnn_forward(tokens, emb_table, w_i2h, b_i2h, w_i2o, b_i2o):
    """tokens: (B, T) int32; emb_table: (V, D);
    w_i2h: (D+H, H); b_i2h: (H,); w_i2o: (D+H, O); b_i2o: (O,).  Returns (B, T, O)."""
    B, T = tokens.shape
    _, D = emb_table.shape
    H = w_i2h.shape[1]
    O = w_i2o.shape[1]

    BP = 8                                   # sequences per grid block (sublane tile)
    B_pad = -(-B // BP) * BP
    n_blocks = B_pad // BP
    H_pad = 128                              # lane-dense hidden width
    O_pad = max(128, -(-O // 128) * 128)     # lane-dense output width

    # --- Embedding gather directly into the kernel's (block, time, batch) row layout.
    # TODO(synk): fuse the gather via PrefetchScalarGridSpec row-gather (pl.Element)
    #             for realistic vocab / sequence sizes.
    tok_p = jnp.pad(tokens, ((0, B_pad - B), (0, 0)))                       # (B_pad, T)
    tok_btb = jnp.transpose(tok_p.reshape(n_blocks, BP, T), (0, 2, 1))      # (blk,T,BP)
    emb_flat = jnp.take(emb_table, tok_btb.reshape(-1), axis=0)             # (blk*T*BP,D)
    emb_flat = emb_flat.astype(jnp.bfloat16)

    # --- cat(x, h) @ W == x @ Wx + h @ Wh: split, pad lane-dense, cast matmul operands
    #     to bf16 (biases stay f32).
    wih_x, wih_h = w_i2h[:D], w_i2h[D:]
    wio_x, wio_h = w_i2o[:D], w_i2o[D:]
    wih_x_p = jnp.pad(wih_x, ((0, 0), (0, H_pad - H))).astype(jnp.bfloat16)
    bih_p = jnp.pad(b_i2h.reshape(1, H), ((0, 0), (0, H_pad - H)))          # f32
    wio_x_p = jnp.pad(wio_x, ((0, 0), (0, O_pad - O))).astype(jnp.bfloat16)
    wio_h_p = jnp.pad(wio_h, ((0, H_pad - H), (0, O_pad - O))).astype(jnp.bfloat16)
    bio_p = jnp.pad(b_i2o.reshape(1, O), ((0, 0), (0, O_pad - O)),
                    constant_values=-1e30)                                  # f32

    # --- Block-upper-triangular matrix of Wh powers: block (s, t') = Wh^(t'-1-s) for
    #     s < t', else 0.  Built once (weight preprocessing), powers accumulated in f32.
    wh_p = jnp.pad(wih_h, ((0, H_pad - H), (0, H_pad - H)))
    powers = [jnp.eye(H_pad, dtype=jnp.float32)]
    for _ in range(T - 2):
        powers.append(powers[-1] @ wh_p)
    zero = jnp.zeros((H_pad, H_pad), jnp.float32)
    m_scan = jnp.block([[powers[tt - 1 - s] if tt > s else zero for tt in range(T)]
                        for s in range(T)]).astype(jnp.bfloat16)            # (T*Hp,T*Hp)
    # TODO(synk): for long T, chunk the scan (powers only up to chunk length) and carry
    #             h across chunks in a VMEM accumulator over an "arbitrary" time-chunk
    #             grid axis — bounds drift and the (T*Hp)^2 footprint (v7x: 64 MiB VMEM).

    rows_per_block = T * BP
    rows = n_blocks * rows_per_block
    flops = (2 * rows * D * (H_pad + O_pad)
             + 2 * n_blocks * BP * (T * H_pad) ** 2
             + 2 * rows * H_pad * O_pad)
    cost = pl.CostEstimate(
        flops=flops,
        transcendentals=rows * (O_pad + 1),
        bytes_accessed=(2 * (rows * D + D * H_pad + D * O_pad
                             + (T * H_pad) ** 2 + H_pad * O_pad)
                        + 4 * (H_pad + O_pad + rows * O_pad)))

    grid_spec = pltpu.PrefetchScalarGridSpec(
        num_scalar_prefetch=0,
        grid=(n_blocks,),                                   # parallel over batch blocks
        in_specs=[
            pl.BlockSpec((rows_per_block, D), lambda i: (i, 0)),
            pl.BlockSpec((D, H_pad), lambda i: (0, 0)),
            pl.BlockSpec((1, H_pad), lambda i: (0, 0)),
            pl.BlockSpec((T * H_pad, T * H_pad), lambda i: (0, 0)),
            pl.BlockSpec((D, O_pad), lambda i: (0, 0)),
            pl.BlockSpec((H_pad, O_pad), lambda i: (0, 0)),
            pl.BlockSpec((1, O_pad), lambda i: (0, 0)),
        ],
        out_specs=pl.BlockSpec((rows_per_block, O_pad), lambda i: (i, 0)),
    )

    out_flat = pl.pallas_call(
        functools.partial(rnn_forward_kernel, bp=BP, t=T),
        out_shape=jax.ShapeDtypeStruct((rows, O_pad), jnp.float32),
        grid_spec=grid_spec,
        compiler_params=pltpu.CompilerParams(
            dimension_semantics=("parallel",),          # v7x: 2 TCs split batch blocks
            vmem_limit_bytes=32 * 1024 * 1024),         # headroom (v5e default is 16 MiB)
        cost_estimate=cost,
    )(emb_flat, wih_x_p, bih_p, m_scan, wio_x_p, wio_h_p, bio_p)

    # (blk, T, BP, O_pad) -> (B, T, O): drop batch/lane padding; tiny final transpose.
    out = out_flat.reshape(n_blocks, T, BP, O_pad)
    out = jnp.transpose(out, (0, 2, 1, 3)).reshape(B_pad, T, O_pad)
    return out[:B, :, :O]


def _xavier_uniform(key, shape):
    fan_in, fan_out = shape[0], shape[1]
    limit = jnp.sqrt(6.0 / (fan_in + fan_out))
    return jax.random.uniform(key, shape, jnp.float32, -limit, limit)


if __name__ == "__main__":
    # Small shapes consistent with the module's forward.
    B, T = 2, 8          # batch, sequence length
    V = 64               # vocab size
    D_IN = 32            # dim_input (embedding dim)
    H = 32               # dim_hidden
    O = 8                # dim_output (number of classes)

    key = jax.random.PRNGKey(0)
    k_tok, k_emb, k_wih, k_bih, k_wio, k_bio = jax.random.split(key, 6)

    tokens = jax.random.randint(k_tok, (B, T), 0, V, dtype=jnp.int32)
    emb_table = jax.random.normal(k_emb, (V, D_IN), jnp.float32) * 0.1

    # Deterministic xavier-uniform-style init; stored pre-transposed as (in, out).
    w_i2h = _xavier_uniform(k_wih, (D_IN + H, H))
    b_i2h = jax.random.uniform(k_bih, (H,), jnp.float32, -0.05, 0.05)
    w_i2o = _xavier_uniform(k_wio, (D_IN + H, O))
    b_i2o = jax.random.uniform(k_bio, (O,), jnp.float32, -0.05, 0.05)

    out = rnn_forward(tokens, emb_table, w_i2h, b_i2h, w_i2o, b_i2o)
    out = jax.block_until_ready(out)

    # Pure-JAX f32 reference with the original module's step-by-step semantics.
    def ref_forward():
        emb = jnp.take(emb_table, tokens, axis=0)
        h = jnp.zeros((B, H), jnp.float32)
        outs = []
        for t in range(T):
            combined = jnp.concatenate([emb[:, t, :], h], axis=1)
            new_h = combined @ w_i2h + b_i2h
            o_t = combined @ w_i2o + b_i2o
            outs.append(jax.nn.log_softmax(o_t, axis=-1))
            h = new_h
        return jnp.stack(outs, axis=1)

    ref = ref_forward()
    assert out.shape == (B, T, O)
    # Kernel feeds bf16 operands to the MXU (f32 accumulation / softmax), so compare at
    # bf16-level tolerance against the exact f32 reference.
    assert jnp.allclose(out, ref, atol=2e-2, rtol=2e-2), "mismatch vs reference"

    print("KERNEL_OK")
</pallas_src>

<mosaic_0001>
module attributes {stable_mosaic.version = 11 : i64} {
  func.func @rnn_forward_kernel(%arg0: i32, %arg1: memref<64x32xbf16, #tpu.memory_space<vmem>>, %arg2: memref<32x128xbf16, #tpu.memory_space<vmem>>, %arg3: memref<1x128xf32, #tpu.memory_space<vmem>>, %arg4: memref<1024x1024xbf16, #tpu.memory_space<vmem>>, %arg5: memref<32x128xbf16, #tpu.memory_space<vmem>>, %arg6: memref<128x128xbf16, #tpu.memory_space<vmem>>, %arg7: memref<1x128xf32, #tpu.memory_space<vmem>>, %arg8: memref<64x128xf32, #tpu.memory_space<vmem>>) attributes {dimension_semantics = [#tpu.dimension_semantics<parallel>], iteration_bounds = array<i64: 1>, scalar_prefetch = 0 : i64, scratch_operands = 0 : i64, tpu.core_type = #tpu.core_type<tc>, window_params = [{transform_indices = @transform_0, window_bounds = array<i64: 64, 32>}, {pipeline_mode = #tpu.pipeline_mode<synchronous>, transform_indices = @transform_1, window_bounds = array<i64: 32, 128>}, {pipeline_mode = #tpu.pipeline_mode<synchronous>, transform_indices = @transform_2, window_bounds = array<i64: 1, 128>}, {pipeline_mode = #tpu.pipeline_mode<synchronous>, transform_indices = @transform_3, window_bounds = array<i64: 1024, 1024>}, {pipeline_mode = #tpu.pipeline_mode<synchronous>, transform_indices = @transform_4, window_bounds = array<i64: 32, 128>}, {pipeline_mode = #tpu.pipeline_mode<synchronous>, transform_indices = @transform_5, window_bounds = array<i64: 128, 128>}, {pipeline_mode = #tpu.pipeline_mode<synchronous>, transform_indices = @transform_6, window_bounds = array<i64: 1, 128>}, {transform_indices = @transform_7, window_bounds = array<i64: 64, 128>}]} {
    %c0 = arith.constant 0 : index
    %c0_0 = arith.constant 0 : index
    %0 = vector.load %arg1[%c0, %c0_0] : memref<64x32xbf16, #tpu.memory_space<vmem>>, vector<64x32xbf16>
    %c0_1 = arith.constant 0 : index
    %c0_2 = arith.constant 0 : index
    %1 = vector.load %arg2[%c0_1, %c0_2] : memref<32x128xbf16, #tpu.memory_space<vmem>>, vector<32x128xbf16>
    %cst = arith.constant dense<0.000000e+00> : vector<64x128xf32>
    %2 = tpu.matmul %0, %1, %cst {dimension_numbers = #tpu.dot_dimension_numbers<[1], [0], [0], [1], [0, 0, 1, 1], [], []>} : vector<64x32xbf16>, vector<32x128xbf16>, vector<64x128xf32> -> vector<64x128xf32>
    %c0_3 = arith.constant 0 : index
    %c0_4 = arith.constant 0 : index
    %3 = vector.load %arg3[%c0_3, %c0_4] : memref<1x128xf32, #tpu.memory_space<vmem>>, vector<1x128xf32>
    %4 = vector.broadcast %3 : vector<1x128xf32> to vector<64x128xf32>
    %5 = arith.addf %2, %4 : vector<64x128xf32>
    %c0_5 = arith.constant 0 : index
    %c0_6 = arith.constant 0 : index
    %6 = vector.load %arg5[%c0_5, %c0_6] : memref<32x128xbf16, #tpu.memory_space<vmem>>, vector<32x128xbf16>
    %cst_7 = arith.constant dense<0.000000e+00> : vector<64x128xf32>
    %7 = tpu.matmul %0, %6, %cst_7 {dimension_numbers = #tpu.dot_dimension_numbers<[1], [0], [0], [1], [0, 0, 1, 1], [], []>} : vector<64x32xbf16>, vector<32x128xbf16>, vector<64x128xf32> -> vector<64x128xf32>
    %c0_8 = arith.constant 0 : index
    %c0_9 = arith.constant 0 : index
    %8 = vector.load %arg7[%c0_8, %c0_9] : memref<1x128xf32, #tpu.memory_space<vmem>>, vector<1x128xf32>
    %9 = vector.broadcast %8 : vector<1x128xf32> to vector<64x128xf32>
    %10 = arith.addf %7, %9 : vector<64x128xf32>
    %11 = vector.extract_strided_slice %5 {offsets = [0, 0], sizes = [8, 128], strides = [1, 1]} : vector<64x128xf32> to vector<8x128xf32>
    %12 = vector.extract_strided_slice %5 {offsets = [8, 0], sizes = [8, 128], strides = [1, 1]} : vector<64x128xf32> to vector<8x128xf32>
    %13 = vector.extract_strided_slice %5 {offsets = [16, 0], sizes = [8, 128], strides = [1, 1]} : vector<64x128xf32> to vector<8x128xf32>
    %14 = vector.extract_strided_slice %5 {offsets = [24, 0], sizes = [8, 128], strides = [1, 1]} : vector<64x128xf32> to vector<8x128xf32>
    %15 = vector.extract_strided_slice %5 {offsets = [32, 0], sizes = [8, 128], strides = [1, 1]} : vector<64x128xf32> to vector<8x128xf32>
    %16 = vector.extract_strided_slice %5 {offsets = [40, 0], sizes = [8, 128], strides = [1, 1]} : vector<64x128xf32> to vector<8x128xf32>
    %17 = vector.extract_strided_slice %5 {offsets = [48, 0], sizes = [8, 128], strides = [1, 1]} : vector<64x128xf32> to vector<8x128xf32>
    %18 = vector.extract_strided_slice %5 {offsets = [56, 0], sizes = [8, 128], strides = [1, 1]} : vector<64x128xf32> to vector<8x128xf32>
    %19 = tpu.concatenate %11, %12, %13, %14, %15, %16, %17, %18 in 1 : vector<8x128xf32>, vector<8x128xf32>, vector<8x128xf32>, vector<8x128xf32>, vector<8x128xf32>, vector<8x128xf32>, vector<8x128xf32>, vector<8x128xf32> -> vector<8x1024xf32>
    %20 = arith.truncf %19 : vector<8x1024xf32> to vector<8x1024xbf16>
    %c0_10 = arith.constant 0 : index
    %c0_11 = arith.constant 0 : index
    %21 = vector.load %arg4[%c0_10, %c0_11] : memref<1024x1024xbf16, #tpu.memory_space<vmem>>, vector<1024x1024xbf16>
    %cst_12 = arith.constant dense<0.000000e+00> : vector<8x1024xf32>
    %22 = tpu.matmul %20, %21, %cst_12 {dimension_numbers = #tpu.dot_dimension_numbers<[1], [0], [0], [1], [0, 0, 1, 1], [], []>} : vector<8x1024xbf16>, vector<1024x1024xbf16>, vector<8x1024xf32> -> vector<8x1024xf32>
    %23 = vector.extract_strided_slice %22 {offsets = [0, 0], sizes = [8, 128], strides = [1, 1]} : vector<8x1024xf32> to vector<8x128xf32>
    %24 = vector.extract_strided_slice %22 {offsets = [0, 128], sizes = [8, 128], strides = [1, 1]} : vector<8x1024xf32> to vector<8x128xf32>
    %25 = vector.extract_strided_slice %22 {offsets = [0, 256], sizes = [8, 128], strides = [1, 1]} : vector<8x1024xf32> to vector<8x128xf32>
    %26 = vector.extract_strided_slice %22 {offsets = [0, 384], sizes = [8, 128], strides = [1, 1]} : vector<8x1024xf32> to vector<8x128xf32>
    %27 = vector.extract_strided_slice %22 {offsets = [0, 512], sizes = [8, 128], strides = [1, 1]} : vector<8x1024xf32> to vector<8x128xf32>
    %28 = vector.extract_strided_slice %22 {offsets = [0, 640], sizes = [8, 128], strides = [1, 1]} : vector<8x1024xf32> to vector<8x128xf32>
    %29 = vector.extract_strided_slice %22 {offsets = [0, 768], sizes = [8, 128], strides = [1, 1]} : vector<8x1024xf32> to vector<8x128xf32>
    %30 = vector.extract_strided_slice %22 {offsets = [0, 896], sizes = [8, 128], strides = [1, 1]} : vector<8x1024xf32> to vector<8x128xf32>
    %31 = tpu.concatenate %23, %24, %25, %26, %27, %28, %29, %30 in 0 : vector<8x128xf32>, vector<8x128xf32>, vector<8x128xf32>, vector<8x128xf32>, vector<8x128xf32>, vector<8x128xf32>, vector<8x128xf32>, vector<8x128xf32> -> vector<64x128xf32>
    %32 = arith.truncf %31 : vector<64x128xf32> to vector<64x128xbf16>
    %c0_13 = arith.constant 0 : index
    %c0_14 = arith.constant 0 : index
    %33 = vector.load %arg6[%c0_13, %c0_14] : memref<128x128xbf16, #tpu.memory_space<vmem>>, vector<128x128xbf16>
    %cst_15 = arith.constant dense<0.000000e+00> : vector<64x128xf32>
    %34 = tpu.matmul %32, %33, %cst_15 {dimension_numbers = #tpu.dot_dimension_numbers<[1], [0], [0], [1], [0, 0, 1, 1], [], []>} : vector<64x128xbf16>, vector<128x128xbf16>, vector<64x128xf32> -> vector<64x128xf32>
    %35 = arith.addf %10, %34 : vector<64x128xf32>
    %cst_16 = arith.constant dense<0xFF800000> : vector<64xf32>
    %36 = vector.multi_reduction <maximumf>, %35, %cst_16 [1] : vector<64x128xf32> to vector<64xf32>
    %37 = vector.shape_cast %36 : vector<64xf32> to vector<64x1xf32>
    %38 = vector.broadcast %37 : vector<64x1xf32> to vector<64x128xf32>
    %39 = arith.subf %35, %38 : vector<64x128xf32>
    %40 = math.exp %39 : vector<64x128xf32>
    %cst_17 = arith.constant dense<0.000000e+00> : vector<64xf32>
    %41 = vector.multi_reduction <add>, %40, %cst_17 [1] : vector<64x128xf32> to vector<64xf32>
    %42 = vector.shape_cast %41 : vector<64xf32> to vector<64x1xf32>
    %43 = math.log %42 : vector<64x1xf32>
    %44 = vector.broadcast %43 : vector<64x1xf32> to vector<64x128xf32>
    %45 = arith.subf %39, %44 : vector<64x128xf32>
    %c0_18 = arith.constant 0 : index
    %c0_19 = arith.constant 0 : index
    %46 = vector.load %arg8[%c0_18, %c0_19] : memref<64x128xf32, #tpu.memory_space<vmem>>, vector<64x128xf32>
    tpu.vector_store %arg8[%c0_18, %c0_19], %45 {strides = array<i32>} : memref<64x128xf32, #tpu.memory_space<vmem>>, vector<64x128xf32>,
    return
  }
  func.func @transform_0(%arg0: i32) -> (i32, i32) {
    %c0_i32 = arith.constant 0 : i32
    %c0_i32_0 = arith.constant 0 : i32
    return %arg0, %c0_i32 : i32, i32
  }
  func.func @transform_1(%arg0: i32) -> (i32, i32) {
    %c0_i32 = arith.constant 0 : i32
    %c0_i32_0 = arith.constant 0 : i32
    %c0_i32_1 = arith.constant 0 : i32
    return %c0_i32, %c0_i32_0 : i32, i32
  }
  func.func @transform_2(%arg0: i32) -> (i32, i32) {
    %c0_i32 = arith.constant 0 : i32
    %c0_i32_0 = arith.constant 0 : i32
    %c0_i32_1 = arith.constant 0 : i32
    return %c0_i32, %c0_i32_0 : i32, i32
  }
  func.func @transform_3(%arg0: i32) -> (i32, i32) {
    %c0_i32 = arith.constant 0 : i32
    %c0_i32_0 = arith.constant 0 : i32
    %c0_i32_1 = arith.constant 0 : i32
    return %c0_i32, %c0_i32_0 : i32, i32
  }
  func.func @transform_4(%arg0: i32) -> (i32, i32) {
    %c0_i32 = arith.constant 0 : i32
    %c0_i32_0 = arith.constant 0 : i32
    %c0_i32_1 = arith.constant 0 : i32
    return %c0_i32, %c0_i32_0 : i32, i32
  }
  func.func @transform_5(%arg0: i32) -> (i32, i32) {
    %c0_i32 = arith.constant 0 : i32
    %c0_i32_0 = arith.constant 0 : i32
    %c0_i32_1 = arith.constant 0 : i32
    return %c0_i32, %c0_i32_0 : i32, i32
  }
  func.func @transform_6(%arg0: i32) -> (i32, i32) {
    %c0_i32 = arith.constant 0 : i32
    %c0_i32_0 = arith.constant 0 : i32
    %c0_i32_1 = arith.constant 0 : i32
    return %c0_i32, %c0_i32_0 : i32, i32
  }
  func.func @transform_7(%arg0: i32) -> (i32, i32) {
    %c0_i32 = arith.constant 0 : i32
    %c0_i32_0 = arith.constant 0 : i32
    return %arg0, %c0_i32 : i32, i32
  }
}

</mosaic_0001>

<llo_original>
// kernel: tpu_custom_call.1
$region0: #{tpu_custom_call.1}
  #allocation0 [shape = 'u32[]', space=smem, size = 0x4, offset = 0x4, fixed_abs, tag = 'smem constant byte address 0x4 - core index']
  #allocation1 [shape = 'u32[144,128]{1,0:T(1,128)}', space=vmem, size = 0x12000, scoped, tag = 'internal scratch']
  %s0 = inlined_call_operand.vmem [shape: bf16[64,32], index: 0, kind: input, shape index: {}]
  %s1 = inlined_call_operand.hbm [shape: bf16[32,128], index: 1, kind: input, shape index: {}]
  %s2 = inlined_call_operand.hbm [shape: f32[1,128], index: 2, kind: input, shape index: {}]
  %s3 = inlined_call_operand.hbm [shape: bf16[1024,1024], index: 3, kind: input, shape index: {}]
  %s4 = inlined_call_operand.hbm [shape: bf16[32,128], index: 4, kind: input, shape index: {}]
  %s5 = inlined_call_operand.hbm [shape: bf16[128,128], index: 5, kind: input, shape index: {}]
  %s6 = inlined_call_operand.hbm [shape: f32[1,128], index: 6, kind: input, shape index: {}]
  %s7 = inlined_call_operand.hbm [shape: f32[64,128], index: 7, kind: output, shape index: {}]
  %s8 = sld [smem:[#allocation0]]
  $region62: #{tpu_custom_call.1} parent=0
    _
  %s10 = ssub.s32 1, %s8
  %s11 = scalar_select 0, %s10, %s8
  $region1: #{tpu_custom_call.1} parent=0
    #allocation2 [shape = 'u8[8192]{0}', space=vmem, size = 0x2000, scoped, tag = 'input window, operand 1, single buffered']
    #allocation3 [shape = 's32[1]{0}', space=sflag, size = 0x4, scoped, tag = 'scoped memory for tpu_custom_call.1']
    #allocation4 [shape = 's32[1]{0}', space=sflag, size = 0x4, scoped, tag = 'scoped memory for tpu_custom_call.1']
    #allocation5 [shape = 'u8[512]{0}', space=vmem, size = 0x400, scoped, tag = 'input window, operand 2, single buffered']
    #allocation6 [shape = 's32[1]{0}', space=sflag, size = 0x4, scoped, tag = 'scoped memory for tpu_custom_call.1']
    #allocation7 [shape = 'u8[2097152]{0}', space=vmem, size = 0x200000, scoped, tag = 'input window, operand 3, single buffered']
    #allocation8 [shape = 'u8[8192]{0}', space=vmem, size = 0x2000, scoped, tag = 'input window, operand 4, single buffered']
    #allocation9 [shape = 's32[1]{0}', space=sflag, size = 0x4, scoped, tag = 'scoped memory for tpu_custom_call.1']
    #allocation10 [shape = 'u8[32768]{0}', space=vmem, size = 0x8000, scoped, tag = 'input window, operand 5, single buffered']
    #allocation11 [shape = 'u8[512]{0}', space=vmem, size = 0x400, scoped, tag = 'input window, operand 6, single buffered']
    #allocation12 [shape = 's32[1]{0}', space=sflag, size = 0x4, scoped, tag = 'scoped memory for tpu_custom_call.1']
    #allocation13 [shape = 'u8[32768]{0}', space=vmem, size = 0x8000, scoped, tag = 'output window, operand 0, single buffered']
    %12 = vsyncpa [#allocation3], 0
    %13 = vsyncpa [#allocation6], 0
    %14 = vsyncpa [#allocation9], 0
    %15 = vsyncpa [#allocation12], 0
    %16 = vsyncpa [#allocation4], 0
    // Predicated region
    $region2: #{tpu_custom_call.1} parent=1 // pred_check
      _
    $region3: #{tpu_custom_call.1} parent=1 // pred_check_branch
      %18 = sbr.rel (0) target = $region5
    $region4: #{tpu_custom_call.1} parent=1 // pred_region
      _
    $region5: #{tpu_custom_call.1} parent=1 // pred_fallthru
      _
    // Predicated region
    $region6: #{tpu_custom_call.1} parent=1 // pred_check
      _
    $region7: #{tpu_custom_call.1} parent=1 // pred_check_branch
      %20 = sbr.rel (0) target = $region9
    $region8: #{tpu_custom_call.1} parent=1 // pred_region
      %s22 = ssub.s32 256, 256
      %23 = vsyncadd [#allocation3], %s22
      %s24 = sshll.u32 [#allocation2], 4
      %s25 = int_to_ptr.vmem [resolvable:$true] %s24
      %30 = dma.hbm_to_vmem [thread:$0]  %s1, 256, %s25, [#allocation3], 64, 64, 4
    $region9: #{tpu_custom_call.1} parent=1 // pred_fallthru
      _
    // Predicated region
    $region10: #{tpu_custom_call.1} parent=1 // pred_check
      _
    $region11: #{tpu_custom_call.1} parent=1 // pred_check_branch
      %32 = sbr.rel (0) target = $region13
    $region12: #{tpu_custom_call.1} parent=1 // pred_region
      %s34 = ssub.s32 16, 16
      %35 = vsyncadd [#allocation6], %s34
      %s37 = sshll.u32 [#allocation5], 4
      %s38 = int_to_ptr.vmem [resolvable:$true] %s37
      %40 = dma.hbm_to_vmem [thread:$0]  %s2, 16, %s38, [#allocation6]
    $region13: #{tpu_custom_call.1} parent=1 // pred_fallthru
      _
    // Predicated region
    $region14: #{tpu_custom_call.1} parent=1 // pred_check
      _
    $region15: #{tpu_custom_call.1} parent=1 // pred_check_branch
      %42 = sbr.rel (0) target = $region17
    $region16: #{tpu_custom_call.1} parent=1 // pred_region
      %s44 = ssub.s32 65536, 65536
      %45 = vsyncadd [#allocation6], %s44
      %s46 = sshll.u32 [#allocation7], 4
      %s47 = int_to_ptr.vmem [resolvable:$true] %s46
      %52 = dma.hbm_to_vmem [thread:$0]  %s3, 65536, %s47, [#allocation6], 512, 512, 32
    $region17: #{tpu_custom_call.1} parent=1 // pred_fallthru
      _
    // Predicated region
    $region18: #{tpu_custom_call.1} parent=1 // pred_check
      _
    $region19: #{tpu_custom_call.1} parent=1 // pred_check_branch
      %54 = sbr.rel (0) target = $region21
    $region20: #{tpu_custom_call.1} parent=1 // pred_region
      %s56 = ssub.s32 256, 256
      %57 = vsyncadd [#allocation9], %s56
      %s58 = sshll.u32 [#allocation8], 4
      %s59 = int_to_ptr.vmem [resolvable:$true] %s58
      %64 = dma.hbm_to_vmem [thread:$0]  %s4, 256, %s59, [#allocation9], 64, 64, 4
    $region21: #{tpu_custom_call.1} parent=1 // pred_fallthru
      _
    // Predicated region
    $region22: #{tpu_custom_call.1} parent=1 // pred_check
      _
    $region23: #{tpu_custom_call.1} parent=1 // pred_check_branch
      %66 = sbr.rel (0) target = $region25
    $region24: #{tpu_custom_call.1} parent=1 // pred_region
      %s68 = ssub.s32 1024, 1024
      %69 = vsyncadd [#allocation9], %s68
      %s70 = sshll.u32 [#allocation10], 4
      %s71 = int_to_ptr.vmem [resolvable:$true] %s70
      %76 = dma.hbm_to_vmem [thread:$0]  %s5, 1024, %s71, [#allocation9], 64, 64, 4
    $region25: #{tpu_custom_call.1} parent=1 // pred_fallthru
      _
    // Predicated region
    $region26: #{tpu_custom_call.1} parent=1 // pred_check
      _
    $region27: #{tpu_custom_call.1} parent=1 // pred_check_branch
      %78 = sbr.rel (0) target = $region29
    $region28: #{tpu_custom_call.1} parent=1 // pred_region
      %s80 = ssub.s32 16, 16
      %81 = vsyncadd [#allocation12], %s80
      %s83 = sshll.u32 [#allocation11], 4
      %s84 = int_to_ptr.vmem [resolvable:$true] %s83
      %86 = dma.hbm_to_vmem [thread:$0]  %s6, 16, %s84, [#allocation12]
    $region29: #{tpu_custom_call.1} parent=1 // pred_fallthru
      _
    // Predicated region
    $region30: #{tpu_custom_call.1} parent=1 // pred_check
      _
    $region31: #{tpu_custom_call.1} parent=1 // pred_check_branch
      %88 = sbr.rel (0) target = $region33
    $region32: #{tpu_custom_call.1} parent=1 // pred_region
      %89 = dma.done [#allocation3], 256
    $region33: #{tpu_custom_call.1} parent=1 // pred_fallthru
      _
    // Predicated region
    $region34: #{tpu_custom_call.1} parent=1 // pred_check
      _
    $region35: #{tpu_custom_call.1} parent=1 // pred_check_branch
      %91 = sbr.rel (0) target = $region37
    $region36: #{tpu_custom_call.1} parent=1 // pred_region
      %92 = dma.done [#allocation6], 16
    $region37: #{tpu_custom_call.1} parent=1 // pred_fallthru
      _
    // Predicated region
    $region38: #{tpu_custom_call.1} parent=1 // pred_check
      _
    $region39: #{tpu_custom_call.1} parent=1 // pred_check_branch
      %94 = sbr.rel (0) target = $region41
    $region40: #{tpu_custom_call.1} parent=1 // pred_region
      %95 = dma.done [#allocation6], 65536
    $region41: #{tpu_custom_call.1} parent=1 // pred_fallthru
      _
    // Predicated region
    $region42: #{tpu_custom_call.1} parent=1 // pred_check
      _
    $region43: #{tpu_custom_call.1} parent=1 // pred_check_branch
      %97 = sbr.rel (0) target = $region45
    $region44: #{tpu_custom_call.1} parent=1 // pred_region
      %98 = dma.done [#allocation9], 256
    $region45: #{tpu_custom_call.1} parent=1 // pred_fallthru
      _
    // Predicated region
    $region46: #{tpu_custom_call.1} parent=1 // pred_check
      _
    $region47: #{tpu_custom_call.1} parent=1 // pred_check_branch
      %100 = sbr.rel (0) target = $region49
    $region48: #{tpu_custom_call.1} parent=1 // pred_region
      %101 = dma.done [#allocation9], 1024
    $region49: #{tpu_custom_call.1} parent=1 // pred_fallthru
      _
    // Predicated region
    $region50: #{tpu_custom_call.1} parent=1 // pred_check
      _
    $region51: #{tpu_custom_call.1} parent=1 // pred_check_branch
      %103 = sbr.rel (0) target = $region53
    $region52: #{tpu_custom_call.1} parent=1 // pred_region
      %104 = dma.done [#allocation12], 16
    $region53: #{tpu_custom_call.1} parent=1 // pred_fallthru
      _
    %v106 = vld [vmem:[%s0] sm:$0xf]
    %v107 = vld [vmem:[%s0 + $0x4] sm:$0xf]
    %v108 = vld [vmem:[%s0 + $0x8] sm:$0xf]
    %v109 = vld [vmem:[%s0 + $0xc] sm:$0xf]
    %v110 = vld [vmem:[%s0 + $0x10] sm:$0xf]
    %v111 = vld [vmem:[%s0 + $0x14] sm:$0xf]
    %v112 = vld [vmem:[%s0 + $0x18] sm:$0xf]
    %v113 = vld [vmem:[%s0 + $0x1c] sm:$0xf]
    %v114 = vld [vmem:[#allocation2] sm:$0xf]
    %v115 = vld [vmem:[#allocation2 + $0x4] sm:$0xf]
    %v116 = vld [vmem:[#allocation2 + $0x8] sm:$0xf]
    %v117 = vld [vmem:[#allocation2 + $0xc] sm:$0xf]
    %v118 = vld [vmem:[#allocation5] sm:$0x1]
    %v120 = vlaneseq
    %v121 = vshrl.u32 %v120, 7
    %v122 = vsub.s32 0, %v121
    %v123 = vrot.slane %v118, %v122
    %v133 = vunpack.c.l.b16 %v106
    %v134 = vunpack.c.l.b16 %v107
    %v135 = vunpack.c.l.b16 %v108
    %v136 = vunpack.c.l.b16 %v109
    %v137 = vunpack.c.l.b16 %v110
    %v138 = vunpack.c.l.b16 %v111
    %v139 = vunpack.c.l.b16 %v112
    %v140 = vunpack.c.l.b16 %v113
    %v141 = vpack.c.b16 %v134, %v133
    %v142 = vpack.c.b16 %v136, %v135
    %v143 = vpack.c.b16 %v138, %v137
    %v144 = vpack.c.b16 %v140, %v139
    %v149 = vunpack.c.l.b16 %v114
    %v150 = vunpack.c.l.b16 %v115
    %v151 = vunpack.c.l.b16 %v116
    %v152 = vunpack.c.l.b16 %v117
    %v153 = vpack.c.b16 %v150, %v149
    %v154 = vpack.c.b16 %v152, %v151
    %vm157 = vcmask 261120
    %v159 = vsel %vm157, %v141, 0
    %v162 = vsel %vm157, %v142, 0
    %v165 = vsel %vm157, %v143, 0
    %v168 = vsel %vm157, %v144, 0
    %170 = vmatprep.subr.bf16.mxu0 0
    %171 = vmatpush1.bf16.msra.mxu0 %v153
    %172 = vmatprep.subr.bf16.mxu0 0
    %173 = vmatpush1.bf16.msra.mxu0 %v154
    %174 = vmatprep.subr.bf16.mxu0 0
    %175 = vmatpush1.bf16.msra.mxu0 0
    %176 = vmatprep.subr.bf16.mxu0 0
    %177 = vmatpush1.bf16.msra.mxu0 0
    %178 = vmatprep.subr.bf16.mxu0 0
    %179 = vmatpush1.bf16.msra.mxu0 0
    %180 = vmatprep.subr.bf16.mxu0 0
    %181 = vmatpush1.bf16.msra.mxu0 0
    %182 = vmatprep.subr.bf16.mxu0 0
    %183 = vmatpush1.bf16.msra.mxu0 0
    %184 = vmatprep.subr.bf16.mxu0 0
    %185 = vmatpush1.bf16.msra.mxu0 0
    %186 = vmatprep.subr.bf16.mxu0 0
    %187 = vmatpush1.bf16.msra.mxu0 0
    %188 = vmatprep.subr.bf16.mxu0 0
    %189 = vmatpush1.bf16.msra.mxu0 0
    %190 = vmatprep.subr.bf16.mxu0 0
    %191 = vmatpush1.bf16.msra.mxu0 0
    %192 = vmatprep.subr.bf16.mxu0 0
    %193 = vmatpush1.bf16.msra.mxu0 0
    %194 = vmatprep.subr.bf16.mxu0 0
    %195 = vmatpush1.bf16.msra.mxu0 0
    %196 = vmatprep.subr.bf16.mxu0 0
    %197 = vmatpush1.bf16.msra.mxu0 0
    %198 = vmatprep.subr.bf16.mxu0 0
    %199 = vmatpush1.bf16.msra.mxu0 0
    %200 = vmatprep.subr.bf16.mxu0 0
    %201 = vmatpush1.bf16.msra.mxu0 0
    %202 = vmatprep.mubr.bf16.mxu0 0
    %203 = vmatmul.mubr.bf16.gmra.mrb[0].mxu0 %v159
    %v204 = vpop.f32.mrb[0].mxu0
    %v205 = vadd.f32 %v123, %v204
    %v206 = vpop.f32.mrb[0].mxu0
    %v207 = vpop.f32.mrb[0].mxu0
    %v208 = vadd.f32 %v123, %v207
    %v209 = vpop.f32.mrb[0].mxu0
    %210 = vmatprep.mubr.bf16.mxu0 0
    %211 = vmatmul.mubr.bf16.gmra.mrb[0].mxu0 %v162
    %v212 = vpop.f32.mrb[0].mxu0
    %v213 = vadd.f32 %v123, %v212
    %v214 = vpop.f32.mrb[0].mxu0
    %v215 = vpop.f32.mrb[0].mxu0
    %v216 = vadd.f32 %v123, %v215
    %v217 = vpop.f32.mrb[0].mxu0
    %218 = vmatprep.mubr.bf16.mxu0 0
    %219 = vmatmul.mubr.bf16.gmra.mrb[0].mxu0 %v165
    %v220 = vpop.f32.mrb[0].mxu0
    %v221 = vadd.f32 %v123, %v220
    %v222 = vpop.f32.mrb[0].mxu0
    %v223 = vpop.f32.mrb[0].mxu0
    %v224 = vadd.f32 %v123, %v223
    %v225 = vpop.f32.mrb[0].mxu0
    %226 = vmatprep.mubr.bf16.mxu0 0
    %227 = vmatmul.mubr.bf16.gmra.mrb[0].mxu0 %v168
    %v228 = vpop.f32.mrb[0].mxu0
    %v229 = vadd.f32 %v123, %v228
    %v230 = vpop.f32.mrb[0].mxu0
    %v231 = vpop.f32.mrb[0].mxu0
    %v232 = vadd.f32 %v123, %v231
    %v233 = vpop.f32.mrb[0].mxu0
    %234 = vdwg.mxu0
    %v235 = vld [vmem:[#allocation8] sm:$0xf]
    %v236 = vld [vmem:[#allocation8 + $0x4] sm:$0xf]
    %v237 = vld [vmem:[#allocation8 + $0x8] sm:$0xf]
    %v238 = vld [vmem:[#allocation8 + $0xc] sm:$0xf]
    %v239 = vld [vmem:[#allocation11] sm:$0x1]
    %v241 = vlaneseq
    %v242 = vshrl.u32 %v241, 7
    %v243 = vsub.s32 0, %v242
    %v244 = vrot.slane %v239, %v243
    %v250 = vunpack.c.l.b16 %v235
    %v251 = vunpack.c.l.b16 %v236
    %v252 = vunpack.c.l.b16 %v237
    %v253 = vunpack.c.l.b16 %v238
    %v254 = vpack.c.b16 %v251, %v250
    %v255 = vpack.c.b16 %v253, %v252
    %258 = vmatprep.subr.bf16.mxu0 0
    %259 = vmatpush1.bf16.msra.mxu0 %v254
    %260 = vmatprep.subr.bf16.mxu0 0
    %261 = vmatpush1.bf16.msra.mxu0 %v255
    %262 = vmatprep.subr.bf16.mxu0 0
    %263 = vmatpush1.bf16.msra.mxu0 0
    %264 = vmatprep.subr.bf16.mxu0 0
    %265 = vmatpush1.bf16.msra.mxu0 0
    %266 = vmatprep.subr.bf16.mxu0 0
    %267 = vmatpush1.bf16.msra.mxu0 0
    %268 = vmatprep.subr.bf16.mxu0 0
    %269 = vmatpush1.bf16.msra.mxu0 0
    %270 = vmatprep.subr.bf16.mxu0 0
    %271 = vmatpush1.bf16.msra.mxu0 0
    %272 = vmatprep.subr.bf16.mxu0 0
    %273 = vmatpush1.bf16.msra.mxu0 0
    %274 = vmatprep.subr.bf16.mxu0 0
    %275 = vmatpush1.bf16.msra.mxu0 0
    %276 = vmatprep.subr.bf16.mxu0 0
    %277 = vmatpush1.bf16.msra.mxu0 0
    %278 = vmatprep.subr.bf16.mxu0 0
    %279 = vmatpush1.bf16.msra.mxu0 0
    %280 = vmatprep.subr.bf16.mxu0 0
    %281 = vmatpush1.bf16.msra.mxu0 0
    %282 = vmatprep.subr.bf16.mxu0 0
    %283 = vmatpush1.bf16.msra.mxu0 0
    %284 = vmatprep.subr.bf16.mxu0 0
    %285 = vmatpush1.bf16.msra.mxu0 0
    %286 = vmatprep.subr.bf16.mxu0 0
    %287 = vmatpush1.bf16.msra.mxu0 0
    %288 = vmatprep.subr.bf16.mxu0 0
    %289 = vmatpush1.bf16.msra.mxu0 0
    %290 = vmatprep.mubr.bf16.mxu0 0
    %291 = vmatmul.mubr.bf16.gmra.mrb[0].mxu0 %v159
    %v292 = vpop.f32.mrb[0].mxu0
    %v293 = vadd.f32 %v244, %v292
    %v294 = vpop.f32.mrb[0].mxu0
    %v295 = vpop.f32.mrb[0].mxu0
    %v296 = vadd.f32 %v244, %v295
    %v297 = vpop.f32.mrb[0].mxu0
    %298 = vmatprep.mubr.bf16.mxu0 0
    %299 = vmatmul.mubr.bf16.gmra.mrb[0].mxu0 %v162
    %v300 = vpop.f32.mrb[0].mxu0
    %v301 = vadd.f32 %v244, %v300
    %v302 = vpop.f32.mrb[0].mxu0
    %v303 = vpop.f32.mrb[0].mxu0
    %v304 = vadd.f32 %v244, %v303
    %v305 = vpop.f32.mrb[0].mxu0
    %306 = vmatprep.mubr.bf16.mxu0 0
    %307 = vmatmul.mubr.bf16.gmra.mrb[0].mxu0 %v165
    %v308 = vpop.f32.mrb[0].mxu0
    %v309 = vadd.f32 %v244, %v308
    %v310 = vpop.f32.mrb[0].mxu0
    %v311 = vpop.f32.mrb[0].mxu0
    %v312 = vadd.f32 %v244, %v311
    %v313 = vpop.f32.mrb[0].mxu0
    %314 = vmatprep.mubr.bf16.mxu0 0
    %315 = vmatmul.mubr.bf16.gmra.mrb[0].mxu0 %v168
    %v316 = vpop.f32.mrb[0].mxu0
    %v317 = vadd.f32 %v244, %v316
    %v318 = vpop.f32.mrb[0].mxu0
    %v319 = vpop.f32.mrb[0].mxu0
    %v320 = vadd.f32 %v244, %v319
    %v321 = vpop.f32.mrb[0].mxu0
    %322 = vdwg.mxu0
    %v323 = vpack.c.bf16 %v205, %v205
    %v324 = vpack.c.bf16 %v208, %v208
    %v325 = vpack.c.bf16 %v213, %v213
    %v326 = vpack.c.bf16 %v216, %v216
    %v327 = vpack.c.bf16 %v221, %v221
    %v328 = vpack.c.bf16 %v224, %v224
    %v329 = vpack.c.bf16 %v229, %v229
    %v330 = vpack.c.bf16 %v232, %v232
    %v331 = vld [vmem:[#allocation7] sm:$0xff]
    %v332 = vld [vmem:[#allocation7 + $0x8] sm:$0xff]
    %v333 = vld [vmem:[#allocation7 + $0x10] sm:$0xff]
    %v334 = vld [vmem:[#allocation7 + $0x18] sm:$0xff]
    %v335 = vld [vmem:[#allocation7 + $0x20] sm:$0xff]
    %v336 = vld [vmem:[#allocation7 + $0x28] sm:$0xff]
    %v337 = vld [vmem:[#allocation7 + $0x30] sm:$0xff]
    %v338 = vld [vmem:[#allocation7 + $0x38] sm:$0xff]
    %v339 = vld [vmem:[#allocation7 + $0x40] sm:$0xff]
    %v340 = vld [vmem:[#allocation7 + $0x48] sm:$0xff]
    %v341 = vld [vmem:[#allocation7 + $0x50] sm:$0xff]
    %v342 = vld [vmem:[#allocation7 + $0x58] sm:$0xff]
    %v343 = vld [vmem:[#allocation7 + $0x60] sm:$0xff]
    %v344 = vld [vmem:[#allocation7 + $0x68] sm:$0xff]
    %v345 = vld [vmem:[#allocation7 + $0x70] sm:$0xff]
    %v346 = vld [vmem:[#allocation7 + $0x78] sm:$0xff]
    %v347 = vld [vmem:[#allocation7 + $0x80] sm:$0xff]
    %v348 = vld [vmem:[#allocation7 + $0x88] sm:$0xff]
    %v349 = vld [vmem:[#allocation7 + $0x90] sm:$0xff]
    %v350 = vld [vmem:[#allocation7 + $0x98] sm:$0xff]
    %v351 = vld [vmem:[#allocation7 + $0xa0] sm:$0xff]
    %v352 = vld [vmem:[#allocation7 + $0xa8] sm:$0xff]
    %v353 = vld [vmem:[#allocation7 + $0xb0] sm:$0xff]
    %v354 = vld [vmem:[#allocation7 + $0xb8] sm:$0xff]
    %v355 = vld [vmem:[#allocation7 + $0xc0] sm:$0xff]
    %v356 = vld [vmem:[#allocation7 + $0xc8] sm:$0xff]
    %v357 = vld [vmem:[#allocation7 + $0xd0] sm:$0xff]
    %v358 = vld [vmem:[#allocation7 + $0xd8] sm:$0xff]
    %v359 = vld [vmem:[#allocation7 + $0xe0] sm:$0xff]
    %v360 = vld [vmem:[#allocation7 + $0xe8] sm:$0xff]
    %v361 = vld [vmem:[#allocation7 + $0xf0] sm:$0xff]
    %v362 = vld [vmem:[#allocation7 + $0xf8] sm:$0xff]
    %v363 = vld [vmem:[#allocation7 + $0x100] sm:$0xff]
    %v364 = vld [vmem:[#allocation7 + $0x108] sm:$0xff]
    %v365 = vld [vmem:[#allocation7 + $0x110] sm:$0xff]
    %v366 = vld [vmem:[#allocation7 + $0x118] sm:$0xff]
    %v367 = vld [vmem:[#allocation7 + $0x120] sm:$0xff]
    %v368 = vld [vmem:[#allocation7 + $0x128] sm:$0xff]
    %v369 = vld [vmem:[#allocation7 + $0x130] sm:$0xff]
    %v370 = vld [vmem:[#allocation7 + $0x138] sm:$0xff]
    %v371 = vld [vmem:[#allocation7 + $0x140] sm:$0xff]
    %v372 = vld [vmem:[#allocation7 + $0x148] sm:$0xff]
    %v373 = vld [vmem:[#allocation7 + $0x150] sm:$0xff]
    %v374 = vld [vmem:[#allocation7 + $0x158] sm:$0xff]
    %v375 = vld [vmem:[#allocation7 + $0x160] sm:$0xff]
    %v376 = vld [vmem:[#allocation7 + $0x168] sm:$0xff]
    %v377 = vld [vmem:[#allocation7 + $0x170] sm:$0xff]
    %v378 = vld [vmem:[#allocation7 + $0x178] sm:$0xff]
    %v379 = vld [vmem:[#allocation7 + $0x180] sm:$0xff]
    %v380 = vld [vmem:[#allocation7 + $0x188] sm:$0xff]
    %v381 = vld [vmem:[#allocation7 + $0x190] sm:$0xff]
    %v382 = vld [vmem:[#allocation7 + $0x198] sm:$0xff]
    %v383 = vld [vmem:[#allocation7 + $0x1a0] sm:$0xff]
    %v384 = vld [vmem:[#allocation7 + $0x1a8] sm:$0xff]
    %v385 = vld [vmem:[#allocation7 + $0x1b0] sm:$0xff]
    %v386 = vld [vmem:[#allocation7 + $0x1b8] sm:$0xff]
    %v387 = vld [vmem:[#allocation7 + $0x1c0] sm:$0xff]
    %v388 = vld [vmem:[#allocation7 + $0x1c8] sm:$0xff]
    %v389 = vld [vmem:[#allocation7 + $0x1d0] sm:$0xff]
    %v390 = vld [vmem:[#allocation7 + $0x1d8] sm:$0xff]
    %v391 = vld [vmem:[#allocation7 + $0x1e0] sm:$0xff]
    %v392 = vld [vmem:[#allocation7 + $0x1e8] sm:$0xff]
    %v393 = vld [vmem:[#allocation7 + $0x1f0] sm:$0xff]
    %v394 = vld [vmem:[#allocation7 + $0x1f8] sm:$0xff]
    %v395 = vld [vmem:[#allocation7 + $0x200] sm:$0xff]
    %v396 = vld [vmem:[#allocation7 + $0x208] sm:$0xff]
    %v397 = vld [vmem:[#allocation7 + $0x210] sm:$0xff]
    %v398 = vld [vmem:[#allocation7 + $0x218] sm:$0xff]
    %v399 = vld [vmem:[#allocation7 + $0x220] sm:$0xff]
    %v400 = vld [vmem:[#allocation7 + $0x228] sm:$0xff]
    %v401 = vld [vmem:[#allocation7 + $0x230] sm:$0xff]
    %v402 = vld [vmem:[#allocation7 + $0x238] sm:$0xff]
    %v403 = vld [vmem:[#allocation7 + $0x240] sm:$0xff]
    %v404 = vld [vmem:[#allocation7 + $0x248] sm:$0xff]
    %v405 = vld [vmem:[#allocation7 + $0x250] sm:$0xff]
    %v406 = vld [vmem:[#allocation7 + $0x258] sm:$0xff]
    %v407 = vld [vmem:[#allocation7 + $0x260] sm:$0xff]
    %v408 = vld [vmem:[#allocation7 + $0x268] sm:$0xff]
    %v409 = vld [vmem:[#allocation7 + $0x270] sm:$0xff]
    %v410 = vld [vmem:[#allocation7 + $0x278] sm:$0xff]
    %v411 = vld [vmem:[#allocation7 + $0x280] sm:$0xff]
    %v412 = vld [vmem:[#allocation7 + $0x288] sm:$0xff]
    %v413 = vld [vmem:[#allocation7 + $0x290] sm:$0xff]
    %v414 = vld [vmem:[#allocation7 + $0x298] sm:$0xff]
    %v415 = vld [vmem:[#allocation7 + $0x2a0] sm:$0xff]
    %v416 = vld [vmem:[#allocation7 + $0x2a8] sm:$0xff]
    %v417 = vld [vmem:[#allocation7 + $0x2b0] sm:$0xff]
    %v418 = vld [vmem:[#allocation7 + $0x2b8] sm:$0xff]
    %v419 = vld [vmem:[#allocation7 + $0x2c0] sm:$0xff]
    %v420 = vld [vmem:[#allocation7 + $0x2c8] sm:$0xff]
    %v421 = vld [vmem:[#allocation7 + $0x2d0] sm:$0xff]
    %v422 = vld [vmem:[#allocation7 + $0x2d8] sm:$0xff]
    %v423 = vld [vmem:[#allocation7 + $0x2e0] sm:$0xff]
    %v424 = vld [vmem:[#allocation7 + $0x2e8] sm:$0xff]
    %v425 = vld [vmem:[#allocation7 + $0x2f0] sm:$0xff]
    %v426 = vld [vmem:[#allocation7 + $0x2f8] sm:$0xff]
    %v427 = vld [vmem:[#allocation7 + $0x300] sm:$0xff]
    %v428 = vld [vmem:[#allocation7 + $0x308] sm:$0xff]
    %v429 = vld [vmem:[#allocation7 + $0x310] sm:$0xff]
    %v430 = vld [vmem:[#allocation7 + $0x318] sm:$0xff]
    %v431 = vld [vmem:[#allocation7 + $0x320] sm:$0xff]
    %v432 = vld [vmem:[#allocation7 + $0x328] sm:$0xff]
    %v433 = vld [vmem:[#allocation7 + $0x330] sm:$0xff]
    %v434 = vld [vmem:[#allocation7 + $0x338] sm:$0xff]
    %v435 = vld [vmem:[#allocation7 + $0x340] sm:$0xff]
    %v436 = vld [vmem:[#allocation7 + $0x348] sm:$0xff]
    %v437 = vld [vmem:[#allocation7 + $0x350] sm:$0xff]
    %v438 = vld [vmem:[#allocation7 + $0x358] sm:$0xff]
    %v439 = vld [vmem:[#allocation7 + $0x360] sm:$0xff]
    %v440 = vld [vmem:[#allocation7 + $0x368] sm:$0xff]
    %v441 = vld [vmem:[#allocation7 + $0x370] sm:$0xff]
    %v442 = vld [vmem:[#allocation7 + $0x378] sm:$0xff]
    %v443 = vld [vmem:[#allocation7 + $0x380] sm:$0xff]
    %v444 = vld [vmem:[#allocation7 + $0x388] sm:$0xff]
    %v445 = vld [vmem:[#allocation7 + $0x390] sm:$0xff]
    %v446 = vld [vmem:[#allocation7 + $0x398] sm:$0xff]
    %v447 = vld [vmem:[#allocation7 + $0x3a0] sm:$0xff]
    %v448 = vld [vmem:[#allocation7 + $0x3a8] sm:$0xff]
    %v449 = vld [vmem:[#allocation7 + $0x3b0] sm:$0xff]
    %v450 = vld [vmem:[#allocation7 + $0x3b8] sm:$0xff]
    %v451 = vld [vmem:[#allocation7 + $0x3c0] sm:$0xff]
    %v452 = vld [vmem:[#allocation7 + $0x3c8] sm:$0xff]
    %v453 = vld [vmem:[#allocation7 + $0x3d0] sm:$0xff]
    %v454 = vld [vmem:[#allocation7 + $0x3d8] sm:$0xff]
    %v455 = vld [vmem:[#allocation7 + $0x3e0] sm:$0xff]
    %v456 = vld [vmem:[#allocation7 + $0x3e8] sm:$0xff]
    %v457 = vld [vmem:[#allocation7 + $0x3f0] sm:$0xff]
    %v458 = vld [vmem:[#allocation7 + $0x3f8] sm:$0xff]
    %v459 = vld [vmem:[#allocation7 + $0x400] sm:$0xff]
    %v460 = vld [vmem:[#allocation7 + $0x408] sm:$0xff]
    %v461 = vld [vmem:[#allocation7 + $0x410] sm:$0xff]
    %v462 = vld [vmem:[#allocation7 + $0x418] sm:$0xff]
    %v463 = vld [vmem:[#allocation7 + $0x420] sm:$0xff]
    %v464 = vld [vmem:[#allocation7 + $0x428] sm:$0xff]
    %v465 = vld [vmem:[#allocation7 + $0x430] sm:$0xff]
    %v466 = vld [vmem:[#allocation7 + $0x438] sm:$0xff]
    %v467 = vld [vmem:[#allocation7 + $0x440] sm:$0xff]
    %v468 = vld [vmem:[#allocation7 + $0x448] sm:$0xff]
    %v469 = vld [vmem:[#allocation7 + $0x450] sm:$0xff]
    %v470 = vld [vmem:[#allocation7 + $0x458] sm:$0xff]
    %v471 = vld [vmem:[#allocation7 + $0x460] sm:$0xff]
    %v472 = vld [vmem:[#allocation7 + $0x468] sm:$0xff]
    %v473 = vld [vmem:[#allocation7 + $0x470] sm:$0xff]
    %v474 = vld [vmem:[#allocation7 + $0x478] sm:$0xff]
    %v475 = vld [vmem:[#allocation7 + $0x480] sm:$0xff]
    %v476 = vld [vmem:[#allocation7 + $0x488] sm:$0xff]
    %v477 = vld [vmem:[#allocation7 + $0x490] sm:$0xff]
    %v478 = vld [vmem:[#allocation7 + $0x498] sm:$0xff]
    %v479 = vld [vmem:[#allocation7 + $0x4a0] sm:$0xff]
    %v480 = vld [vmem:[#allocation7 + $0x4a8] sm:$0xff]
    %v481 = vld [vmem:[#allocation7 + $0x4b0] sm:$0xff]
    %v482 = vld [vmem:[#allocation7 + $0x4b8] sm:$0xff]
    %v483 = vld [vmem:[#allocation7 + $0x4c0] sm:$0xff]
    %v484 = vld [vmem:[#allocation7 + $0x4c8] sm:$0xff]
    %v485 = vld [vmem:[#allocation7 + $0x4d0] sm:$0xff]
    %v486 = vld [vmem:[#allocation7 + $0x4d8] sm:$0xff]
    %v487 = vld [vmem:[#allocation7 + $0x4e0] sm:$0xff]
    %v488 = vld [vmem:[#allocation7 + $0x4e8] sm:$0xff]
    %v489 = vld [vmem:[#allocation7 + $0x4f0] sm:$0xff]
    %v490 = vld [vmem:[#allocation7 + $0x4f8] sm:$0xff]
    %v491 = vld [vmem:[#allocation7 + $0x500] sm:$0xff]
    %v492 = vld [vmem:[#allocation7 + $0x508] sm:$0xff]
    %v493 = vld [vmem:[#allocation7 + $0x510] sm:$0xff]
    %v494 = vld [vmem:[#allocation7 + $0x518] sm:$0xff]
    %v495 = vld [vmem:[#allocation7 + $0x520] sm:$0xff]
    %v496 = vld [vmem:[#allocation7 + $0x528] sm:$0xff]
    %v497 = vld [vmem:[#allocation7 + $0x530] sm:$0xff]
    %v498 = vld [vmem:[#allocation7 + $0x538] sm:$0xff]
    %v499 = vld [vmem:[#allocation7 + $0x540] sm:$0xff]
    %v500 = vld [vmem:[#allocation7 + $0x548] sm:$0xff]
    %v501 = vld [vmem:[#allocation7 + $0x550] sm:$0xff]
    %v502 = vld [vmem:[#allocation7 + $0x558] sm:$0xff]
    %v503 = vld [vmem:[#allocation7 + $0x560] sm:$0xff]
    %v504 = vld [vmem:[#allocation7 + $0x568] sm:$0xff]
    %v505 = vld [vmem:[#allocation7 + $0x570] sm:$0xff]
    %v506 = vld [vmem:[#allocation7 + $0x578] sm:$0xff]
    %v507 = vld [vmem:[#allocation7 + $0x580] sm:$0xff]
    %v508 = vld [vmem:[#allocation7 + $0x588] sm:$0xff]
    %v509 = vld [vmem:[#allocation7 + $0x590] sm:$0xff]
    %v510 = vld [vmem:[#allocation7 + $0x598] sm:$0xff]
    %v511 = vld [vmem:[#allocation7 + $0x5a0] sm:$0xff]
    %v512 = vld [vmem:[#allocation7 + $0x5a8] sm:$0xff]
    %v513 = vld [vmem:[#allocation7 + $0x5b0] sm:$0xff]
    %v514 = vld [vmem:[#allocation7 + $0x5b8] sm:$0xff]
    %v515 = vld [vmem:[#allocation7 + $0x5c0] sm:$0xff]
    %v516 = vld [vmem:[#allocation7 + $0x5c8] sm:$0xff]
    %v517 = vld [vmem:[#allocation7 + $0x5d0] sm:$0xff]
    %v518 = vld [vmem:[#allocation7 + $0x5d8] sm:$0xff]
    %v519 = vld [vmem:[#allocation7 + $0x5e0] sm:$0xff]
    %v520 = vld [vmem:[#allocation7 + $0x5e8] sm:$0xff]
    %v521 = vld [vmem:[#allocation7 + $0x5f0] sm:$0xff]
    %v522 = vld [vmem:[#allocation7 + $0x5f8] sm:$0xff]
    %v523 = vld [vmem:[#allocation7 + $0x600] sm:$0xff]
    %v524 = vld [vmem:[#allocation7 + $0x608] sm:$0xff]
    %v525 = vld [vmem:[#allocation7 + $0x610] sm:$0xff]
    %v526 = vld [vmem:[#allocation7 + $0x618] sm:$0xff]
    %v527 = vld [vmem:[#allocation7 + $0x620] sm:$0xff]
    %v528 = vld [vmem:[#allocation7 + $0x628] sm:$0xff]
    %v529 = vld [vmem:[#allocation7 + $0x630] sm:$0xff]
    %v530 = vld [vmem:[#allocation7 + $0x638] sm:$0xff]
    %v531 = vld [vmem:[#allocation7 + $0x640] sm:$0xff]
    %v532 = vld [vmem:[#allocation7 + $0x648] sm:$0xff]
    %v533 = vld [vmem:[#allocation7 + $0x650] sm:$0xff]
    %v534 = vld [vmem:[#allocation7 + $0x658] sm:$0xff]
    %v535 = vld [vmem:[#allocation7 + $0x660] sm:$0xff]
    %v536 = vld [vmem:[#allocation7 + $0x668] sm:$0xff]
    %v537 = vld [vmem:[#allocation7 + $0x670] sm:$0xff]
    %v538 = vld [vmem:[#allocation7 + $0x678] sm:$0xff]
    %v539 = vld [vmem:[#allocation7 + $0x680] sm:$0xff]
    %v540 = vld [vmem:[#allocation7 + $0x688] sm:$0xff]
    %v541 = vld [vmem:[#allocation7 + $0x690] sm:$0xff]
    %v542 = vld [vmem:[#allocation7 + $0x698] sm:$0xff]
    %v543 = vld [vmem:[#allocation7 + $0x6a0] sm:$0xff]
    %v544 = vld [vmem:[#allocation7 + $0x6a8] sm:$0xff]
    %v545 = vld [vmem:[#allocation7 + $0x6b0] sm:$0xff]
    %v546 = vld [vmem:[#allocation7 + $0x6b8] sm:$0xff]
    %v547 = vld [vmem:[#allocation7 + $0x6c0] sm:$0xff]
    %v548 = vld [vmem:[#allocation7 + $0x6c8] sm:$0xff]
    %v549 = vld [vmem:[#allocation7 + $0x6d0] sm:$0xff]
    %v550 = vld [vmem:[#allocation7 + $0x6d8] sm:$0xff]
    %v551 = vld [vmem:[#allocation7 + $0x6e0] sm:$0xff]
    %v552 = vld [vmem:[#allocation7 + $0x6e8] sm:$0xff]
    %v553 = vld [vmem:[#allocation7 + $0x6f0] sm:$0xff]
    %v554 = vld [vmem:[#allocation7 + $0x6f8] sm:$0xff]
    %v555 = vld [vmem:[#allocation7 + $0x700] sm:$0xff]
    %v556 = vld [vmem:[#allocation7 + $0x708] sm:$0xff]
    %v557 = vld [vmem:[#allocation7 + $0x710] sm:$0xff]
    %v558 = vld [vmem:[#allocation7 + $0x718] sm:$0xff]
    %v559 = vld [vmem:[#allocation7 + $0x720] sm:$0xff]
    %v560 = vld [vmem:[#allocation7 + $0x728] sm:$0xff]
    %v561 = vld [vmem:[#allocation7 + $0x730] sm:$0xff]
    %v562 = vld [vmem:[#allocation7 + $0x738] sm:$0xff]
    %v563 = vld [vmem:[#allocation7 + $0x740] sm:$0xff]
    %v564 = vld [vmem:[#allocation7 + $0x748] sm:$0xff]
    %v565 = vld [vmem:[#allocation7 + $0x750] sm:$0xff]
    %v566 = vld [vmem:[#allocation7 + $0x758] sm:$0xff]
    %v567 = vld [vmem:[#allocation7 + $0x760] sm:$0xff]
    %v568 = vld [vmem:[#allocation7 + $0x768] sm:$0xff]
    %v569 = vld [vmem:[#allocation7 + $0x770] sm:$0xff]
    %v570 = vld [vmem:[#allocation7 + $0x778] sm:$0xff]
    %v571 = vld [vmem:[#allocation7 + $0x780] sm:$0xff]
    %v572 = vld [vmem:[#allocation7 + $0x788] sm:$0xff]
    %v573 = vld [vmem:[#allocation7 + $0x790] sm:$0xff]
    %v574 = vld [vmem:[#allocation7 + $0x798] sm:$0xff]
    %v575 = vld [vmem:[#allocation7 + $0x7a0] sm:$0xff]
    %v576 = vld [vmem:[#allocation7 + $0x7a8] sm:$0xff]
    %v577 = vld [vmem:[#allocation7 + $0x7b0] sm:$0xff]
    %v578 = vld [vmem:[#allocation7 + $0x7b8] sm:$0xff]
    %v579 = vld [vmem:[#allocation7 + $0x7c0] sm:$0xff]
    %v580 = vld [vmem:[#allocation7 + $0x7c8] sm:$0xff]
    %v581 = vld [vmem:[#allocation7 + $0x7d0] sm:$0xff]
    %v582 = vld [vmem:[#allocation7 + $0x7d8] sm:$0xff]
    %v583 = vld [vmem:[#allocation7 + $0x7e0] sm:$0xff]
    %v584 = vld [vmem:[#allocation7 + $0x7e8] sm:$0xff]
    %v585 = vld [vmem:[#allocation7 + $0x7f0] sm:$0xff]
    %v586 = vld [vmem:[#allocation7 + $0x7f8] sm:$0xff]
    %v587 = vld [vmem:[#allocation7 + $0x800] sm:$0xff]
    %v588 = vld [vmem:[#allocation7 + $0x808] sm:$0xff]
    %v589 = vld [vmem:[#allocation7 + $0x810] sm:$0xff]
    %v590 = vld [vmem:[#allocation7 + $0x818] sm:$0xff]
    %v591 = vld [vmem:[#allocation7 + $0x820] sm:$0xff]
    %v592 = vld [vmem:[#allocation7 + $0x828] sm:$0xff]
    %v593 = vld [vmem:[#allocation7 + $0x830] sm:$0xff]
    %v594 = vld [vmem:[#allocation7 + $0x838] sm:$0xff]
    %v595 = vld [vmem:[#allocation7 + $0x840] sm:$0xff]
    %v596 = vld [vmem:[#allocation7 + $0x848] sm:$0xff]
    %v597 = vld [vmem:[#allocation7 + $0x850] sm:$0xff]
    %v598 = vld [vmem:[#allocation7 + $0x858] sm:$0xff]
    %v599 = vld [vmem:[#allocation7 + $0x860] sm:$0xff]
    %v600 = vld [vmem:[#allocation7 + $0x868] sm:$0xff]
    %v601 = vld [vmem:[#allocation7 + $0x870] sm:$0xff]
    %v602 = vld [vmem:[#allocation7 + $0x878] sm:$0xff]
    %v603 = vld [vmem:[#allocation7 + $0x880] sm:$0xff]
    %v604 = vld [vmem:[#allocation7 + $0x888] sm:$0xff]
    %v605 = vld [vmem:[#allocation7 + $0x890] sm:$0xff]
    %v606 = vld [vmem:[#allocation7 + $0x898] sm:$0xff]
    %v607 = vld [vmem:[#allocation7 + $0x8a0] sm:$0xff]
    %v608 = vld [vmem:[#allocation7 + $0x8a8] sm:$0xff]
    %v609 = vld [vmem:[#allocation7 + $0x8b0] sm:$0xff]
    %v610 = vld [vmem:[#allocation7 + $0x8b8] sm:$0xff]
    %v611 = vld [vmem:[#allocation7 + $0x8c0] sm:$0xff]
    %v612 = vld [vmem:[#allocation7 + $0x8c8] sm:$0xff]
    %v613 = vld [vmem:[#allocation7 + $0x8d0] sm:$0xff]
    %v614 = vld [vmem:[#allocation7 + $0x8d8] sm:$0xff]
    %v615 = vld [vmem:[#allocation7 + $0x8e0] sm:$0xff]
    %v616 = vld [vmem:[#allocation7 + $0x8e8] sm:$0xff]
    %v617 = vld [vmem:[#allocation7 + $0x8f0] sm:$0xff]
    %v618 = vld [vmem:[#allocation7 + $0x8f8] sm:$0xff]
    %v619 = vld [vmem:[#allocation7 + $0x900] sm:$0xff]
    %v620 = vld [vmem:[#allocation7 + $0x908] sm:$0xff]
    %v621 = vld [vmem:[#allocation7 + $0x910] sm:$0xff]
    %v622 = vld [vmem:[#allocation7 + $0x918] sm:$0xff]
    %v623 = vld [vmem:[#allocation7 + $0x920] sm:$0xff]
    %v624 = vld [vmem:[#allocation7 + $0x928] sm:$0xff]
    %v625 = vld [vmem:[#allocation7 + $0x930] sm:$0xff]
    %v626 = vld [vmem:[#allocation7 + $0x938] sm:$0xff]
    %v627 = vld [vmem:[#allocation7 + $0x940] sm:$0xff]
    %v628 = vld [vmem:[#allocation7 + $0x948] sm:$0xff]
    %v629 = vld [vmem:[#allocation7 + $0x950] sm:$0xff]
    %v630 = vld [vmem:[#allocation7 + $0x958] sm:$0xff]
    %v631 = vld [vmem:[#allocation7 + $0x960] sm:$0xff]
    %v632 = vld [vmem:[#allocation7 + $0x968] sm:$0xff]
    %v633 = vld [vmem:[#allocation7 + $0x970] sm:$0xff]
    %v634 = vld [vmem:[#allocation7 + $0x978] sm:$0xff]
    %v635 = vld [vmem:[#allocation7 + $0x980] sm:$0xff]
    %v636 = vld [vmem:[#allocation7 + $0x988] sm:$0xff]
    %v637 = vld [vmem:[#allocation7 + $0x990] sm:$0xff]
    %v638 = vld [vmem:[#allocation7 + $0x998] sm:$0xff]
    %v639 = vld [vmem:[#allocation7 + $0x9a0] sm:$0xff]
    %v640 = vld [vmem:[#allocation7 + $0x9a8] sm:$0xff]
    %v641 = vld [vmem:[#allocation7 + $0x9b0] sm:$0xff]
    %v642 = vld [vmem:[#allocation7 + $0x9b8] sm:$0xff]
    %v643 = vld [vmem:[#allocation7 + $0x9c0] sm:$0xff]
    %v644 = vld [vmem:[#allocation7 + $0x9c8] sm:$0xff]
    %v645 = vld [vmem:[#allocation7 + $0x9d0] sm:$0xff]
    %v646 = vld [vmem:[#allocation7 + $0x9d8] sm:$0xff]
    %v647 = vld [vmem:[#allocation7 + $0x9e0] sm:$0xff]
    %v648 = vld [vmem:[#allocation7 + $0x9e8] sm:$0xff]
    %v649 = vld [vmem:[#allocation7 + $0x9f0] sm:$0xff]
    %v650 = vld [vmem:[#allocation7 + $0x9f8] sm:$0xff]
    %v651 = vld [vmem:[#allocation7 + $0xa00] sm:$0xff]
    %v652 = vld [vmem:[#allocation7 + $0xa08] sm:$0xff]
    %v653 = vld [vmem:[#allocation7 + $0xa10] sm:$0xff]
    %v654 = vld [vmem:[#allocation7 + $0xa18] sm:$0xff]
    %v655 = vld [vmem:[#allocation7 + $0xa20] sm:$0xff]
    %v656 = vld [vmem:[#allocation7 + $0xa28] sm:$0xff]
    %v657 = vld [vmem:[#allocation7 + $0xa30] sm:$0xff]
    %v658 = vld [vmem:[#allocation7 + $0xa38] sm:$0xff]
    %v659 = vld [vmem:[#allocation7 + $0xa40] sm:$0xff]
    %v660 = vld [vmem:[#allocation7 + $0xa48] sm:$0xff]
    %v661 = vld [vmem:[#allocation7 + $0xa50] sm:$0xff]
    %v662 = vld [vmem:[#allocation7 + $0xa58] sm:$0xff]
    %v663 = vld [vmem:[#allocation7 + $0xa60] sm:$0xff]
    %v664 = vld [vmem:[#allocation7 + $0xa68] sm:$0xff]
    %v665 = vld [vmem:[#allocation7 + $0xa70] sm:$0xff]
    %v666 = vld [vmem:[#allocation7 + $0xa78] sm:$0xff]
    %v667 = vld [vmem:[#allocation7 + $0xa80] sm:$0xff]
    %v668 = vld [vmem:[#allocation7 + $0xa88] sm:$0xff]
    %v669 = vld [vmem:[#allocation7 + $0xa90] sm:$0xff]
    %v670 = vld [vmem:[#allocation7 + $0xa98] sm:$0xff]
    %v671 = vld [vmem:[#allocation7 + $0xaa0] sm:$0xff]
    %v672 = vld [vmem:[#allocation7 + $0xaa8] sm:$0xff]
    %v673 = vld [vmem:[#allocation7 + $0xab0] sm:$0xff]
    %v674 = vld [vmem:[#allocation7 + $0xab8] sm:$0xff]
    %v675 = vld [vmem:[#allocation7 + $0xac0] sm:$0xff]
    %v676 = vld [vmem:[#allocation7 + $0xac8] sm:$0xff]
    %v677 = vld [vmem:[#allocation7 + $0xad0] sm:$0xff]
    %v678 = vld [vmem:[#allocation7 + $0xad8] sm:$0xff]
    %v679 = vld [vmem:[#allocation7 + $0xae0] sm:$0xff]
    %v680 = vld [vmem:[#allocation7 + $0xae8] sm:$0xff]
    %v681 = vld [vmem:[#allocation7 + $0xaf0] sm:$0xff]
    %v682 = vld [vmem:[#allocation7 + $0xaf8] sm:$0xff]
    %v683 = vld [vmem:[#allocation7 + $0xb00] sm:$0xff]
    %v684 = vld [vmem:[#allocation7 + $0xb08] sm:$0xff]
    %v685 = vld [vmem:[#allocation7 + $0xb10] sm:$0xff]
    %v686 = vld [vmem:[#allocation7 + $0xb18] sm:$0xff]
    %v687 = vld [vmem:[#allocation7 + $0xb20] sm:$0xff]
    %v688 = vld [vmem:[#allocation7 + $0xb28] sm:$0xff]
    %v689 = vld [vmem:[#allocation7 + $0xb30] sm:$0xff]
    %v690 = vld [vmem:[#allocation7 + $0xb38] sm:$0xff]
    %v691 = vld [vmem:[#allocation7 + $0xb40] sm:$0xff]
    %v692 = vld [vmem:[#allocation7 + $0xb48] sm:$0xff]
    %v693 = vld [vmem:[#allocation7 + $0xb50] sm:$0xff]
    %v694 = vld [vmem:[#allocation7 + $0xb58] sm:$0xff]
    %v695 = vld [vmem:[#allocation7 + $0xb60] sm:$0xff]
    %v696 = vld [vmem:[#allocation7 + $0xb68] sm:$0xff]
    %v697 = vld [vmem:[#allocation7 + $0xb70] sm:$0xff]
    %v698 = vld [vmem:[#allocation7 + $0xb78] sm:$0xff]
    %v699 = vld [vmem:[#allocation7 + $0xb80] sm:$0xff]
    %v700 = vld [vmem:[#allocation7 + $0xb88] sm:$0xff]
    %v701 = vld [vmem:[#allocation7 + $0xb90] sm:$0xff]
    %v702 = vld [vmem:[#allocation7 + $0xb98] sm:$0xff]
    %v703 = vld [vmem:[#allocation7 + $0xba0] sm:$0xff]
    %v704 = vld [vmem:[#allocation7 + $0xba8] sm:$0xff]
    %v705 = vld [vmem:[#allocation7 + $0xbb0] sm:$0xff]
    %v706 = vld [vmem:[#allocation7 + $0xbb8] sm:$0xff]
    %v707 = vld [vmem:[#allocation7 + $0xbc0] sm:$0xff]
    %v708 = vld [vmem:[#allocation7 + $0xbc8] sm:$0xff]
    %v709 = vld [vmem:[#allocation7 + $0xbd0] sm:$0xff]
    %v710 = vld [vmem:[#allocation7 + $0xbd8] sm:$0xff]
    %v711 = vld [vmem:[#allocation7 + $0xbe0] sm:$0xff]
    %v712 = vld [vmem:[#allocation7 + $0xbe8] sm:$0xff]
    %v713 = vld [vmem:[#allocation7 + $0xbf0] sm:$0xff]
    %v714 = vld [vmem:[#allocation7 + $0xbf8] sm:$0xff]
    %v715 = vld [vmem:[#allocation7 + $0xc00] sm:$0xff]
    %v716 = vld [vmem:[#allocation7 + $0xc08] sm:$0xff]
    %v717 = vld [vmem:[#allocation7 + $0xc10] sm:$0xff]
    %v718 = vld [vmem:[#allocation7 + $0xc18] sm:$0xff]
    %v719 = vld [vmem:[#allocation7 + $0xc20] sm:$0xff]
    %v720 = vld [vmem:[#allocation7 + $0xc28] sm:$0xff]
    %v721 = vld [vmem:[#allocation7 + $0xc30] sm:$0xff]
    %v722 = vld [vmem:[#allocation7 + $0xc38] sm:$0xff]
    %v723 = vld [vmem:[#allocation7 + $0xc40] sm:$0xff]
    %v724 = vld [vmem:[#allocation7 + $0xc48] sm:$0xff]
    %v725 = vld [vmem:[#allocation7 + $0xc50] sm:$0xff]
    %v726 = vld [vmem:[#allocation7 + $0xc58] sm:$0xff]
    %v727 = vld [vmem:[#allocation7 + $0xc60] sm:$0xff]
    %v728 = vld [vmem:[#allocation7 + $0xc68] sm:$0xff]
    %v729 = vld [vmem:[#allocation7 + $0xc70] sm:$0xff]
    %v730 = vld [vmem:[#allocation7 + $0xc78] sm:$0xff]
    %v731 = vld [vmem:[#allocation7 + $0xc80] sm:$0xff]
    %v732 = vld [vmem:[#allocation7 + $0xc88] sm:$0xff]
    %v733 = vld [vmem:[#allocation7 + $0xc90] sm:$0xff]
    %v734 = vld [vmem:[#allocation7 + $0xc98] sm:$0xff]
    %v735 = vld [vmem:[#allocation7 + $0xca0] sm:$0xff]
    %v736 = vld [vmem:[#allocation7 + $0xca8] sm:$0xff]
    %v737 = vld [vmem:[#allocation7 + $0xcb0] sm:$0xff]
    %v738 = vld [vmem:[#allocation7 + $0xcb8] sm:$0xff]
    %v739 = vld [vmem:[#allocation7 + $0xcc0] sm:$0xff]
    %v740 = vld [vmem:[#allocation7 + $0xcc8] sm:$0xff]
    %v741 = vld [vmem:[#allocation7 + $0xcd0] sm:$0xff]
    %v742 = vld [vmem:[#allocation7 + $0xcd8] sm:$0xff]
    %v743 = vld [vmem:[#allocation7 + $0xce0] sm:$0xff]
    %v744 = vld [vmem:[#allocation7 + $0xce8] sm:$0xff]
    %v745 = vld [vmem:[#allocation7 + $0xcf0] sm:$0xff]
    %v746 = vld [vmem:[#allocation7 + $0xcf8] sm:$0xff]
    %v747 = vld [vmem:[#allocation7 + $0xd00] sm:$0xff]
    %v748 = vld [vmem:[#allocation7 + $0xd08] sm:$0xff]
    %v749 = vld [vmem:[#allocation7 + $0xd10] sm:$0xff]
    %v750 = vld [vmem:[#allocation7 + $0xd18] sm:$0xff]
    %v751 = vld [vmem:[#allocation7 + $0xd20] sm:$0xff]
    %v752 = vld [vmem:[#allocation7 + $0xd28] sm:$0xff]
    %v753 = vld [vmem:[#allocation7 + $0xd30] sm:$0xff]
    %v754 = vld [vmem:[#allocation7 + $0xd38] sm:$0xff]
    %v755 = vld [vmem:[#allocation7 + $0xd40] sm:$0xff]
    %v756 = vld [vmem:[#allocation7 + $0xd48] sm:$0xff]
    %v757 = vld [vmem:[#allocation7 + $0xd50] sm:$0xff]
    %v758 = vld [vmem:[#allocation7 + $0xd58] sm:$0xff]
    %v759 = vld [vmem:[#allocation7 + $0xd60] sm:$0xff]
    %v760 = vld [vmem:[#allocation7 + $0xd68] sm:$0xff]
    %v761 = vld [vmem:[#allocation7 + $0xd70] sm:$0xff]
    %v762 = vld [vmem:[#allocation7 + $0xd78] sm:$0xff]
    %v763 = vld [vmem:[#allocation7 + $0xd80] sm:$0xff]
    %v764 = vld [vmem:[#allocation7 + $0xd88] sm:$0xff]
    %v765 = vld [vmem:[#allocation7 + $0xd90] sm:$0xff]
    %v766 = vld [vmem:[#allocation7 + $0xd98] sm:$0xff]
    %v767 = vld [vmem:[#allocation7 + $0xda0] sm:$0xff]
    %v768 = vld [vmem:[#allocation7 + $0xda8] sm:$0xff]
    %v769 = vld [vmem:[#allocation7 + $0xdb0] sm:$0xff]
    %v770 = vld [vmem:[#allocation7 + $0xdb8] sm:$0xff]
    %v771 = vld [vmem:[#allocation7 + $0xdc0] sm:$0xff]
    %v772 = vld [vmem:[#allocation7 + $0xdc8] sm:$0xff]
    %v773 = vld [vmem:[#allocation7 + $0xdd0] sm:$0xff]
    %v774 = vld [vmem:[#allocation7 + $0xdd8] sm:$0xff]
    %v775 = vld [vmem:[#allocation7 + $0xde0] sm:$0xff]
    %v776 = vld [vmem:[#allocation7 + $0xde8] sm:$0xff]
    %v777 = vld [vmem:[#allocation7 + $0xdf0] sm:$0xff]
    %v778 = vld [vmem:[#allocation7 + $0xdf8] sm:$0xff]
    %v779 = vld [vmem:[#allocation7 + $0xe00] sm:$0xff]
    %v780 = vld [vmem:[#allocation7 + $0xe08] sm:$0xff]
    %v781 = vld [vmem:[#allocation7 + $0xe10] sm:$0xff]
    %v782 = vld [vmem:[#allocation7 + $0xe18] sm:$0xff]
    %v783 = vld [vmem:[#allocation7 + $0xe20] sm:$0xff]
    %v784 = vld [vmem:[#allocation7 + $0xe28] sm:$0xff]
    %v785 = vld [vmem:[#allocation7 + $0xe30] sm:$0xff]
    %v786 = vld [vmem:[#allocation7 + $0xe38] sm:$0xff]
    %v787 = vld [vmem:[#allocation7 + $0xe40] sm:$0xff]
    %v788 = vld [vmem:[#allocation7 + $0xe48] sm:$0xff]
    %v789 = vld [vmem:[#allocation7 + $0xe50] sm:$0xff]
    %v790 = vld [vmem:[#allocation7 + $0xe58] sm:$0xff]
    %v791 = vld [vmem:[#allocation7 + $0xe60] sm:$0xff]
    %v792 = vld [vmem:[#allocation7 + $0xe68] sm:$0xff]
    %v793 = vld [vmem:[#allocation7 + $0xe70] sm:$0xff]
    %v794 = vld [vmem:[#allocation7 + $0xe78] sm:$0xff]
    %v795 = vld [vmem:[#allocation7 + $0xe80] sm:$0xff]
    %v796 = vld [vmem:[#allocation7 + $0xe88] sm:$0xff]
    %v797 = vld [vmem:[#allocation7 + $0xe90] sm:$0xff]
    %v798 = vld [vmem:[#allocation7 + $0xe98] sm:$0xff]
    %v799 = vld [vmem:[#allocation7 + $0xea0] sm:$0xff]
    %v800 = vld [vmem:[#allocation7 + $0xea8] sm:$0xff]
    %v801 = vld [vmem:[#allocation7 + $0xeb0] sm:$0xff]
    %v802 = vld [vmem:[#allocation7 + $0xeb8] sm:$0xff]
    %v803 = vld [vmem:[#allocation7 + $0xec0] sm:$0xff]
    %v804 = vld [vmem:[#allocation7 + $0xec8] sm:$0xff]
    %v805 = vld [vmem:[#allocation7 + $0xed0] sm:$0xff]
    %v806 = vld [vmem:[#allocation7 + $0xed8] sm:$0xff]
    %v807 = vld [vmem:[#allocation7 + $0xee0] sm:$0xff]
    %v808 = vld [vmem:[#allocation7 + $0xee8] sm:$0xff]
    %v809 = vld [vmem:[#allocation7 + $0xef0] sm:$0xff]
    %v810 = vld [vmem:[#allocation7 + $0xef8] sm:$0xff]
    %v811 = vld [vmem:[#allocation7 + $0xf00] sm:$0xff]
    %v812 = vld [vmem:[#allocation7 + $0xf08] sm:$0xff]
    %v813 = vld [vmem:[#allocation7 + $0xf10] sm:$0xff]
    %v814 = vld [vmem:[#allocation7 + $0xf18] sm:$0xff]
    %v815 = vld [vmem:[#allocation7 + $0xf20] sm:$0xff]
    %v816 = vld [vmem:[#allocation7 + $0xf28] sm:$0xff]
    %v817 = vld [vmem:[#allocation7 + $0xf30] sm:$0xff]
    %v818 = vld [vmem:[#allocation7 + $0xf38] sm:$0xff]
    %v819 = vld [vmem:[#allocation7 + $0xf40] sm:$0xff]
    %v820 = vld [vmem:[#allocation7 + $0xf48] sm:$0xff]
    %v821 = vld [vmem:[#allocation7 + $0xf50] sm:$0xff]
    %v822 = vld [vmem:[#allocation7 + $0xf58] sm:$0xff]
    %v823 = vld [vmem:[#allocation7 + $0xf60] sm:$0xff]
    %v824 = vld [vmem:[#allocation7 + $0xf68] sm:$0xff]
    %v825 = vld [vmem:[#allocation7 + $0xf70] sm:$0xff]
    %v826 = vld [vmem:[#allocation7 + $0xf78] sm:$0xff]
    %v827 = vld [vmem:[#allocation7 + $0xf80] sm:$0xff]
    %v828 = vld [vmem:[#allocation7 + $0xf88] sm:$0xff]
    %v829 = vld [vmem:[#allocation7 + $0xf90] sm:$0xff]
    %v830 = vld [vmem:[#allocation7 + $0xf98] sm:$0xff]
    %v831 = vld [vmem:[#allocation7 + $0xfa0] sm:$0xff]
    %v832 = vld [vmem:[#allocation7 + $0xfa8] sm:$0xff]
    %v833 = vld [vmem:[#allocation7 + $0xfb0] sm:$0xff]
    %v834 = vld [vmem:[#allocation7 + $0xfb8] sm:$0xff]
    %v835 = vld [vmem:[#allocation7 + $0xfc0] sm:$0xff]
    %v836 = vld [vmem:[#allocation7 + $0xfc8] sm:$0xff]
    %v837 = vld [vmem:[#allocation7 + $0xfd0] sm:$0xff]
    %v838 = vld [vmem:[#allocation7 + $0xfd8] sm:$0xff]
    %v839 = vld [vmem:[#allocation7 + $0xfe0] sm:$0xff]
    %v840 = vld [vmem:[#allocation7 + $0xfe8] sm:$0xff]
    %v841 = vld [vmem:[#allocation7 + $0xff0] sm:$0xff]
    %v842 = vld [vmem:[#allocation7 + $0xff8] sm:$0xff]
    %v1355 = vunpack.c.l.b16 %v331
    %v1356 = vunpack.c.h.b16 %v331
    %v1357 = vunpack.c.l.b16 %v332
    %v1358 = vunpack.c.h.b16 %v332
    %v1359 = vunpack.c.l.b16 %v333
    %v1360 = vunpack.c.h.b16 %v333
    %v1361 = vunpack.c.l.b16 %v334
    %v1362 = vunpack.c.h.b16 %v334
    %v1363 = vunpack.c.l.b16 %v335
    %v1364 = vunpack.c.h.b16 %v335
    %v1365 = vunpack.c.l.b16 %v336
    %v1366 = vunpack.c.h.b16 %v336
    %v1367 = vunpack.c.l.b16 %v337
    %v1368 = vunpack.c.h.b16 %v337
    %v1369 = vunpack.c.l.b16 %v338
    %v1370 = vunpack.c.h.b16 %v338
    %v1371 = vunpack.c.l.b16 %v339
    %v1372 = vunpack.c.h.b16 %v339
    %v1373 = vunpack.c.l.b16 %v340
    %v1374 = vunpack.c.h.b16 %v340
    %v1375 = vunpack.c.l.b16 %v341
    %v1376 = vunpack.c.h.b16 %v341
    %v1377 = vunpack.c.l.b16 %v342
    %v1378 = vunpack.c.h.b16 %v342
    %v1379 = vunpack.c.l.b16 %v343
    %v1380 = vunpack.c.h.b16 %v343
    %v1381 = vunpack.c.l.b16 %v344
    %v1382 = vunpack.c.h.b16 %v344
    %v1383 = vunpack.c.l.b16 %v345
    %v1384 = vunpack.c.h.b16 %v345
    %v1385 = vunpack.c.l.b16 %v346
    %v1386 = vunpack.c.h.b16 %v346
    %v1387 = vunpack.c.l.b16 %v347
    %v1388 = vunpack.c.h.b16 %v347
    %v1389 = vunpack.c.l.b16 %v348
    %v1390 = vunpack.c.h.b16 %v348
    %v1391 = vunpack.c.l.b16 %v349
    %v1392 = vunpack.c.h.b16 %v349
    %v1393 = vunpack.c.l.b16 %v350
    %v1394 = vunpack.c.h.b16 %v350
    %v1395 = vunpack.c.l.b16 %v351
    %v1396 = vunpack.c.h.b16 %v351
    %v1397 = vunpack.c.l.b16 %v352
    %v1398 = vunpack.c.h.b16 %v352
    %v1399 = vunpack.c.l.b16 %v353
    %v1400 = vunpack.c.h.b16 %v353
    %v1401 = vunpack.c.l.b16 %v354
    %v1402 = vunpack.c.h.b16 %v354
    %v1403 = vunpack.c.l.b16 %v355
    %v1404 = vunpack.c.h.b16 %v355
    %v1405 = vunpack.c.l.b16 %v356
    %v1406 = vunpack.c.h.b16 %v356
    %v1407 = vunpack.c.l.b16 %v357
    %v1408 = vunpack.c.h.b16 %v357
    %v1409 = vunpack.c.l.b16 %v358
    %v1410 = vunpack.c.h.b16 %v358
    %v1411 = vunpack.c.l.b16 %v359
    %v1412 = vunpack.c.h.b16 %v359
    %v1413 = vunpack.c.l.b16 %v360
    %v1414 = vunpack.c.h.b16 %v360
    %v1415 = vunpack.c.l.b16 %v361
    %v1416 = vunpack.c.h.b16 %v361
    %v1417 = vunpack.c.l.b16 %v362
    %v1418 = vunpack.c.h.b16 %v362
    %v1419 = vunpack.c.l.b16 %v363
    %v1420 = vunpack.c.h.b16 %v363
    %v1421 = vunpack.c.l.b16 %v364
    %v1422 = vunpack.c.h.b16 %v364
    %v1423 = vunpack.c.l.b16 %v365
    %v1424 = vunpack.c.h.b16 %v365
    %v1425 = vunpack.c.l.b16 %v366
    %v1426 = vunpack.c.h.b16 %v366
    %v1427 = vunpack.c.l.b16 %v367
    %v1428 = vunpack.c.h.b16 %v367
    %v1429 = vunpack.c.l.b16 %v368
    %v1430 = vunpack.c.h.b16 %v368
    %v1431 = vunpack.c.l.b16 %v369
    %v1432 = vunpack.c.h.b16 %v369
    %v1433 = vunpack.c.l.b16 %v370
    %v1434 = vunpack.c.h.b16 %v370
    %v1435 = vunpack.c.l.b16 %v371
    %v1436 = vunpack.c.h.b16 %v371
    %v1437 = vunpack.c.l.b16 %v372
    %v1438 = vunpack.c.h.b16 %v372
    %v1439 = vunpack.c.l.b16 %v373
    %v1440 = vunpack.c.h.b16 %v373
    %v1441 = vunpack.c.l.b16 %v374
    %v1442 = vunpack.c.h.b16 %v374
    %v1443 = vunpack.c.l.b16 %v375
    %v1444 = vunpack.c.h.b16 %v375
    %v1445 = vunpack.c.l.b16 %v376
    %v1446 = vunpack.c.h.b16 %v376
    %v1447 = vunpack.c.l.b16 %v377
    %v1448 = vunpack.c.h.b16 %v377
    %v1449 = vunpack.c.l.b16 %v378
    %v1450 = vunpack.c.h.b16 %v378
    %v1451 = vunpack.c.l.b16 %v379
    %v1452 = vunpack.c.h.b16 %v379
    %v1453 = vunpack.c.l.b16 %v380
    %v1454 = vunpack.c.h.b16 %v380
    %v1455 = vunpack.c.l.b16 %v381
    %v1456 = vunpack.c.h.b16 %v381
    %v1457 = vunpack.c.l.b16 %v382
    %v1458 = vunpack.c.h.b16 %v382
    %v1459 = vunpack.c.l.b16 %v383
    %v1460 = vunpack.c.h.b16 %v383
    %v1461 = vunpack.c.l.b16 %v384
    %v1462 = vunpack.c.h.b16 %v384
    %v1463 = vunpack.c.l.b16 %v385
    %v1464 = vunpack.c.h.b16 %v385
    %v1465 = vunpack.c.l.b16 %v386
    %v1466 = vunpack.c.h.b16 %v386
    %v1467 = vunpack.c.l.b16 %v387
    %v1468 = vunpack.c.h.b16 %v387
    %v1469 = vunpack.c.l.b16 %v388
    %v1470 = vunpack.c.h.b16 %v388
    %v1471 = vunpack.c.l.b16 %v389
    %v1472 = vunpack.c.h.b16 %v389
    %v1473 = vunpack.c.l.b16 %v390
    %v1474 = vunpack.c.h.b16 %v390
    %v1475 = vunpack.c.l.b16 %v391
    %v1476 = vunpack.c.h.b16 %v391
    %v1477 = vunpack.c.l.b16 %v392
    %v1478 = vunpack.c.h.b16 %v392
    %v1479 = vunpack.c.l.b16 %v393
    %v1480 = vunpack.c.h.b16 %v393
    %v1481 = vunpack.c.l.b16 %v394
    %v1482 = vunpack.c.h.b16 %v394
    %v1483 = vunpack.c.l.b16 %v395
    %v1484 = vunpack.c.h.b16 %v395
    %v1485 = vunpack.c.l.b16 %v396
    %v1486 = vunpack.c.h.b16 %v396
    %v1487 = vunpack.c.l.b16 %v397
    %v1488 = vunpack.c.h.b16 %v397
    %v1489 = vunpack.c.l.b16 %v398
    %v1490 = vunpack.c.h.b16 %v398
    %v1491 = vunpack.c.l.b16 %v399
    %v1492 = vunpack.c.h.b16 %v399
    %v1493 = vunpack.c.l.b16 %v400
    %v1494 = vunpack.c.h.b16 %v400
    %v1495 = vunpack.c.l.b16 %v401
    %v1496 = vunpack.c.h.b16 %v401
    %v1497 = vunpack.c.l.b16 %v402
    %v1498 = vunpack.c.h.b16 %v402
    %v1499 = vunpack.c.l.b16 %v403
    %v1500 = vunpack.c.h.b16 %v403
    %v1501 = vunpack.c.l.b16 %v404
    %v1502 = vunpack.c.h.b16 %v404
    %v1503 = vunpack.c.l.b16 %v405
    %v1504 = vunpack.c.h.b16 %v405
    %v1505 = vunpack.c.l.b16 %v406
    %v1506 = vunpack.c.h.b16 %v406
    %v1507 = vunpack.c.l.b16 %v407
    %v1508 = vunpack.c.h.b16 %v407
    %v1509 = vunpack.c.l.b16 %v408
    %v1510 = vunpack.c.h.b16 %v408
    %v1511 = vunpack.c.l.b16 %v409
    %v1512 = vunpack.c.h.b16 %v409
    %v1513 = vunpack.c.l.b16 %v410
    %v1514 = vunpack.c.h.b16 %v410
    %v1515 = vunpack.c.l.b16 %v411
    %v1516 = vunpack.c.h.b16 %v411
    %v1517 = vunpack.c.l.b16 %v412
    %v1518 = vunpack.c.h.b16 %v412
    %v1519 = vunpack.c.l.b16 %v413
    %v1520 = vunpack.c.h.b16 %v413
    %v1521 = vunpack.c.l.b16 %v414
    %v1522 = vunpack.c.h.b16 %v414
    %v1523 = vunpack.c.l.b16 %v415
    %v1524 = vunpack.c.h.b16 %v415
    %v1525 = vunpack.c.l.b16 %v416
    %v1526 = vunpack.c.h.b16 %v416
    %v1527 = vunpack.c.l.b16 %v417
    %v1528 = vunpack.c.h.b16 %v417
    %v1529 = vunpack.c.l.b16 %v418
    %v1530 = vunpack.c.h.b16 %v418
    %v1531 = vunpack.c.l.b16 %v419
    %v1532 = vunpack.c.h.b16 %v419
    %v1533 = vunpack.c.l.b16 %v420
    %v1534 = vunpack.c.h.b16 %v420
    %v1535 = vunpack.c.l.b16 %v421
    %v1536 = vunpack.c.h.b16 %v421
    %v1537 = vunpack.c.l.b16 %v422
    %v1538 = vunpack.c.h.b16 %v422
    %v1539 = vunpack.c.l.b16 %v423
    %v1540 = vunpack.c.h.b16 %v423
    %v1541 = vunpack.c.l.b16 %v424
    %v1542 = vunpack.c.h.b16 %v424
    %v1543 = vunpack.c.l.b16 %v425
    %v1544 = vunpack.c.h.b16 %v425
    %v1545 = vunpack.c.l.b16 %v426
    %v1546 = vunpack.c.h.b16 %v426
    %v1547 = vunpack.c.l.b16 %v427
    %v1548 = vunpack.c.h.b16 %v427
    %v1549 = vunpack.c.l.b16 %v428
    %v1550 = vunpack.c.h.b16 %v428
    %v1551 = vunpack.c.l.b16 %v429
    %v1552 = vunpack.c.h.b16 %v429
    %v1553 = vunpack.c.l.b16 %v430
    %v1554 = vunpack.c.h.b16 %v430
    %v1555 = vunpack.c.l.b16 %v431
    %v1556 = vunpack.c.h.b16 %v431
    %v1557 = vunpack.c.l.b16 %v432
    %v1558 = vunpack.c.h.b16 %v432
    %v1559 = vunpack.c.l.b16 %v433
    %v1560 = vunpack.c.h.b16 %v433
    %v1561 = vunpack.c.l.b16 %v434
    %v1562 = vunpack.c.h.b16 %v434
    %v1563 = vunpack.c.l.b16 %v435
    %v1564 = vunpack.c.h.b16 %v435
    %v1565 = vunpack.c.l.b16 %v436
    %v1566 = vunpack.c.h.b16 %v436
    %v1567 = vunpack.c.l.b16 %v437
    %v1568 = vunpack.c.h.b16 %v437
    %v1569 = vunpack.c.l.b16 %v438
    %v1570 = vunpack.c.h.b16 %v438
    %v1571 = vunpack.c.l.b16 %v439
    %v1572 = vunpack.c.h.b16 %v439
    %v1573 = vunpack.c.l.b16 %v440
    %v1574 = vunpack.c.h.b16 %v440
    %v1575 = vunpack.c.l.b16 %v441
    %v1576 = vunpack.c.h.b16 %v441
    %v1577 = vunpack.c.l.b16 %v442
    %v1578 = vunpack.c.h.b16 %v442
    %v1579 = vunpack.c.l.b16 %v443
    %v1580 = vunpack.c.h.b16 %v443
    %v1581 = vunpack.c.l.b16 %v444
    %v1582 = vunpack.c.h.b16 %v444
    %v1583 = vunpack.c.l.b16 %v445
    %v1584 = vunpack.c.h.b16 %v445
    %v1585 = vunpack.c.l.b16 %v446
    %v1586 = vunpack.c.h.b16 %v446
    %v1587 = vunpack.c.l.b16 %v447
    %v1588 = vunpack.c.h.b16 %v447
    %v1589 = vunpack.c.l.b16 %v448
    %v1590 = vunpack.c.h.b16 %v448
    %v1591 = vunpack.c.l.b16 %v449
    %v1592 = vunpack.c.h.b16 %v449
    %v1593 = vunpack.c.l.b16 %v450
    %v1594 = vunpack.c.h.b16 %v450
    %v1595 = vunpack.c.l.b16 %v451
    %v1596 = vunpack.c.h.b16 %v451
    %v1597 = vunpack.c.l.b16 %v452
    %v1598 = vunpack.c.h.b16 %v452
    %v1599 = vunpack.c.l.b16 %v453
    %v1600 = vunpack.c.h.b16 %v453
    %v1601 = vunpack.c.l.b16 %v454
    %v1602 = vunpack.c.h.b16 %v454
    %v1603 = vunpack.c.l.b16 %v455
    %v1604 = vunpack.c.h.b16 %v455
    %v1605 = vunpack.c.l.b16 %v456
    %v1606 = vunpack.c.h.b16 %v456
    %v1607 = vunpack.c.l.b16 %v457
    %v1608 = vunpack.c.h.b16 %v457
    %v1609 = vunpack.c.l.b16 %v458
    %v1610 = vunpack.c.h.b16 %v458
    %v1611 = vunpack.c.l.b16 %v459
    %v1612 = vunpack.c.h.b16 %v459
    %v1613 = vunpack.c.l.b16 %v460
    %v1614 = vunpack.c.h.b16 %v460
    %v1615 = vunpack.c.l.b16 %v461
    %v1616 = vunpack.c.h.b16 %v461
    %v1617 = vunpack.c.l.b16 %v462
    %v1618 = vunpack.c.h.b16 %v462
    %v1619 = vunpack.c.l.b16 %v463
    %v1620 = vunpack.c.h.b16 %v463
    %v1621 = vunpack.c.l.b16 %v464
    %v1622 = vunpack.c.h.b16 %v464
    %v1623 = vunpack.c.l.b16 %v465
    %v1624 = vunpack.c.h.b16 %v465
    %v1625 = vunpack.c.l.b16 %v466
    %v1626 = vunpack.c.h.b16 %v466
    %v1627 = vunpack.c.l.b16 %v467
    %v1628 = vunpack.c.h.b16 %v467
    %v1629 = vunpack.c.l.b16 %v468
    %v1630 = vunpack.c.h.b16 %v468
    %v1631 = vunpack.c.l.b16 %v469
    %v1632 = vunpack.c.h.b16 %v469
    %v1633 = vunpack.c.l.b16 %v470
    %v1634 = vunpack.c.h.b16 %v470
    %v1635 = vunpack.c.l.b16 %v471
    %v1636 = vunpack.c.h.b16 %v471
    %v1637 = vunpack.c.l.b16 %v472
    %v1638 = vunpack.c.h.b16 %v472
    %v1639 = vunpack.c.l.b16 %v473
    %v1640 = vunpack.c.h.b16 %v473
    %v1641 = vunpack.c.l.b16 %v474
    %v1642 = vunpack.c.h.b16 %v474
    %v1643 = vunpack.c.l.b16 %v475
    %v1644 = vunpack.c.h.b16 %v475
    %v1645 = vunpack.c.l.b16 %v476
    %v1646 = vunpack.c.h.b16 %v476
    %v1647 = vunpack.c.l.b16 %v477
    %v1648 = vunpack.c.h.b16 %v477
    %v1649 = vunpack.c.l.b16 %v478
    %v1650 = vunpack.c.h.b16 %v478
    %v1651 = vunpack.c.l.b16 %v479
    %v1652 = vunpack.c.h.b16 %v479
    %v1653 = vunpack.c.l.b16 %v480
    %v1654 = vunpack.c.h.b16 %v480
    %v1655 = vunpack.c.l.b16 %v481
    %v1656 = vunpack.c.h.b16 %v481
    %v1657 = vunpack.c.l.b16 %v482
    %v1658 = vunpack.c.h.b16 %v482
    %v1659 = vunpack.c.l.b16 %v483
    %v1660 = vunpack.c.h.b16 %v483
    %v1661 = vunpack.c.l.b16 %v484
    %v1662 = vunpack.c.h.b16 %v484
    %v1663 = vunpack.c.l.b16 %v485
    %v1664 = vunpack.c.h.b16 %v485
    %v1665 = vunpack.c.l.b16 %v486
    %v1666 = vunpack.c.h.b16 %v486
    %v1667 = vunpack.c.l.b16 %v487
    %v1668 = vunpack.c.h.b16 %v487
    %v1669 = vunpack.c.l.b16 %v488
    %v1670 = vunpack.c.h.b16 %v488
    %v1671 = vunpack.c.l.b16 %v489
    %v1672 = vunpack.c.h.b16 %v489
    %v1673 = vunpack.c.l.b16 %v490
    %v1674 = vunpack.c.h.b16 %v490
    %v1675 = vunpack.c.l.b16 %v491
    %v1676 = vunpack.c.h.b16 %v491
    %v1677 = vunpack.c.l.b16 %v492
    %v1678 = vunpack.c.h.b16 %v492
    %v1679 = vunpack.c.l.b16 %v493
    %v1680 = vunpack.c.h.b16 %v493
    %v1681 = vunpack.c.l.b16 %v494
    %v1682 = vunpack.c.h.b16 %v494
    %v1683 = vunpack.c.l.b16 %v495
    %v1684 = vunpack.c.h.b16 %v495
    %v1685 = vunpack.c.l.b16 %v496
    %v1686 = vunpack.c.h.b16 %v496
    %v1687 = vunpack.c.l.b16 %v497
    %v1688 = vunpack.c.h.b16 %v497
    %v1689 = vunpack.c.l.b16 %v498
    %v1690 = vunpack.c.h.b16 %v498
    %v1691 = vunpack.c.l.b16 %v499
    %v1692 = vunpack.c.h.b16 %v499
    %v1693 = vunpack.c.l.b16 %v500
    %v1694 = vunpack.c.h.b16 %v500
    %v1695 = vunpack.c.l.b16 %v501
    %v1696 = vunpack.c.h.b16 %v501
    %v1697 = vunpack.c.l.b16 %v502
    %v1698 = vunpack.c.h.b16 %v502
    %v1699 = vunpack.c.l.b16 %v503
    %v1700 = vunpack.c.h.b16 %v503
    %v1701 = vunpack.c.l.b16 %v504
    %v1702 = vunpack.c.h.b16 %v504
    %v1703 = vunpack.c.l.b16 %v505
    %v1704 = vunpack.c.h.b16 %v505
    %v1705 = vunpack.c.l.b16 %v506
    %v1706 = vunpack.c.h.b16 %v506
    %v1707 = vunpack.c.l.b16 %v507
    %v1708 = vunpack.c.h.b16 %v507
    %v1709 = vunpack.c.l.b16 %v508
    %v1710 = vunpack.c.h.b16 %v508
    %v1711 = vunpack.c.l.b16 %v509
    %v1712 = vunpack.c.h.b16 %v509
    %v1713 = vunpack.c.l.b16 %v510
    %v1714 = vunpack.c.h.b16 %v510
    %v1715 = vunpack.c.l.b16 %v511
    %v1716 = vunpack.c.h.b16 %v511
    %v1717 = vunpack.c.l.b16 %v512
    %v1718 = vunpack.c.h.b16 %v512
    %v1719 = vunpack.c.l.b16 %v513
    %v1720 = vunpack.c.h.b16 %v513
    %v1721 = vunpack.c.l.b16 %v514
    %v1722 = vunpack.c.h.b16 %v514
    %v1723 = vunpack.c.l.b16 %v515
    %v1724 = vunpack.c.h.b16 %v515
    %v1725 = vunpack.c.l.b16 %v516
    %v1726 = vunpack.c.h.b16 %v516
    %v1727 = vunpack.c.l.b16 %v517
    %v1728 = vunpack.c.h.b16 %v517
    %v1729 = vunpack.c.l.b16 %v518
    %v1730 = vunpack.c.h.b16 %v518
    %v1731 = vunpack.c.l.b16 %v519
    %v1732 = vunpack.c.h.b16 %v519
    %v1733 = vunpack.c.l.b16 %v520
    %v1734 = vunpack.c.h.b16 %v520
    %v1735 = vunpack.c.l.b16 %v521
    %v1736 = vunpack.c.h.b16 %v521
    %v1737 = vunpack.c.l.b16 %v522
    %v1738 = vunpack.c.h.b16 %v522
    %v1739 = vunpack.c.l.b16 %v523
    %v1740 = vunpack.c.h.b16 %v523
    %v1741 = vunpack.c.l.b16 %v524
    %v1742 = vunpack.c.h.b16 %v524
    %v1743 = vunpack.c.l.b16 %v525
    %v1744 = vunpack.c.h.b16 %v525
    %v1745 = vunpack.c.l.b16 %v526
    %v1746 = vunpack.c.h.b16 %v526
    %v1747 = vunpack.c.l.b16 %v527
    %v1748 = vunpack.c.h.b16 %v527
    %v1749 = vunpack.c.l.b16 %v528
    %v1750 = vunpack.c.h.b16 %v528
    %v1751 = vunpack.c.l.b16 %v529
    %v1752 = vunpack.c.h.b16 %v529
    %v1753 = vunpack.c.l.b16 %v530
    %v1754 = vunpack.c.h.b16 %v530
    %v1755 = vunpack.c.l.b16 %v531
    %v1756 = vunpack.c.h.b16 %v531
    %v1757 = vunpack.c.l.b16 %v532
    %v1758 = vunpack.c.h.b16 %v532
    %v1759 = vunpack.c.l.b16 %v533
    %v1760 = vunpack.c.h.b16 %v533
    %v1761 = vunpack.c.l.b16 %v534
    %v1762 = vunpack.c.h.b16 %v534
    %v1763 = vunpack.c.l.b16 %v535
    %v1764 = vunpack.c.h.b16 %v535
    %v1765 = vunpack.c.l.b16 %v536
    %v1766 = vunpack.c.h.b16 %v536
    %v1767 = vunpack.c.l.b16 %v537
    %v1768 = vunpack.c.h.b16 %v537
    %v1769 = vunpack.c.l.b16 %v538
    %v1770 = vunpack.c.h.b16 %v538
    %v1771 = vunpack.c.l.b16 %v539
    %v1772 = vunpack.c.h.b16 %v539
    %v1773 = vunpack.c.l.b16 %v540
    %v1774 = vunpack.c.h.b16 %v540
    %v1775 = vunpack.c.l.b16 %v541
    %v1776 = vunpack.c.h.b16 %v541
    %v1777 = vunpack.c.l.b16 %v542
    %v1778 = vunpack.c.h.b16 %v542
    %v1779 = vunpack.c.l.b16 %v543
    %v1780 = vunpack.c.h.b16 %v543
    %v1781 = vunpack.c.l.b16 %v544
    %v1782 = vunpack.c.h.b16 %v544
    %v1783 = vunpack.c.l.b16 %v545
    %v1784 = vunpack.c.h.b16 %v545
    %v1785 = vunpack.c.l.b16 %v546
    %v1786 = vunpack.c.h.b16 %v546
    %v1787 = vunpack.c.l.b16 %v547
    %v1788 = vunpack.c.h.b16 %v547
    %v1789 = vunpack.c.l.b16 %v548
    %v1790 = vunpack.c.h.b16 %v548
    %v1791 = vunpack.c.l.b16 %v549
    %v1792 = vunpack.c.h.b16 %v549
    %v1793 = vunpack.c.l.b16 %v550
    %v1794 = vunpack.c.h.b16 %v550
    %v1795 = vunpack.c.l.b16 %v551
    %v1796 = vunpack.c.h.b16 %v551
    %v1797 = vunpack.c.l.b16 %v552
    %v1798 = vunpack.c.h.b16 %v552
    %v1799 = vunpack.c.l.b16 %v553
    %v1800 = vunpack.c.h.b16 %v553
    %v1801 = vunpack.c.l.b16 %v554
    %v1802 = vunpack.c.h.b16 %v554
    %v1803 = vunpack.c.l.b16 %v555
    %v1804 = vunpack.c.h.b16 %v555
    %v1805 = vunpack.c.l.b16 %v556
    %v1806 = vunpack.c.h.b16 %v556
    %v1807 = vunpack.c.l.b16 %v557
    %v1808 = vunpack.c.h.b16 %v557
    %v1809 = vunpack.c.l.b16 %v558
    %v1810 = vunpack.c.h.b16 %v558
    %v1811 = vunpack.c.l.b16 %v559
    %v1812 = vunpack.c.h.b16 %v559
    %v1813 = vunpack.c.l.b16 %v560
    %v1814 = vunpack.c.h.b16 %v560
    %v1815 = vunpack.c.l.b16 %v561
    %v1816 = vunpack.c.h.b16 %v561
    %v1817 = vunpack.c.l.b16 %v562
    %v1818 = vunpack.c.h.b16 %v562
    %v1819 = vunpack.c.l.b16 %v563
    %v1820 = vunpack.c.h.b16 %v563
    %v1821 = vunpack.c.l.b16 %v564
    %v1822 = vunpack.c.h.b16 %v564
    %v1823 = vunpack.c.l.b16 %v565
    %v1824 = vunpack.c.h.b16 %v565
    %v1825 = vunpack.c.l.b16 %v566
    %v1826 = vunpack.c.h.b16 %v566
    %v1827 = vunpack.c.l.b16 %v567
    %v1828 = vunpack.c.h.b16 %v567
    %v1829 = vunpack.c.l.b16 %v568
    %v1830 = vunpack.c.h.b16 %v568
    %v1831 = vunpack.c.l.b16 %v569
    %v1832 = vunpack.c.h.b16 %v569
    %v1833 = vunpack.c.l.b16 %v570
    %v1834 = vunpack.c.h.b16 %v570
    %v1835 = vunpack.c.l.b16 %v571
    %v1836 = vunpack.c.h.b16 %v571
    %v1837 = vunpack.c.l.b16 %v572
    %v1838 = vunpack.c.h.b16 %v572
    %v1839 = vunpack.c.l.b16 %v573
    %v1840 = vunpack.c.h.b16 %v573
    %v1841 = vunpack.c.l.b16 %v574
    %v1842 = vunpack.c.h.b16 %v574
    %v1843 = vunpack.c.l.b16 %v575
    %v1844 = vunpack.c.h.b16 %v575
    %v1845 = vunpack.c.l.b16 %v576
    %v1846 = vunpack.c.h.b16 %v576
    %v1847 = vunpack.c.l.b16 %v577
    %v1848 = vunpack.c.h.b16 %v577
    %v1849 = vunpack.c.l.b16 %v578
    %v1850 = vunpack.c.h.b16 %v578
    %v1851 = vunpack.c.l.b16 %v579
    %v1852 = vunpack.c.h.b16 %v579
    %v1853 = vunpack.c.l.b16 %v580
    %v1854 = vunpack.c.h.b16 %v580
    %v1855 = vunpack.c.l.b16 %v581
    %v1856 = vunpack.c.h.b16 %v581
    %v1857 = vunpack.c.l.b16 %v582
    %v1858 = vunpack.c.h.b16 %v582
    %v1859 = vunpack.c.l.b16 %v583
    %v1860 = vunpack.c.h.b16 %v583
    %v1861 = vunpack.c.l.b16 %v584
    %v1862 = vunpack.c.h.b16 %v584
    %v1863 = vunpack.c.l.b16 %v585
    %v1864 = vunpack.c.h.b16 %v585
    %v1865 = vunpack.c.l.b16 %v586
    %v1866 = vunpack.c.h.b16 %v586
    %v1867 = vunpack.c.l.b16 %v587
    %v1868 = vunpack.c.h.b16 %v587
    %v1869 = vunpack.c.l.b16 %v588
    %v1870 = vunpack.c.h.b16 %v588
    %v1871 = vunpack.c.l.b16 %v589
    %v1872 = vunpack.c.h.b16 %v589
    %v1873 = vunpack.c.l.b16 %v590
    %v1874 = vunpack.c.h.b16 %v590
    %v1875 = vunpack.c.l.b16 %v591
    %v1876 = vunpack.c.h.b16 %v591
    %v1877 = vunpack.c.l.b16 %v592
    %v1878 = vunpack.c.h.b16 %v592
    %v1879 = vunpack.c.l.b16 %v593
    %v1880 = vunpack.c.h.b16 %v593
    %v1881 = vunpack.c.l.b16 %v594
    %v1882 = vunpack.c.h.b16 %v594
    %v1883 = vunpack.c.l.b16 %v595
    %v1884 = vunpack.c.h.b16 %v595
    %v1885 = vunpack.c.l.b16 %v596
    %v1886 = vunpack.c.h.b16 %v596
    %v1887 = vunpack.c.l.b16 %v597
    %v1888 = vunpack.c.h.b16 %v597
    %v1889 = vunpack.c.l.b16 %v598
    %v1890 = vunpack.c.h.b16 %v598
    %v1891 = vunpack.c.l.b16 %v599
    %v1892 = vunpack.c.h.b16 %v599
    %v1893 = vunpack.c.l.b16 %v600
    %v1894 = vunpack.c.h.b16 %v600
    %v1895 = vunpack.c.l.b16 %v601
    %v1896 = vunpack.c.h.b16 %v601
    %v1897 = vunpack.c.l.b16 %v602
    %v1898 = vunpack.c.h.b16 %v602
    %v1899 = vunpack.c.l.b16 %v603
    %v1900 = vunpack.c.h.b16 %v603
    %v1901 = vunpack.c.l.b16 %v604
    %v1902 = vunpack.c.h.b16 %v604
    %v1903 = vunpack.c.l.b16 %v605
    %v1904 = vunpack.c.h.b16 %v605
    %v1905 = vunpack.c.l.b16 %v606
    %v1906 = vunpack.c.h.b16 %v606
    %v1907 = vunpack.c.l.b16 %v607
    %v1908 = vunpack.c.h.b16 %v607
    %v1909 = vunpack.c.l.b16 %v608
    %v1910 = vunpack.c.h.b16 %v608
    %v1911 = vunpack.c.l.b16 %v609
    %v1912 = vunpack.c.h.b16 %v609
    %v1913 = vunpack.c.l.b16 %v610
    %v1914 = vunpack.c.h.b16 %v610
    %v1915 = vunpack.c.l.b16 %v611
    %v1916 = vunpack.c.h.b16 %v611
    %v1917 = vunpack.c.l.b16 %v612
    %v1918 = vunpack.c.h.b16 %v612
    %v1919 = vunpack.c.l.b16 %v613
    %v1920 = vunpack.c.h.b16 %v613
    %v1921 = vunpack.c.l.b16 %v614
    %v1922 = vunpack.c.h.b16 %v614
    %v1923 = vunpack.c.l.b16 %v615
    %v1924 = vunpack.c.h.b16 %v615
    %v1925 = vunpack.c.l.b16 %v616
    %v1926 = vunpack.c.h.b16 %v616
    %v1927 = vunpack.c.l.b16 %v617
    %v1928 = vunpack.c.h.b16 %v617
    %v1929 = vunpack.c.l.b16 %v618
    %v1930 = vunpack.c.h.b16 %v618
    %v1931 = vunpack.c.l.b16 %v619
    %v1932 = vunpack.c.h.b16 %v619
    %v1933 = vunpack.c.l.b16 %v620
    %v1934 = vunpack.c.h.b16 %v620
    %v1935 = vunpack.c.l.b16 %v621
    %v1936 = vunpack.c.h.b16 %v621
    %v1937 = vunpack.c.l.b16 %v622
    %v1938 = vunpack.c.h.b16 %v622
    %v1939 = vunpack.c.l.b16 %v623
    %v1940 = vunpack.c.h.b16 %v623
    %v1941 = vunpack.c.l.b16 %v624
    %v1942 = vunpack.c.h.b16 %v624
    %v1943 = vunpack.c.l.b16 %v625
    %v1944 = vunpack.c.h.b16 %v625
    %v1945 = vunpack.c.l.b16 %v626
    %v1946 = vunpack.c.h.b16 %v626
    %v1947 = vunpack.c.l.b16 %v627
    %v1948 = vunpack.c.h.b16 %v627
    %v1949 = vunpack.c.l.b16 %v628
    %v1950 = vunpack.c.h.b16 %v628
    %v1951 = vunpack.c.l.b16 %v629
    %v1952 = vunpack.c.h.b16 %v629
    %v1953 = vunpack.c.l.b16 %v630
    %v1954 = vunpack.c.h.b16 %v630
    %v1955 = vunpack.c.l.b16 %v631
    %v1956 = vunpack.c.h.b16 %v631
    %v1957 = vunpack.c.l.b16 %v632
    %v1958 = vunpack.c.h.b16 %v632
    %v1959 = vunpack.c.l.b16 %v633
    %v1960 = vunpack.c.h.b16 %v633
    %v1961 = vunpack.c.l.b16 %v634
    %v1962 = vunpack.c.h.b16 %v634
    %v1963 = vunpack.c.l.b16 %v635
    %v1964 = vunpack.c.h.b16 %v635
    %v1965 = vunpack.c.l.b16 %v636
    %v1966 = vunpack.c.h.b16 %v636
    %v1967 = vunpack.c.l.b16 %v637
    %v1968 = vunpack.c.h.b16 %v637
    %v1969 = vunpack.c.l.b16 %v638
    %v1970 = vunpack.c.h.b16 %v638
    %v1971 = vunpack.c.l.b16 %v639
    %v1972 = vunpack.c.h.b16 %v639
    %v1973 = vunpack.c.l.b16 %v640
    %v1974 = vunpack.c.h.b16 %v640
    %v1975 = vunpack.c.l.b16 %v641
    %v1976 = vunpack.c.h.b16 %v641
    %v1977 = vunpack.c.l.b16 %v642
    %v1978 = vunpack.c.h.b16 %v642
    %v1979 = vunpack.c.l.b16 %v643
    %v1980 = vunpack.c.h.b16 %v643
    %v1981 = vunpack.c.l.b16 %v644
    %v1982 = vunpack.c.h.b16 %v644
    %v1983 = vunpack.c.l.b16 %v645
    %v1984 = vunpack.c.h.b16 %v645
    %v1985 = vunpack.c.l.b16 %v646
    %v1986 = vunpack.c.h.b16 %v646
    %v1987 = vunpack.c.l.b16 %v647
    %v1988 = vunpack.c.h.b16 %v647
    %v1989 = vunpack.c.l.b16 %v648
    %v1990 = vunpack.c.h.b16 %v648
    %v1991 = vunpack.c.l.b16 %v649
    %v1992 = vunpack.c.h.b16 %v649
    %v1993 = vunpack.c.l.b16 %v650
    %v1994 = vunpack.c.h.b16 %v650
    %v1995 = vunpack.c.l.b16 %v651
    %v1996 = vunpack.c.h.b16 %v651
    %v1997 = vunpack.c.l.b16 %v652
    %v1998 = vunpack.c.h.b16 %v652
    %v1999 = vunpack.c.l.b16 %v653
    %v2000 = vunpack.c.h.b16 %v653
    %v2001 = vunpack.c.l.b16 %v654
    %v2002 = vunpack.c.h.b16 %v654
    %v2003 = vunpack.c.l.b16 %v655
    %v2004 = vunpack.c.h.b16 %v655
    %v2005 = vunpack.c.l.b16 %v656
    %v2006 = vunpack.c.h.b16 %v656
    %v2007 = vunpack.c.l.b16 %v657
    %v2008 = vunpack.c.h.b16 %v657
    %v2009 = vunpack.c.l.b16 %v658
    %v2010 = vunpack.c.h.b16 %v658
    %v2011 = vunpack.c.l.b16 %v659
    %v2012 = vunpack.c.h.b16 %v659
    %v2013 = vunpack.c.l.b16 %v660
    %v2014 = vunpack.c.h.b16 %v660
    %v2015 = vunpack.c.l.b16 %v661
    %v2016 = vunpack.c.h.b16 %v661
    %v2017 = vunpack.c.l.b16 %v662
    %v2018 = vunpack.c.h.b16 %v662
    %v2019 = vunpack.c.l.b16 %v663
    %v2020 = vunpack.c.h.b16 %v663
    %v2021 = vunpack.c.l.b16 %v664
    %v2022 = vunpack.c.h.b16 %v664
    %v2023 = vunpack.c.l.b16 %v665
    %v2024 = vunpack.c.h.b16 %v665
    %v2025 = vunpack.c.l.b16 %v666
    %v2026 = vunpack.c.h.b16 %v666
    %v2027 = vunpack.c.l.b16 %v667
    %v2028 = vunpack.c.h.b16 %v667
    %v2029 = vunpack.c.l.b16 %v668
    %v2030 = vunpack.c.h.b16 %v668
    %v2031 = vunpack.c.l.b16 %v669
    %v2032 = vunpack.c.h.b16 %v669
    %v2033 = vunpack.c.l.b16 %v670
    %v2034 = vunpack.c.h.b16 %v670
    %v2035 = vunpack.c.l.b16 %v671
    %v2036 = vunpack.c.h.b16 %v671
    %v2037 = vunpack.c.l.b16 %v672
    %v2038 = vunpack.c.h.b16 %v672
    %v2039 = vunpack.c.l.b16 %v673
    %v2040 = vunpack.c.h.b16 %v673
    %v2041 = vunpack.c.l.b16 %v674
    %v2042 = vunpack.c.h.b16 %v674
    %v2043 = vunpack.c.l.b16 %v675
    %v2044 = vunpack.c.h.b16 %v675
    %v2045 = vunpack.c.l.b16 %v676
    %v2046 = vunpack.c.h.b16 %v676
    %v2047 = vunpack.c.l.b16 %v677
    %v2048 = vunpack.c.h.b16 %v677
    %v2049 = vunpack.c.l.b16 %v678
    %v2050 = vunpack.c.h.b16 %v678
    %v2051 = vunpack.c.l.b16 %v679
    %v2052 = vunpack.c.h.b16 %v679
    %v2053 = vunpack.c.l.b16 %v680
    %v2054 = vunpack.c.h.b16 %v680
    %v2055 = vunpack.c.l.b16 %v681
    %v2056 = vunpack.c.h.b16 %v681
    %v2057 = vunpack.c.l.b16 %v682
    %v2058 = vunpack.c.h.b16 %v682
    %v2059 = vunpack.c.l.b16 %v683
    %v2060 = vunpack.c.h.b16 %v683
    %v2061 = vunpack.c.l.b16 %v684
    %v2062 = vunpack.c.h.b16 %v684
    %v2063 = vunpack.c.l.b16 %v685
    %v2064 = vunpack.c.h.b16 %v685
    %v2065 = vunpack.c.l.b16 %v686
    %v2066 = vunpack.c.h.b16 %v686
    %v2067 = vunpack.c.l.b16 %v687
    %v2068 = vunpack.c.h.b16 %v687
    %v2069 = vunpack.c.l.b16 %v688
    %v2070 = vunpack.c.h.b16 %v688
    %v2071 = vunpack.c.l.b16 %v689
    %v2072 = vunpack.c.h.b16 %v689
    %v2073 = vunpack.c.l.b16 %v690
    %v2074 = vunpack.c.h.b16 %v690
    %v2075 = vunpack.c.l.b16 %v691
    %v2076 = vunpack.c.h.b16 %v691
    %v2077 = vunpack.c.l.b16 %v692
    %v2078 = vunpack.c.h.b16 %v692
    %v2079 = vunpack.c.l.b16 %v693
    %v2080 = vunpack.c.h.b16 %v693
    %v2081 = vunpack.c.l.b16 %v694
    %v2082 = vunpack.c.h.b16 %v694
    %v2083 = vunpack.c.l.b16 %v695
    %v2084 = vunpack.c.h.b16 %v695
    %v2085 = vunpack.c.l.b16 %v696
    %v2086 = vunpack.c.h.b16 %v696
    %v2087 = vunpack.c.l.b16 %v697
    %v2088 = vunpack.c.h.b16 %v697
    %v2089 = vunpack.c.l.b16 %v698
    %v2090 = vunpack.c.h.b16 %v698
    %v2091 = vunpack.c.l.b16 %v699
    %v2092 = vunpack.c.h.b16 %v699
    %v2093 = vunpack.c.l.b16 %v700
    %v2094 = vunpack.c.h.b16 %v700
    %v2095 = vunpack.c.l.b16 %v701
    %v2096 = vunpack.c.h.b16 %v701
    %v2097 = vunpack.c.l.b16 %v702
    %v2098 = vunpack.c.h.b16 %v702
    %v2099 = vunpack.c.l.b16 %v703
    %v2100 = vunpack.c.h.b16 %v703
    %v2101 = vunpack.c.l.b16 %v704
    %v2102 = vunpack.c.h.b16 %v704
    %v2103 = vunpack.c.l.b16 %v705
    %v2104 = vunpack.c.h.b16 %v705
    %v2105 = vunpack.c.l.b16 %v706
    %v2106 = vunpack.c.h.b16 %v706
    %v2107 = vunpack.c.l.b16 %v707
    %v2108 = vunpack.c.h.b16 %v707
    %v2109 = vunpack.c.l.b16 %v708
    %v2110 = vunpack.c.h.b16 %v708
    %v2111 = vunpack.c.l.b16 %v709
    %v2112 = vunpack.c.h.b16 %v709
    %v2113 = vunpack.c.l.b16 %v710
    %v2114 = vunpack.c.h.b16 %v710
    %v2115 = vunpack.c.l.b16 %v711
    %v2116 = vunpack.c.h.b16 %v711
    %v2117 = vunpack.c.l.b16 %v712
    %v2118 = vunpack.c.h.b16 %v712
    %v2119 = vunpack.c.l.b16 %v713
    %v2120 = vunpack.c.h.b16 %v713
    %v2121 = vunpack.c.l.b16 %v714
    %v2122 = vunpack.c.h.b16 %v714
    %v2123 = vunpack.c.l.b16 %v715
    %v2124 = vunpack.c.h.b16 %v715
    %v2125 = vunpack.c.l.b16 %v716
    %v2126 = vunpack.c.h.b16 %v716
    %v2127 = vunpack.c.l.b16 %v717
    %v2128 = vunpack.c.h.b16 %v717
    %v2129 = vunpack.c.l.b16 %v718
    %v2130 = vunpack.c.h.b16 %v718
    %v2131 = vunpack.c.l.b16 %v719
    %v2132 = vunpack.c.h.b16 %v719
    %v2133 = vunpack.c.l.b16 %v720
    %v2134 = vunpack.c.h.b16 %v720
    %v2135 = vunpack.c.l.b16 %v721
    %v2136 = vunpack.c.h.b16 %v721
    %v2137 = vunpack.c.l.b16 %v722
    %v2138 = vunpack.c.h.b16 %v722
    %v2139 = vunpack.c.l.b16 %v723
    %v2140 = vunpack.c.h.b16 %v723
    %v2141 = vunpack.c.l.b16 %v724
    %v2142 = vunpack.c.h.b16 %v724
    %v2143 = vunpack.c.l.b16 %v725
    %v2144 = vunpack.c.h.b16 %v725
    %v2145 = vunpack.c.l.b16 %v726
    %v2146 = vunpack.c.h.b16 %v726
    %v2147 = vunpack.c.l.b16 %v727
    %v2148 = vunpack.c.h.b16 %v727
    %v2149 = vunpack.c.l.b16 %v728
    %v2150 = vunpack.c.h.b16 %v728
    %v2151 = vunpack.c.l.b16 %v729
    %v2152 = vunpack.c.h.b16 %v729
    %v2153 = vunpack.c.l.b16 %v730
    %v2154 = vunpack.c.h.b16 %v730
    %v2155 = vunpack.c.l.b16 %v731
    %v2156 = vunpack.c.h.b16 %v731
    %v2157 = vunpack.c.l.b16 %v732
    %v2158 = vunpack.c.h.b16 %v732
    %v2159 = vunpack.c.l.b16 %v733
    %v2160 = vunpack.c.h.b16 %v733
    %v2161 = vunpack.c.l.b16 %v734
    %v2162 = vunpack.c.h.b16 %v734
    %v2163 = vunpack.c.l.b16 %v735
    %v2164 = vunpack.c.h.b16 %v735
    %v2165 = vunpack.c.l.b16 %v736
    %v2166 = vunpack.c.h.b16 %v736
    %v2167 = vunpack.c.l.b16 %v737
    %v2168 = vunpack.c.h.b16 %v737
    %v2169 = vunpack.c.l.b16 %v738
    %v2170 = vunpack.c.h.b16 %v738
    %v2171 = vunpack.c.l.b16 %v739
    %v2172 = vunpack.c.h.b16 %v739
    %v2173 = vunpack.c.l.b16 %v740
    %v2174 = vunpack.c.h.b16 %v740
    %v2175 = vunpack.c.l.b16 %v741
    %v2176 = vunpack.c.h.b16 %v741
    %v2177 = vunpack.c.l.b16 %v742
    %v2178 = vunpack.c.h.b16 %v742
    %v2179 = vunpack.c.l.b16 %v743
    %v2180 = vunpack.c.h.b16 %v743
    %v2181 = vunpack.c.l.b16 %v744
    %v2182 = vunpack.c.h.b16 %v744
    %v2183 = vunpack.c.l.b16 %v745
    %v2184 = vunpack.c.h.b16 %v745
    %v2185 = vunpack.c.l.b16 %v746
    %v2186 = vunpack.c.h.b16 %v746
    %v2187 = vunpack.c.l.b16 %v747
    %v2188 = vunpack.c.h.b16 %v747
    %v2189 = vunpack.c.l.b16 %v748
    %v2190 = vunpack.c.h.b16 %v748
    %v2191 = vunpack.c.l.b16 %v749
    %v2192 = vunpack.c.h.b16 %v749
    %v2193 = vunpack.c.l.b16 %v750
    %v2194 = vunpack.c.h.b16 %v750
    %v2195 = vunpack.c.l.b16 %v751
    %v2196 = vunpack.c.h.b16 %v751
    %v2197 = vunpack.c.l.b16 %v752
    %v2198 = vunpack.c.h.b16 %v752
    %v2199 = vunpack.c.l.b16 %v753
    %v2200 = vunpack.c.h.b16 %v753
    %v2201 = vunpack.c.l.b16 %v754
    %v2202 = vunpack.c.h.b16 %v754
    %v2203 = vunpack.c.l.b16 %v755
    %v2204 = vunpack.c.h.b16 %v755
    %v2205 = vunpack.c.l.b16 %v756
    %v2206 = vunpack.c.h.b16 %v756
    %v2207 = vunpack.c.l.b16 %v757
    %v2208 = vunpack.c.h.b16 %v757
    %v2209 = vunpack.c.l.b16 %v758
    %v2210 = vunpack.c.h.b16 %v758
    %v2211 = vunpack.c.l.b16 %v759
    %v2212 = vunpack.c.h.b16 %v759
    %v2213 = vunpack.c.l.b16 %v760
    %v2214 = vunpack.c.h.b16 %v760
    %v2215 = vunpack.c.l.b16 %v761
    %v2216 = vunpack.c.h.b16 %v761
    %v2217 = vunpack.c.l.b16 %v762
    %v2218 = vunpack.c.h.b16 %v762
    %v2219 = vunpack.c.l.b16 %v763
    %v2220 = vunpack.c.h.b16 %v763
    %v2221 = vunpack.c.l.b16 %v764
    %v2222 = vunpack.c.h.b16 %v764
    %v2223 = vunpack.c.l.b16 %v765
    %v2224 = vunpack.c.h.b16 %v765
    %v2225 = vunpack.c.l.b16 %v766
    %v2226 = vunpack.c.h.b16 %v766
    %v2227 = vunpack.c.l.b16 %v767
    %v2228 = vunpack.c.h.b16 %v767
    %v2229 = vunpack.c.l.b16 %v768
    %v2230 = vunpack.c.h.b16 %v768
    %v2231 = vunpack.c.l.b16 %v769
    %v2232 = vunpack.c.h.b16 %v769
    %v2233 = vunpack.c.l.b16 %v770
    %v2234 = vunpack.c.h.b16 %v770
    %v2235 = vunpack.c.l.b16 %v771
    %v2236 = vunpack.c.h.b16 %v771
    %v2237 = vunpack.c.l.b16 %v772
    %v2238 = vunpack.c.h.b16 %v772
    %v2239 = vunpack.c.l.b16 %v773
    %v2240 = vunpack.c.h.b16 %v773
    %v2241 = vunpack.c.l.b16 %v774
    %v2242 = vunpack.c.h.b16 %v774
    %v2243 = vunpack.c.l.b16 %v775
    %v2244 = vunpack.c.h.b16 %v775
    %v2245 = vunpack.c.l.b16 %v776
    %v2246 = vunpack.c.h.b16 %v776
    %v2247 = vunpack.c.l.b16 %v777
    %v2248 = vunpack.c.h.b16 %v777
    %v2249 = vunpack.c.l.b16 %v778
    %v2250 = vunpack.c.h.b16 %v778
    %v2251 = vunpack.c.l.b16 %v779
    %v2252 = vunpack.c.h.b16 %v779
    %v2253 = vunpack.c.l.b16 %v780
    %v2254 = vunpack.c.h.b16 %v780
    %v2255 = vunpack.c.l.b16 %v781
    %v2256 = vunpack.c.h.b16 %v781
    %v2257 = vunpack.c.l.b16 %v782
    %v2258 = vunpack.c.h.b16 %v782
    %v2259 = vunpack.c.l.b16 %v783
    %v2260 = vunpack.c.h.b16 %v783
    %v2261 = vunpack.c.l.b16 %v784
    %v2262 = vunpack.c.h.b16 %v784
    %v2263 = vunpack.c.l.b16 %v785
    %v2264 = vunpack.c.h.b16 %v785
    %v2265 = vunpack.c.l.b16 %v786
    %v2266 = vunpack.c.h.b16 %v786
    %v2267 = vunpack.c.l.b16 %v787
    %v2268 = vunpack.c.h.b16 %v787
    %v2269 = vunpack.c.l.b16 %v788
    %v2270 = vunpack.c.h.b16 %v788
    %v2271 = vunpack.c.l.b16 %v789
    %v2272 = vunpack.c.h.b16 %v789
    %v2273 = vunpack.c.l.b16 %v790
    %v2274 = vunpack.c.h.b16 %v790
    %v2275 = vunpack.c.l.b16 %v791
    %v2276 = vunpack.c.h.b16 %v791
    %v2277 = vunpack.c.l.b16 %v792
    %v2278 = vunpack.c.h.b16 %v792
    %v2279 = vunpack.c.l.b16 %v793
    %v2280 = vunpack.c.h.b16 %v793
    %v2281 = vunpack.c.l.b16 %v794
    %v2282 = vunpack.c.h.b16 %v794
    %v2283 = vunpack.c.l.b16 %v795
    %v2284 = vunpack.c.h.b16 %v795
    %v2285 = vunpack.c.l.b16 %v796
    %v2286 = vunpack.c.h.b16 %v796
    %v2287 = vunpack.c.l.b16 %v797
    %v2288 = vunpack.c.h.b16 %v797
    %v2289 = vunpack.c.l.b16 %v798
    %v2290 = vunpack.c.h.b16 %v798
    %v2291 = vunpack.c.l.b16 %v799
    %v2292 = vunpack.c.h.b16 %v799
    %v2293 = vunpack.c.l.b16 %v800
    %v2294 = vunpack.c.h.b16 %v800
    %v2295 = vunpack.c.l.b16 %v801
    %v2296 = vunpack.c.h.b16 %v801
    %v2297 = vunpack.c.l.b16 %v802
    %v2298 = vunpack.c.h.b16 %v802
    %v2299 = vunpack.c.l.b16 %v803
    %v2300 = vunpack.c.h.b16 %v803
    %v2301 = vunpack.c.l.b16 %v804
    %v2302 = vunpack.c.h.b16 %v804
    %v2303 = vunpack.c.l.b16 %v805
    %v2304 = vunpack.c.h.b16 %v805
    %v2305 = vunpack.c.l.b16 %v806
    %v2306 = vunpack.c.h.b16 %v806
    %v2307 = vunpack.c.l.b16 %v807
    %v2308 = vunpack.c.h.b16 %v807
    %v2309 = vunpack.c.l.b16 %v808
    %v2310 = vunpack.c.h.b16 %v808
    %v2311 = vunpack.c.l.b16 %v809
    %v2312 = vunpack.c.h.b16 %v809
    %v2313 = vunpack.c.l.b16 %v810
    %v2314 = vunpack.c.h.b16 %v810
    %v2315 = vunpack.c.l.b16 %v811
    %v2316 = vunpack.c.h.b16 %v811
    %v2317 = vunpack.c.l.b16 %v812
    %v2318 = vunpack.c.h.b16 %v812
    %v2319 = vunpack.c.l.b16 %v813
    %v2320 = vunpack.c.h.b16 %v813
    %v2321 = vunpack.c.l.b16 %v814
    %v2322 = vunpack.c.h.b16 %v814
    %v2323 = vunpack.c.l.b16 %v815
    %v2324 = vunpack.c.h.b16 %v815
    %v2325 = vunpack.c.l.b16 %v816
    %v2326 = vunpack.c.h.b16 %v816
    %v2327 = vunpack.c.l.b16 %v817
    %v2328 = vunpack.c.h.b16 %v817
    %v2329 = vunpack.c.l.b16 %v818
    %v2330 = vunpack.c.h.b16 %v818
    %v2331 = vunpack.c.l.b16 %v819
    %v2332 = vunpack.c.h.b16 %v819
    %v2333 = vunpack.c.l.b16 %v820
    %v2334 = vunpack.c.h.b16 %v820
    %v2335 = vunpack.c.l.b16 %v821
    %v2336 = vunpack.c.h.b16 %v821
    %v2337 = vunpack.c.l.b16 %v822
    %v2338 = vunpack.c.h.b16 %v822
    %v2339 = vunpack.c.l.b16 %v823
    %v2340 = vunpack.c.h.b16 %v823
    %v2341 = vunpack.c.l.b16 %v824
    %v2342 = vunpack.c.h.b16 %v824
    %v2343 = vunpack.c.l.b16 %v825
    %v2344 = vunpack.c.h.b16 %v825
    %v2345 = vunpack.c.l.b16 %v826
    %v2346 = vunpack.c.h.b16 %v826
    %v2347 = vunpack.c.l.b16 %v827
    %v2348 = vunpack.c.h.b16 %v827
    %v2349 = vunpack.c.l.b16 %v828
    %v2350 = vunpack.c.h.b16 %v828
    %v2351 = vunpack.c.l.b16 %v829
    %v2352 = vunpack.c.h.b16 %v829
    %v2353 = vunpack.c.l.b16 %v830
    %v2354 = vunpack.c.h.b16 %v830
    %v2355 = vunpack.c.l.b16 %v831
    %v2356 = vunpack.c.h.b16 %v831
    %v2357 = vunpack.c.l.b16 %v832
    %v2358 = vunpack.c.h.b16 %v832
    %v2359 = vunpack.c.l.b16 %v833
    %v2360 = vunpack.c.h.b16 %v833
    %v2361 = vunpack.c.l.b16 %v834
    %v2362 = vunpack.c.h.b16 %v834
    %v2363 = vunpack.c.l.b16 %v835
    %v2364 = vunpack.c.h.b16 %v835
    %v2365 = vunpack.c.l.b16 %v836
    %v2366 = vunpack.c.h.b16 %v836
    %v2367 = vunpack.c.l.b16 %v837
    %v2368 = vunpack.c.h.b16 %v837
    %v2369 = vunpack.c.l.b16 %v838
    %v2370 = vunpack.c.h.b16 %v838
    %v2371 = vunpack.c.l.b16 %v839
    %v2372 = vunpack.c.h.b16 %v839
    %v2373 = vunpack.c.l.b16 %v840
    %v2374 = vunpack.c.h.b16 %v840
    %v2375 = vunpack.c.l.b16 %v841
    %v2376 = vunpack.c.h.b16 %v841
    %v2377 = vunpack.c.l.b16 %v842
    %v2378 = vunpack.c.h.b16 %v842
    %v2379 = vpack.c.b16 %v1363, %v1355
    %v2380 = vpack.c.b16 %v1364, %v1356
    %v2381 = vpack.c.b16 %v1365, %v1357
    %v2382 = vpack.c.b16 %v1366, %v1358
    %v2383 = vpack.c.b16 %v1367, %v1359
    %v2384 = vpack.c.b16 %v1368, %v1360
    %v2385 = vpack.c.b16 %v1369, %v1361
    %v2386 = vpack.c.b16 %v1370, %v1362
    %v2387 = vpack.c.b16 %v1379, %v1371
    %v2388 = vpack.c.b16 %v1380, %v1372
    %v2389 = vpack.c.b16 %v1381, %v1373
    %v2390 = vpack.c.b16 %v1382, %v1374
    %v2391 = vpack.c.b16 %v1383, %v1375
    %v2392 = vpack.c.b16 %v1384, %v1376
    %v2393 = vpack.c.b16 %v1385, %v1377
    %v2394 = vpack.c.b16 %v1386, %v1378
    %v2395 = vpack.c.b16 %v1395, %v1387
    %v2396 = vpack.c.b16 %v1396, %v1388
    %v2397 = vpack.c.b16 %v1397, %v1389
    %v2398 = vpack.c.b16 %v1398, %v1390
    %v2399 = vpack.c.b16 %v1399, %v1391
    %v2400 = vpack.c.b16 %v1400, %v1392
    %v2401 = vpack.c.b16 %v1401, %v1393
    %v2402 = vpack.c.b16 %v1402, %v1394
    %v2403 = vpack.c.b16 %v1411, %v1403
    %v2404 = vpack.c.b16 %v1412, %v1404
    %v2405 = vpack.c.b16 %v1413, %v1405
    %v2406 = vpack.c.b16 %v1414, %v1406
    %v2407 = vpack.c.b16 %v1415, %v1407
    %v2408 = vpack.c.b16 %v1416, %v1408
    %v2409 = vpack.c.b16 %v1417, %v1409
    %v2410 = vpack.c.b16 %v1418, %v1410
    %v2411 = vpack.c.b16 %v1427, %v1419
    %v2412 = vpack.c.b16 %v1428, %v1420
    %v2413 = vpack.c.b16 %v1429, %v1421
    %v2414 = vpack.c.b16 %v1430, %v1422
    %v2415 = vpack.c.b16 %v1431, %v1423
    %v2416 = vpack.c.b16 %v1432, %v1424
    %v2417 = vpack.c.b16 %v1433, %v1425
    %v2418 = vpack.c.b16 %v1434, %v1426
    %v2419 = vpack.c.b16 %v1443, %v1435
    %v2420 = vpack.c.b16 %v1444, %v1436
    %v2421 = vpack.c.b16 %v1445, %v1437
    %v2422 = vpack.c.b16 %v1446, %v1438
    %v2423 = vpack.c.b16 %v1447, %v1439
    %v2424 = vpack.c.b16 %v1448, %v1440
    %v2425 = vpack.c.b16 %v1449, %v1441
    %v2426 = vpack.c.b16 %v1450, %v1442
    %v2427 = vpack.c.b16 %v1459, %v1451
    %v2428 = vpack.c.b16 %v1460, %v1452
    %v2429 = vpack.c.b16 %v1461, %v1453
    %v2430 = vpack.c.b16 %v1462, %v1454
    %v2431 = vpack.c.b16 %v1463, %v1455
    %v2432 = vpack.c.b16 %v1464, %v1456
    %v2433 = vpack.c.b16 %v1465, %v1457
    %v2434 = vpack.c.b16 %v1466, %v1458
    %v2435 = vpack.c.b16 %v1475, %v1467
    %v2436 = vpack.c.b16 %v1476, %v1468
    %v2437 = vpack.c.b16 %v1477, %v1469
    %v2438 = vpack.c.b16 %v1478, %v1470
    %v2439 = vpack.c.b16 %v1479, %v1471
    %v2440 = vpack.c.b16 %v1480, %v1472
    %v2441 = vpack.c.b16 %v1481, %v1473
    %v2442 = vpack.c.b16 %v1482, %v1474
    %v2443 = vpack.c.b16 %v1491, %v1483
    %v2444 = vpack.c.b16 %v1492, %v1484
    %v2445 = vpack.c.b16 %v1493, %v1485
    %v2446 = vpack.c.b16 %v1494, %v1486
    %v2447 = vpack.c.b16 %v1495, %v1487
    %v2448 = vpack.c.b16 %v1496, %v1488
    %v2449 = vpack.c.b16 %v1497, %v1489
    %v2450 = vpack.c.b16 %v1498, %v1490
    %v2451 = vpack.c.b16 %v1507, %v1499
    %v2452 = vpack.c.b16 %v1508, %v1500
    %v2453 = vpack.c.b16 %v1509, %v1501
    %v2454 = vpack.c.b16 %v1510, %v1502
    %v2455 = vpack.c.b16 %v1511, %v1503
    %v2456 = vpack.c.b16 %v1512, %v1504
    %v2457 = vpack.c.b16 %v1513, %v1505
    %v2458 = vpack.c.b16 %v1514, %v1506
    %v2459 = vpack.c.b16 %v1523, %v1515
    %v2460 = vpack.c.b16 %v1524, %v1516
    %v2461 = vpack.c.b16 %v1525, %v1517
    %v2462 = vpack.c.b16 %v1526, %v1518
    %v2463 = vpack.c.b16 %v1527, %v1519
    %v2464 = vpack.c.b16 %v1528, %v1520
    %v2465 = vpack.c.b16 %v1529, %v1521
    %v2466 = vpack.c.b16 %v1530, %v1522
    %v2467 = vpack.c.b16 %v1539, %v1531
    %v2468 = vpack.c.b16 %v1540, %v1532
    %v2469 = vpack.c.b16 %v1541, %v1533
    %v2470 = vpack.c.b16 %v1542, %v1534
    %v2471 = vpack.c.b16 %v1543, %v1535
    %v2472 = vpack.c.b16 %v1544, %v1536
    %v2473 = vpack.c.b16 %v1545, %v1537
    %v2474 = vpack.c.b16 %v1546, %v1538
    %v2475 = vpack.c.b16 %v1555, %v1547
    %v2476 = vpack.c.b16 %v1556, %v1548
    %v2477 = vpack.c.b16 %v1557, %v1549
    %v2478 = vpack.c.b16 %v1558, %v1550
    %v2479 = vpack.c.b16 %v1559, %v1551
    %v2480 = vpack.c.b16 %v1560, %v1552
    %v2481 = vpack.c.b16 %v1561, %v1553
    %v2482 = vpack.c.b16 %v1562, %v1554
    %v2483 = vpack.c.b16 %v1571, %v1563
    %v2484 = vpack.c.b16 %v1572, %v1564
    %v2485 = vpack.c.b16 %v1573, %v1565
    %v2486 = vpack.c.b16 %v1574, %v1566
    %v2487 = vpack.c.b16 %v1575, %v1567
    %v2488 = vpack.c.b16 %v1576, %v1568
    %v2489 = vpack.c.b16 %v1577, %v1569
    %v2490 = vpack.c.b16 %v1578, %v1570
    %v2491 = vpack.c.b16 %v1587, %v1579
    %v2492 = vpack.c.b16 %v1588, %v1580
    %v2493 = vpack.c.b16 %v1589, %v1581
    %v2494 = vpack.c.b16 %v1590, %v1582
    %v2495 = vpack.c.b16 %v1591, %v1583
    %v2496 = vpack.c.b16 %v1592, %v1584
    %v2497 = vpack.c.b16 %v1593, %v1585
    %v2498 = vpack.c.b16 %v1594, %v1586
    %v2499 = vpack.c.b16 %v1603, %v1595
    %v2500 = vpack.c.b16 %v1604, %v1596
    %v2501 = vpack.c.b16 %v1605, %v1597
    %v2502 = vpack.c.b16 %v1606, %v1598
    %v2503 = vpack.c.b16 %v1607, %v1599
    %v2504 = vpack.c.b16 %v1608, %v1600
    %v2505 = vpack.c.b16 %v1609, %v1601
    %v2506 = vpack.c.b16 %v1610, %v1602
    %v2507 = vpack.c.b16 %v1619, %v1611
    %v2508 = vpack.c.b16 %v1620, %v1612
    %v2509 = vpack.c.b16 %v1621, %v1613
    %v2510 = vpack.c.b16 %v1622, %v1614
    %v2511 = vpack.c.b16 %v1623, %v1615
    %v2512 = vpack.c.b16 %v1624, %v1616
    %v2513 = vpack.c.b16 %v1625, %v1617
    %v2514 = vpack.c.b16 %v1626, %v1618
    %v2515 = vpack.c.b16 %v1635, %v1627
    %v2516 = vpack.c.b16 %v1636, %v1628
    %v2517 = vpack.c.b16 %v1637, %v1629
    %v2518 = vpack.c.b16 %v1638, %v1630
    %v2519 = vpack.c.b16 %v1639, %v1631
    %v2520 = vpack.c.b16 %v1640, %v1632
    %v2521 = vpack.c.b16 %v1641, %v1633
    %v2522 = vpack.c.b16 %v1642, %v1634
    %v2523 = vpack.c.b16 %v1651, %v1643
    %v2524 = vpack.c.b16 %v1652, %v1644
    %v2525 = vpack.c.b16 %v1653, %v1645
    %v2526 = vpack.c.b16 %v1654, %v1646
    %v2527 = vpack.c.b16 %v1655, %v1647
    %v2528 = vpack.c.b16 %v1656, %v1648
    %v2529 = vpack.c.b16 %v1657, %v1649
    %v2530 = vpack.c.b16 %v1658, %v1650
    %v2531 = vpack.c.b16 %v1667, %v1659
    %v2532 = vpack.c.b16 %v1668, %v1660
    %v2533 = vpack.c.b16 %v1669, %v1661
    %v2534 = vpack.c.b16 %v1670, %v1662
    %v2535 = vpack.c.b16 %v1671, %v1663
    %v2536 = vpack.c.b16 %v1672, %v1664
    %v2537 = vpack.c.b16 %v1673, %v1665
    %v2538 = vpack.c.b16 %v1674, %v1666
    %v2539 = vpack.c.b16 %v1683, %v1675
    %v2540 = vpack.c.b16 %v1684, %v1676
    %v2541 = vpack.c.b16 %v1685, %v1677
    %v2542 = vpack.c.b16 %v1686, %v1678
    %v2543 = vpack.c.b16 %v1687, %v1679
    %v2544 = vpack.c.b16 %v1688, %v1680
    %v2545 = vpack.c.b16 %v1689, %v1681
    %v2546 = vpack.c.b16 %v1690, %v1682
    %v2547 = vpack.c.b16 %v1699, %v1691
    %v2548 = vpack.c.b16 %v1700, %v1692
    %v2549 = vpack.c.b16 %v1701, %v1693
    %v2550 = vpack.c.b16 %v1702, %v1694
    %v2551 = vpack.c.b16 %v1703, %v1695
    %v2552 = vpack.c.b16 %v1704, %v1696
    %v2553 = vpack.c.b16 %v1705, %v1697
    %v2554 = vpack.c.b16 %v1706, %v1698
    %v2555 = vpack.c.b16 %v1715, %v1707
    %v2556 = vpack.c.b16 %v1716, %v1708
    %v2557 = vpack.c.b16 %v1717, %v1709
    %v2558 = vpack.c.b16 %v1718, %v1710
    %v2559 = vpack.c.b16 %v1719, %v1711
    %v2560 = vpack.c.b16 %v1720, %v1712
    %v2561 = vpack.c.b16 %v1721, %v1713
    %v2562 = vpack.c.b16 %v1722, %v1714
    %v2563 = vpack.c.b16 %v1731, %v1723
    %v2564 = vpack.c.b16 %v1732, %v1724
    %v2565 = vpack.c.b16 %v1733, %v1725
    %v2566 = vpack.c.b16 %v1734, %v1726
    %v2567 = vpack.c.b16 %v1735, %v1727
    %v2568 = vpack.c.b16 %v1736, %v1728
    %v2569 = vpack.c.b16 %v1737, %v1729
    %v2570 = vpack.c.b16 %v1738, %v1730
    %v2571 = vpack.c.b16 %v1747, %v1739
    %v2572 = vpack.c.b16 %v1748, %v1740
    %v2573 = vpack.c.b16 %v1749, %v1741
    %v2574 = vpack.c.b16 %v1750, %v1742
    %v2575 = vpack.c.b16 %v1751, %v1743
    %v2576 = vpack.c.b16 %v1752, %v1744
    %v2577 = vpack.c.b16 %v1753, %v1745
    %v2578 = vpack.c.b16 %v1754, %v1746
    %v2579 = vpack.c.b16 %v1763, %v1755
    %v2580 = vpack.c.b16 %v1764, %v1756
    %v2581 = vpack.c.b16 %v1765, %v1757
    %v2582 = vpack.c.b16 %v1766, %v1758
    %v2583 = vpack.c.b16 %v1767, %v1759
    %v2584 = vpack.c.b16 %v1768, %v1760
    %v2585 = vpack.c.b16 %v1769, %v1761
    %v2586 = vpack.c.b16 %v1770, %v1762
    %v2587 = vpack.c.b16 %v1779, %v1771
    %v2588 = vpack.c.b16 %v1780, %v1772
    %v2589 = vpack.c.b16 %v1781, %v1773
    %v2590 = vpack.c.b16 %v1782, %v1774
    %v2591 = vpack.c.b16 %v1783, %v1775
    %v2592 = vpack.c.b16 %v1784, %v1776
    %v2593 = vpack.c.b16 %v1785, %v1777
    %v2594 = vpack.c.b16 %v1786, %v1778
    %v2595 = vpack.c.b16 %v1795, %v1787
    %v2596 = vpack.c.b16 %v1796, %v1788
    %v2597 = vpack.c.b16 %v1797, %v1789
    %v2598 = vpack.c.b16 %v1798, %v1790
    %v2599 = vpack.c.b16 %v1799, %v1791
    %v2600 = vpack.c.b16 %v1800, %v1792
    %v2601 = vpack.c.b16 %v1801, %v1793
    %v2602 = vpack.c.b16 %v1802, %v1794
    %v2603 = vpack.c.b16 %v1811, %v1803
    %v2604 = vpack.c.b16 %v1812, %v1804
    %v2605 = vpack.c.b16 %v1813, %v1805
    %v2606 = vpack.c.b16 %v1814, %v1806
    %v2607 = vpack.c.b16 %v1815, %v1807
    %v2608 = vpack.c.b16 %v1816, %v1808
    %v2609 = vpack.c.b16 %v1817, %v1809
    %v2610 = vpack.c.b16 %v1818, %v1810
    %v2611 = vpack.c.b16 %v1827, %v1819
    %v2612 = vpack.c.b16 %v1828, %v1820
    %v2613 = vpack.c.b16 %v1829, %v1821
    %v2614 = vpack.c.b16 %v1830, %v1822
    %v2615 = vpack.c.b16 %v1831, %v1823
    %v2616 = vpack.c.b16 %v1832, %v1824
    %v2617 = vpack.c.b16 %v1833, %v1825
    %v2618 = vpack.c.b16 %v1834, %v1826
    %v2619 = vpack.c.b16 %v1843, %v1835
    %v2620 = vpack.c.b16 %v1844, %v1836
    %v2621 = vpack.c.b16 %v1845, %v1837
    %v2622 = vpack.c.b16 %v1846, %v1838
    %v2623 = vpack.c.b16 %v1847, %v1839
    %v2624 = vpack.c.b16 %v1848, %v1840
    %v2625 = vpack.c.b16 %v1849, %v1841
    %v2626 = vpack.c.b16 %v1850, %v1842
    %v2627 = vpack.c.b16 %v1859, %v1851
    %v2628 = vpack.c.b16 %v1860, %v1852
    %v2629 = vpack.c.b16 %v1861, %v1853
    %v2630 = vpack.c.b16 %v1862, %v1854
    %v2631 = vpack.c.b16 %v1863, %v1855
    %v2632 = vpack.c.b16 %v1864, %v1856
    %v2633 = vpack.c.b16 %v1865, %v1857
    %v2634 = vpack.c.b16 %v1866, %v1858
    %v2635 = vpack.c.b16 %v1875, %v1867
    %v2636 = vpack.c.b16 %v1876, %v1868
    %v2637 = vpack.c.b16 %v1877, %v1869
    %v2638 = vpack.c.b16 %v1878, %v1870
    %v2639 = vpack.c.b16 %v1879, %v1871
    %v2640 = vpack.c.b16 %v1880, %v1872
    %v2641 = vpack.c.b16 %v1881, %v1873
    %v2642 = vpack.c.b16 %v1882, %v1874
    %v2643 = vpack.c.b16 %v1891, %v1883
    %v2644 = vpack.c.b16 %v1892, %v1884
    %v2645 = vpack.c.b16 %v1893, %v1885
    %v2646 = vpack.c.b16 %v1894, %v1886
    %v2647 = vpack.c.b16 %v1895, %v1887
    %v2648 = vpack.c.b16 %v1896, %v1888
    %v2649 = vpack.c.b16 %v1897, %v1889
    %v2650 = vpack.c.b16 %v1898, %v1890
    %v2651 = vpack.c.b16 %v1907, %v1899
    %v2652 = vpack.c.b16 %v1908, %v1900
    %v2653 = vpack.c.b16 %v1909, %v1901
    %v2654 = vpack.c.b16 %v1910, %v1902
    %v2655 = vpack.c.b16 %v1911, %v1903
    %v2656 = vpack.c.b16 %v1912, %v1904
    %v2657 = vpack.c.b16 %v1913, %v1905
    %v2658 = vpack.c.b16 %v1914, %v1906
    %v2659 = vpack.c.b16 %v1923, %v1915
    %v2660 = vpack.c.b16 %v1924, %v1916
    %v2661 = vpack.c.b16 %v1925, %v1917
    %v2662 = vpack.c.b16 %v1926, %v1918
    %v2663 = vpack.c.b16 %v1927, %v1919
    %v2664 = vpack.c.b16 %v1928, %v1920
    %v2665 = vpack.c.b16 %v1929, %v1921
    %v2666 = vpack.c.b16 %v1930, %v1922
    %v2667 = vpack.c.b16 %v1939, %v1931
    %v2668 = vpack.c.b16 %v1940, %v1932
    %v2669 = vpack.c.b16 %v1941, %v1933
    %v2670 = vpack.c.b16 %v1942, %v1934
    %v2671 = vpack.c.b16 %v1943, %v1935
    %v2672 = vpack.c.b16 %v1944, %v1936
    %v2673 = vpack.c.b16 %v1945, %v1937
    %v2674 = vpack.c.b16 %v1946, %v1938
    %v2675 = vpack.c.b16 %v1955, %v1947
    %v2676 = vpack.c.b16 %v1956, %v1948
    %v2677 = vpack.c.b16 %v1957, %v1949
    %v2678 = vpack.c.b16 %v1958, %v1950
    %v2679 = vpack.c.b16 %v1959, %v1951
    %v2680 = vpack.c.b16 %v1960, %v1952
    %v2681 = vpack.c.b16 %v1961, %v1953
    %v2682 = vpack.c.b16 %v1962, %v1954
    %v2683 = vpack.c.b16 %v1971, %v1963
    %v2684 = vpack.c.b16 %v1972, %v1964
    %v2685 = vpack.c.b16 %v1973, %v1965
    %v2686 = vpack.c.b16 %v1974, %v1966
    %v2687 = vpack.c.b16 %v1975, %v1967
    %v2688 = vpack.c.b16 %v1976, %v1968
    %v2689 = vpack.c.b16 %v1977, %v1969
    %v2690 = vpack.c.b16 %v1978, %v1970
    %v2691 = vpack.c.b16 %v1987, %v1979
    %v2692 = vpack.c.b16 %v1988, %v1980
    %v2693 = vpack.c.b16 %v1989, %v1981
    %v2694 = vpack.c.b16 %v1990, %v1982
    %v2695 = vpack.c.b16 %v1991, %v1983
    %v2696 = vpack.c.b16 %v1992, %v1984
    %v2697 = vpack.c.b16 %v1993, %v1985
    %v2698 = vpack.c.b16 %v1994, %v1986
    %v2699 = vpack.c.b16 %v2003, %v1995
    %v2700 = vpack.c.b16 %v2004, %v1996
    %v2701 = vpack.c.b16 %v2005, %v1997
    %v2702 = vpack.c.b16 %v2006, %v1998
    %v2703 = vpack.c.b16 %v2007, %v1999
    %v2704 = vpack.c.b16 %v2008, %v2000
    %v2705 = vpack.c.b16 %v2009, %v2001
    %v2706 = vpack.c.b16 %v2010, %v2002
    %v2707 = vpack.c.b16 %v2019, %v2011
    %v2708 = vpack.c.b16 %v2020, %v2012
    %v2709 = vpack.c.b16 %v2021, %v2013
    %v2710 = vpack.c.b16 %v2022, %v2014
    %v2711 = vpack.c.b16 %v2023, %v2015
    %v2712 = vpack.c.b16 %v2024, %v2016
    %v2713 = vpack.c.b16 %v2025, %v2017
    %v2714 = vpack.c.b16 %v2026, %v2018
    %v2715 = vpack.c.b16 %v2035, %v2027
    %v2716 = vpack.c.b16 %v2036, %v2028
    %v2717 = vpack.c.b16 %v2037, %v2029
    %v2718 = vpack.c.b16 %v2038, %v2030
    %v2719 = vpack.c.b16 %v2039, %v2031
    %v2720 = vpack.c.b16 %v2040, %v2032
    %v2721 = vpack.c.b16 %v2041, %v2033
    %v2722 = vpack.c.b16 %v2042, %v2034
    %v2723 = vpack.c.b16 %v2051, %v2043
    %v2724 = vpack.c.b16 %v2052, %v2044
    %v2725 = vpack.c.b16 %v2053, %v2045
    %v2726 = vpack.c.b16 %v2054, %v2046
    %v2727 = vpack.c.b16 %v2055, %v2047
    %v2728 = vpack.c.b16 %v2056, %v2048
    %v2729 = vpack.c.b16 %v2057, %v2049
    %v2730 = vpack.c.b16 %v2058, %v2050
    %v2731 = vpack.c.b16 %v2067, %v2059
    %v2732 = vpack.c.b16 %v2068, %v2060
    %v2733 = vpack.c.b16 %v2069, %v2061
    %v2734 = vpack.c.b16 %v2070, %v2062
    %v2735 = vpack.c.b16 %v2071, %v2063
    %v2736 = vpack.c.b16 %v2072, %v2064
    %v2737 = vpack.c.b16 %v2073, %v2065
    %v2738 = vpack.c.b16 %v2074, %v2066
    %v2739 = vpack.c.b16 %v2083, %v2075
    %v2740 = vpack.c.b16 %v2084, %v2076
    %v2741 = vpack.c.b16 %v2085, %v2077
    %v2742 = vpack.c.b16 %v2086, %v2078
    %v2743 = vpack.c.b16 %v2087, %v2079
    %v2744 = vpack.c.b16 %v2088, %v2080
    %v2745 = vpack.c.b16 %v2089, %v2081
    %v2746 = vpack.c.b16 %v2090, %v2082
    %v2747 = vpack.c.b16 %v2099, %v2091
    %v2748 = vpack.c.b16 %v2100, %v2092
    %v2749 = vpack.c.b16 %v2101, %v2093
    %v2750 = vpack.c.b16 %v2102, %v2094
    %v2751 = vpack.c.b16 %v2103, %v2095
    %v2752 = vpack.c.b16 %v2104, %v2096
    %v2753 = vpack.c.b16 %v2105, %v2097
    %v2754 = vpack.c.b16 %v2106, %v2098
    %v2755 = vpack.c.b16 %v2115, %v2107
    %v2756 = vpack.c.b16 %v2116, %v2108
    %v2757 = vpack.c.b16 %v2117, %v2109
    %v2758 = vpack.c.b16 %v2118, %v2110
    %v2759 = vpack.c.b16 %v2119, %v2111
    %v2760 = vpack.c.b16 %v2120, %v2112
    %v2761 = vpack.c.b16 %v2121, %v2113
    %v2762 = vpack.c.b16 %v2122, %v2114
    %v2763 = vpack.c.b16 %v2131, %v2123
    %v2764 = vpack.c.b16 %v2132, %v2124
    %v2765 = vpack.c.b16 %v2133, %v2125
    %v2766 = vpack.c.b16 %v2134, %v2126
    %v2767 = vpack.c.b16 %v2135, %v2127
    %v2768 = vpack.c.b16 %v2136, %v2128
    %v2769 = vpack.c.b16 %v2137, %v2129
    %v2770 = vpack.c.b16 %v2138, %v2130
    %v2771 = vpack.c.b16 %v2147, %v2139
    %v2772 = vpack.c.b16 %v2148, %v2140
    %v2773 = vpack.c.b16 %v2149, %v2141
    %v2774 = vpack.c.b16 %v2150, %v2142
    %v2775 = vpack.c.b16 %v2151, %v2143
    %v2776 = vpack.c.b16 %v2152, %v2144
    %v2777 = vpack.c.b16 %v2153, %v2145
    %v2778 = vpack.c.b16 %v2154, %v2146
    %v2779 = vpack.c.b16 %v2163, %v2155
    %v2780 = vpack.c.b16 %v2164, %v2156
    %v2781 = vpack.c.b16 %v2165, %v2157
    %v2782 = vpack.c.b16 %v2166, %v2158
    %v2783 = vpack.c.b16 %v2167, %v2159
    %v2784 = vpack.c.b16 %v2168, %v2160
    %v2785 = vpack.c.b16 %v2169, %v2161
    %v2786 = vpack.c.b16 %v2170, %v2162
    %v2787 = vpack.c.b16 %v2179, %v2171
    %v2788 = vpack.c.b16 %v2180, %v2172
    %v2789 = vpack.c.b16 %v2181, %v2173
    %v2790 = vpack.c.b16 %v2182, %v2174
    %v2791 = vpack.c.b16 %v2183, %v2175
    %v2792 = vpack.c.b16 %v2184, %v2176
    %v2793 = vpack.c.b16 %v2185, %v2177
    %v2794 = vpack.c.b16 %v2186, %v2178
    %v2795 = vpack.c.b16 %v2195, %v2187
    %v2796 = vpack.c.b16 %v2196, %v2188
    %v2797 = vpack.c.b16 %v2197, %v2189
    %v2798 = vpack.c.b16 %v2198, %v2190
    %v2799 = vpack.c.b16 %v2199, %v2191
    %v2800 = vpack.c.b16 %v2200, %v2192
    %v2801 = vpack.c.b16 %v2201, %v2193
    %v2802 = vpack.c.b16 %v2202, %v2194
    %v2803 = vpack.c.b16 %v2211, %v2203
    %v2804 = vpack.c.b16 %v2212, %v2204
    %v2805 = vpack.c.b16 %v2213, %v2205
    %v2806 = vpack.c.b16 %v2214, %v2206
    %v2807 = vpack.c.b16 %v2215, %v2207
    %v2808 = vpack.c.b16 %v2216, %v2208
    %v2809 = vpack.c.b16 %v2217, %v2209
    %v2810 = vpack.c.b16 %v2218, %v2210
    %v2811 = vpack.c.b16 %v2227, %v2219
    %v2812 = vpack.c.b16 %v2228, %v2220
    %v2813 = vpack.c.b16 %v2229, %v2221
    %v2814 = vpack.c.b16 %v2230, %v2222
    %v2815 = vpack.c.b16 %v2231, %v2223
    %v2816 = vpack.c.b16 %v2232, %v2224
    %v2817 = vpack.c.b16 %v2233, %v2225
    %v2818 = vpack.c.b16 %v2234, %v2226
    %v2819 = vpack.c.b16 %v2243, %v2235
    %v2820 = vpack.c.b16 %v2244, %v2236
    %v2821 = vpack.c.b16 %v2245, %v2237
    %v2822 = vpack.c.b16 %v2246, %v2238
    %v2823 = vpack.c.b16 %v2247, %v2239
    %v2824 = vpack.c.b16 %v2248, %v2240
    %v2825 = vpack.c.b16 %v2249, %v2241
    %v2826 = vpack.c.b16 %v2250, %v2242
    %v2827 = vpack.c.b16 %v2259, %v2251
    %v2828 = vpack.c.b16 %v2260, %v2252
    %v2829 = vpack.c.b16 %v2261, %v2253
    %v2830 = vpack.c.b16 %v2262, %v2254
    %v2831 = vpack.c.b16 %v2263, %v2255
    %v2832 = vpack.c.b16 %v2264, %v2256
    %v2833 = vpack.c.b16 %v2265, %v2257
    %v2834 = vpack.c.b16 %v2266, %v2258
    %v2835 = vpack.c.b16 %v2275, %v2267
    %v2836 = vpack.c.b16 %v2276, %v2268
    %v2837 = vpack.c.b16 %v2277, %v2269
    %v2838 = vpack.c.b16 %v2278, %v2270
    %v2839 = vpack.c.b16 %v2279, %v2271
    %v2840 = vpack.c.b16 %v2280, %v2272
    %v2841 = vpack.c.b16 %v2281, %v2273
    %v2842 = vpack.c.b16 %v2282, %v2274
    %v2843 = vpack.c.b16 %v2291, %v2283
    %v2844 = vpack.c.b16 %v2292, %v2284
    %v2845 = vpack.c.b16 %v2293, %v2285
    %v2846 = vpack.c.b16 %v2294, %v2286
    %v2847 = vpack.c.b16 %v2295, %v2287
    %v2848 = vpack.c.b16 %v2296, %v2288
    %v2849 = vpack.c.b16 %v2297, %v2289
    %v2850 = vpack.c.b16 %v2298, %v2290
    %v2851 = vpack.c.b16 %v2307, %v2299
    %v2852 = vpack.c.b16 %v2308, %v2300
    %v2853 = vpack.c.b16 %v2309, %v2301
    %v2854 = vpack.c.b16 %v2310, %v2302
    %v2855 = vpack.c.b16 %v2311, %v2303
    %v2856 = vpack.c.b16 %v2312, %v2304
    %v2857 = vpack.c.b16 %v2313, %v2305
    %v2858 = vpack.c.b16 %v2314, %v2306
    %v2859 = vpack.c.b16 %v2323, %v2315
    %v2860 = vpack.c.b16 %v2324, %v2316
    %v2861 = vpack.c.b16 %v2325, %v2317
    %v2862 = vpack.c.b16 %v2326, %v2318
    %v2863 = vpack.c.b16 %v2327, %v2319
    %v2864 = vpack.c.b16 %v2328, %v2320
    %v2865 = vpack.c.b16 %v2329, %v2321
    %v2866 = vpack.c.b16 %v2330, %v2322
    %v2867 = vpack.c.b16 %v2339, %v2331
    %v2868 = vpack.c.b16 %v2340, %v2332
    %v2869 = vpack.c.b16 %v2341, %v2333
    %v2870 = vpack.c.b16 %v2342, %v2334
    %v2871 = vpack.c.b16 %v2343, %v2335
    %v2872 = vpack.c.b16 %v2344, %v2336
    %v2873 = vpack.c.b16 %v2345, %v2337
    %v2874 = vpack.c.b16 %v2346, %v2338
    %v2875 = vpack.c.b16 %v2355, %v2347
    %v2876 = vpack.c.b16 %v2356, %v2348
    %v2877 = vpack.c.b16 %v2357, %v2349
    %v2878 = vpack.c.b16 %v2358, %v2350
    %v2879 = vpack.c.b16 %v2359, %v2351
    %v2880 = vpack.c.b16 %v2360, %v2352
    %v2881 = vpack.c.b16 %v2361, %v2353
    %v2882 = vpack.c.b16 %v2362, %v2354
    %v2883 = vpack.c.b16 %v2371, %v2363
    %v2884 = vpack.c.b16 %v2372, %v2364
    %v2885 = vpack.c.b16 %v2373, %v2365
    %v2886 = vpack.c.b16 %v2374, %v2366
    %v2887 = vpack.c.b16 %v2375, %v2367
    %v2888 = vpack.c.b16 %v2376, %v2368
    %v2889 = vpack.c.b16 %v2377, %v2369
    %v2890 = vpack.c.b16 %v2378, %v2370
    %3403 = vmatprep.subr.bf16.mxu0 %v2380
    %3404 = vmatpush1.bf16.msra.mxu0 %v2379
    %3405 = vmatprep.subr.bf16.mxu0 %v2388
    %3406 = vmatpush1.bf16.msra.mxu0 %v2387
    %3407 = vmatprep.subr.bf16.mxu0 %v2396
    %3408 = vmatpush1.bf16.msra.mxu0 %v2395
    %3409 = vmatprep.subr.bf16.mxu0 %v2404
    %3410 = vmatpush1.bf16.msra.mxu0 %v2403
    %3411 = vmatprep.subr.bf16.mxu0 %v2412
    %3412 = vmatpush1.bf16.msra.mxu0 %v2411
    %3413 = vmatprep.subr.bf16.mxu0 %v2420
    %3414 = vmatpush1.bf16.msra.mxu0 %v2419
    %3415 = vmatprep.subr.bf16.mxu0 %v2428
    %3416 = vmatpush1.bf16.msra.mxu0 %v2427
    %3417 = vmatprep.subr.bf16.mxu0 %v2436
    %3418 = vmatpush1.bf16.msra.mxu0 %v2435
    %3419 = vmatprep.subr.bf16.mxu0 %v2444
    %3420 = vmatpush1.bf16.msra.mxu0 %v2443
    %3421 = vmatprep.subr.bf16.mxu0 %v2452
    %3422 = vmatpush1.bf16.msra.mxu0 %v2451
    %3423 = vmatprep.subr.bf16.mxu0 %v2460
    %3424 = vmatpush1.bf16.msra.mxu0 %v2459
    %3425 = vmatprep.subr.bf16.mxu0 %v2468
    %3426 = vmatpush1.bf16.msra.mxu0 %v2467
    %3427 = vmatprep.subr.bf16.mxu0 %v2476
    %3428 = vmatpush1.bf16.msra.mxu0 %v2475
    %3429 = vmatprep.subr.bf16.mxu0 %v2484
    %3430 = vmatpush1.bf16.msra.mxu0 %v2483
    %3431 = vmatprep.subr.bf16.mxu0 %v2492
    %3432 = vmatpush1.bf16.msra.mxu0 %v2491
    %3433 = vmatprep.subr.bf16.mxu0 %v2500
    %3434 = vmatpush1.bf16.msra.mxu0 %v2499
    %3435 = vmatprep.mubr.bf16.mxu0 %v324
    %3436 = vmatmul.mubr.bf16.gmra.mrb[0].mxu0 %v323
    %v3437 = vpop.f32.mrb[0].mxu0
    %v3438 = vadd.f32 0.0, %v3437
    %v3439 = vpop.f32.mrb[0].mxu0
    %v3440 = vadd.f32 0.0, %v3439
    %v3441 = vpop.f32.mrb[0].mxu0
    %v3442 = vpop.f32.mrb[0].mxu0
    %3443 = vdwg.mxu0
    %3444 = vmatprep.subr.bf16.mxu0 %v2508
    %3445 = vmatpush1.bf16.msra.mxu0 %v2507
    %3446 = vmatprep.subr.bf16.mxu0 %v2516
    %3447 = vmatpush1.bf16.msra.mxu0 %v2515
    %3448 = vmatprep.subr.bf16.mxu0 %v2524
    %3449 = vmatpush1.bf16.msra.mxu0 %v2523
    %3450 = vmatprep.subr.bf16.mxu0 %v2532
    %3451 = vmatpush1.bf16.msra.mxu0 %v2531
    %3452 = vmatprep.subr.bf16.mxu0 %v2540
    %3453 = vmatpush1.bf16.msra.mxu0 %v2539
    %3454 = vmatprep.subr.bf16.mxu0 %v2548
    %3455 = vmatpush1.bf16.msra.mxu0 %v2547
    %3456 = vmatprep.subr.bf16.mxu0 %v2556
    %3457 = vmatpush1.bf16.msra.mxu0 %v2555
    %3458 = vmatprep.subr.bf16.mxu0 %v2564
    %3459 = vmatpush1.bf16.msra.mxu0 %v2563
    %3460 = vmatprep.subr.bf16.mxu0 %v2572
    %3461 = vmatpush1.bf16.msra.mxu0 %v2571
    %3462 = vmatprep.subr.bf16.mxu0 %v2580
    %3463 = vmatpush1.bf16.msra.mxu0 %v2579
    %3464 = vmatprep.subr.bf16.mxu0 %v2588
    %3465 = vmatpush1.bf16.msra.mxu0 %v2587
    %3466 = vmatprep.subr.bf16.mxu0 %v2596
    %3467 = vmatpush1.bf16.msra.mxu0 %v2595
    %3468 = vmatprep.subr.bf16.mxu0 %v2604
    %3469 = vmatpush1.bf16.msra.mxu0 %v2603
    %3470 = vmatprep.subr.bf16.mxu0 %v2612
    %3471 = vmatpush1.bf16.msra.mxu0 %v2611
    %3472 = vmatprep.subr.bf16.mxu0 %v2620
    %3473 = vmatpush1.bf16.msra.mxu0 %v2619
    %3474 = vmatprep.subr.bf16.mxu0 %v2628
    %3475 = vmatpush1.bf16.msra.mxu0 %v2627
    %3476 = vmatprep.mubr.bf16.mxu0 %v326
    %3477 = vmatmul.mubr.bf16.gmra.mrb[0].mxu0 %v325
    %v3478 = vpop.f32.mrb[0].mxu0
    %v3479 = vadd.f32 %v3438, %v3478
    %v3480 = vpop.f32.mrb[0].mxu0
    %v3481 = vadd.f32 %v3440, %v3480
    %v3482 = vpop.f32.mrb[0].mxu0
    %v3483 = vpop.f32.mrb[0].mxu0
    %3484 = vdwg.mxu0
    %3485 = vmatprep.subr.bf16.mxu0 %v2636
    %3486 = vmatpush1.bf16.msra.mxu0 %v2635
    %3487 = vmatprep.subr.bf16.mxu0 %v2644
    %3488 = vmatpush1.bf16.msra.mxu0 %v2643
    %3489 = vmatprep.subr.bf16.mxu0 %v2652
    %3490 = vmatpush1.bf16.msra.mxu0 %v2651
    %3491 = vmatprep.subr.bf16.mxu0 %v2660
    %3492 = vmatpush1.bf16.msra.mxu0 %v2659
    %3493 = vmatprep.subr.bf16.mxu0 %v2668
    %3494 = vmatpush1.bf16.msra.mxu0 %v2667
    %3495 = vmatprep.subr.bf16.mxu0 %v2676
    %3496 = vmatpush1.bf16.msra.mxu0 %v2675
    %3497 = vmatprep.subr.bf16.mxu0 %v2684
    %3498 = vmatpush1.bf16.msra.mxu0 %v2683
    %3499 = vmatprep.subr.bf16.mxu0 %v2692
    %3500 = vmatpush1.bf16.msra.mxu0 %v2691
    %3501 = vmatprep.subr.bf16.mxu0 %v2700
    %3502 = vmatpush1.bf16.msra.mxu0 %v2699
    %3503 = vmatprep.subr.bf16.mxu0 %v2708
    %3504 = vmatpush1.bf16.msra.mxu0 %v2707
    %3505 = vmatprep.subr.bf16.mxu0 %v2716
    %3506 = vmatpush1.bf16.msra.mxu0 %v2715
    %3507 = vmatprep.subr.bf16.mxu0 %v2724
    %3508 = vmatpush1.bf16.msra.mxu0 %v2723
    %3509 = vmatprep.subr.bf16.mxu0 %v2732
    %3510 = vmatpush1.bf16.msra.mxu0 %v2731
    %3511 = vmatprep.subr.bf16.mxu0 %v2740
    %3512 = vmatpush1.bf16.msra.mxu0 %v2739
    %3513 = vmatprep.subr.bf16.mxu0 %v2748
    %3514 = vmatpush1.bf16.msra.mxu0 %v2747
    %3515 = vmatprep.subr.bf16.mxu0 %v2756
    %3516 = vmatpush1.bf16.msra.mxu0 %v2755
    %3517 = vmatprep.mubr.bf16.mxu0 %v328
    %3518 = vmatmul.mubr.bf16.gmra.mrb[0].mxu0 %v327
    %v3519 = vpop.f32.mrb[0].mxu0
    %v3520 = vadd.f32 %v3479, %v3519
    %v3521 = vpop.f32.mrb[0].mxu0
    %v3522 = vadd.f32 %v3481, %v3521
    %v3523 = vpop.f32.mrb[0].mxu0
    %v3524 = vpop.f32.mrb[0].mxu0
    %3525 = vdwg.mxu0
    %3526 = vmatprep.subr.bf16.mxu0 %v2764
    %3527 = vmatpush1.bf16.msra.mxu0 %v2763
    %3528 = vmatprep.subr.bf16.mxu0 %v2772
    %3529 = vmatpush1.bf16.msra.mxu0 %v2771
    %3530 = vmatprep.subr.bf16.mxu0 %v2780
    %3531 = vmatpush1.bf16.msra.mxu0 %v2779
    %3532 = vmatprep.subr.bf16.mxu0 %v2788
    %3533 = vmatpush1.bf16.msra.mxu0 %v2787
    %3534 = vmatprep.subr.bf16.mxu0 %v2796
    %3535 = vmatpush1.bf16.msra.mxu0 %v2795
    %3536 = vmatprep.subr.bf16.mxu0 %v2804
    %3537 = vmatpush1.bf16.msra.mxu0 %v2803
    %3538 = vmatprep.subr.bf16.mxu0 %v2812
    %3539 = vmatpush1.bf16.msra.mxu0 %v2811
    %3540 = vmatprep.subr.bf16.mxu0 %v2820
    %3541 = vmatpush1.bf16.msra.mxu0 %v2819
    %3542 = vmatprep.subr.bf16.mxu0 %v2828
    %3543 = vmatpush1.bf16.msra.mxu0 %v2827
    %3544 = vmatprep.subr.bf16.mxu0 %v2836
    %3545 = vmatpush1.bf16.msra.mxu0 %v2835
    %3546 = vmatprep.subr.bf16.mxu0 %v2844
    %3547 = vmatpush1.bf16.msra.mxu0 %v2843
    %3548 = vmatprep.subr.bf16.mxu0 %v2852
    %3549 = vmatpush1.bf16.msra.mxu0 %v2851
    %3550 = vmatprep.subr.bf16.mxu0 %v2860
    %3551 = vmatpush1.bf16.msra.mxu0 %v2859
    %3552 = vmatprep.subr.bf16.mxu0 %v2868
    %3553 = vmatpush1.bf16.msra.mxu0 %v2867
    %3554 = vmatprep.subr.bf16.mxu0 %v2876
    %3555 = vmatpush1.bf16.msra.mxu0 %v2875
    %3556 = vmatprep.subr.bf16.mxu0 %v2884
    %3557 = vmatpush1.bf16.msra.mxu0 %v2883
    %3558 = vmatprep.mubr.bf16.mxu0 %v330
    %3559 = vmatmul.mubr.bf16.gmra.mrb[0].mxu0 %v329
    %v3560 = vpop.f32.mrb[0].mxu0
    %v3561 = vadd.f32 %v3520, %v3560
    %v3562 = vpop.f32.mrb[0].mxu0
    %v3563 = vadd.f32 %v3522, %v3562
    %v3564 = vpop.f32.mrb[0].mxu0
    %v3565 = vpop.f32.mrb[0].mxu0
    %3566 = vdwg.mxu0
    %3567 = vmatprep.subr.bf16.mxu0 %v2382
    %3568 = vmatpush1.bf16.msra.mxu0 %v2381
    %3569 = vmatprep.subr.bf16.mxu0 %v2390
    %3570 = vmatpush1.bf16.msra.mxu0 %v2389
    %3571 = vmatprep.subr.bf16.mxu0 %v2398
    %3572 = vmatpush1.bf16.msra.mxu0 %v2397
    %3573 = vmatprep.subr.bf16.mxu0 %v2406
    %3574 = vmatpush1.bf16.msra.mxu0 %v2405
    %3575 = vmatprep.subr.bf16.mxu0 %v2414
    %3576 = vmatpush1.bf16.msra.mxu0 %v2413
    %3577 = vmatprep.subr.bf16.mxu0 %v2422
    %3578 = vmatpush1.bf16.msra.mxu0 %v2421
    %3579 = vmatprep.subr.bf16.mxu0 %v2430
    %3580 = vmatpush1.bf16.msra.mxu0 %v2429
    %3581 = vmatprep.subr.bf16.mxu0 %v2438
    %3582 = vmatpush1.bf16.msra.mxu0 %v2437
    %3583 = vmatprep.subr.bf16.mxu0 %v2446
    %3584 = vmatpush1.bf16.msra.mxu0 %v2445
    %3585 = vmatprep.subr.bf16.mxu0 %v2454
    %3586 = vmatpush1.bf16.msra.mxu0 %v2453
    %3587 = vmatprep.subr.bf16.mxu0 %v2462
    %3588 = vmatpush1.bf16.msra.mxu0 %v2461
    %3589 = vmatprep.subr.bf16.mxu0 %v2470
    %3590 = vmatpush1.bf16.msra.mxu0 %v2469
    %3591 = vmatprep.subr.bf16.mxu0 %v2478
    %3592 = vmatpush1.bf16.msra.mxu0 %v2477
    %3593 = vmatprep.subr.bf16.mxu0 %v2486
    %3594 = vmatpush1.bf16.msra.mxu0 %v2485
    %3595 = vmatprep.subr.bf16.mxu0 %v2494
    %3596 = vmatpush1.bf16.msra.mxu0 %v2493
    %3597 = vmatprep.subr.bf16.mxu0 %v2502
    %3598 = vmatpush1.bf16.msra.mxu0 %v2501
    %3599 = vmatprep.mubr.bf16.mxu0 %v324
    %3600 = vmatmul.mubr.bf16.gmra.mrb[0].mxu0 %v323
    %v3601 = vpop.f32.mrb[0].mxu0
    %v3602 = vadd.f32 0.0, %v3601
    %v3603 = vpop.f32.mrb[0].mxu0
    %v3604 = vadd.f32 0.0, %v3603
    %v3605 = vpop.f32.mrb[0].mxu0
    %v3606 = vpop.f32.mrb[0].mxu0
    %3607 = vdwg.mxu0
    %3608 = vmatprep.subr.bf16.mxu0 %v2510
    %3609 = vmatpush1.bf16.msra.mxu0 %v2509
    %3610 = vmatprep.subr.bf16.mxu0 %v2518
    %3611 = vmatpush1.bf16.msra.mxu0 %v2517
    %3612 = vmatprep.subr.bf16.mxu0 %v2526
    %3613 = vmatpush1.bf16.msra.mxu0 %v2525
    %3614 = vmatprep.subr.bf16.mxu0 %v2534
    %3615 = vmatpush1.bf16.msra.mxu0 %v2533
    %3616 = vmatprep.subr.bf16.mxu0 %v2542
    %3617 = vmatpush1.bf16.msra.mxu0 %v2541
    %3618 = vmatprep.subr.bf16.mxu0 %v2550
    %3619 = vmatpush1.bf16.msra.mxu0 %v2549
    %3620 = vmatprep.subr.bf16.mxu0 %v2558
    %3621 = vmatpush1.bf16.msra.mxu0 %v2557
    %3622 = vmatprep.subr.bf16.mxu0 %v2566
    %3623 = vmatpush1.bf16.msra.mxu0 %v2565
    %3624 = vmatprep.subr.bf16.mxu0 %v2574
    %3625 = vmatpush1.bf16.msra.mxu0 %v2573
    %3626 = vmatprep.subr.bf16.mxu0 %v2582
    %3627 = vmatpush1.bf16.msra.mxu0 %v2581
    %3628 = vmatprep.subr.bf16.mxu0 %v2590
    %3629 = vmatpush1.bf16.msra.mxu0 %v2589
    %3630 = vmatprep.subr.bf16.mxu0 %v2598
    %3631 = vmatpush1.bf16.msra.mxu0 %v2597
    %3632 = vmatprep.subr.bf16.mxu0 %v2606
    %3633 = vmatpush1.bf16.msra.mxu0 %v2605
    %3634 = vmatprep.subr.bf16.mxu0 %v2614
    %3635 = vmatpush1.bf16.msra.mxu0 %v2613
    %3636 = vmatprep.subr.bf16.mxu0 %v2622
    %3637 = vmatpush1.bf16.msra.mxu0 %v2621
    %3638 = vmatprep.subr.bf16.mxu0 %v2630
    %3639 = vmatpush1.bf16.msra.mxu0 %v2629
    %3640 = vmatprep.mubr.bf16.mxu0 %v326
    %3641 = vmatmul.mubr.bf16.gmra.mrb[0].mxu0 %v325
    %v3642 = vpop.f32.mrb[0].mxu0
    %v3643 = vadd.f32 %v3602, %v3642
    %v3644 = vpop.f32.mrb[0].mxu0
    %v3645 = vadd.f32 %v3604, %v3644
    %v3646 = vpop.f32.mrb[0].mxu0
    %v3647 = vpop.f32.mrb[0].mxu0
    %3648 = vdwg.mxu0
    %3649 = vmatprep.subr.bf16.mxu0 %v2638
    %3650 = vmatpush1.bf16.msra.mxu0 %v2637
    %3651 = vmatprep.subr.bf16.mxu0 %v2646
    %3652 = vmatpush1.bf16.msra.mxu0 %v2645
    %3653 = vmatprep.subr.bf16.mxu0 %v2654
    %3654 = vmatpush1.bf16.msra.mxu0 %v2653
    %3655 = vmatprep.subr.bf16.mxu0 %v2662
    %3656 = vmatpush1.bf16.msra.mxu0 %v2661
    %3657 = vmatprep.subr.bf16.mxu0 %v2670
    %3658 = vmatpush1.bf16.msra.mxu0 %v2669
    %3659 = vmatprep.subr.bf16.mxu0 %v2678
    %3660 = vmatpush1.bf16.msra.mxu0 %v2677
    %3661 = vmatprep.subr.bf16.mxu0 %v2686
    %3662 = vmatpush1.bf16.msra.mxu0 %v2685
    %3663 = vmatprep.subr.bf16.mxu0 %v2694
    %3664 = vmatpush1.bf16.msra.mxu0 %v2693
    %3665 = vmatprep.subr.bf16.mxu0 %v2702
    %3666 = vmatpush1.bf16.msra.mxu0 %v2701
    %3667 = vmatprep.subr.bf16.mxu0 %v2710
    %3668 = vmatpush1.bf16.msra.mxu0 %v2709
    %3669 = vmatprep.subr.bf16.mxu0 %v2718
    %3670 = vmatpush1.bf16.msra.mxu0 %v2717
    %3671 = vmatprep.subr.bf16.mxu0 %v2726
    %3672 = vmatpush1.bf16.msra.mxu0 %v2725
    %3673 = vmatprep.subr.bf16.mxu0 %v2734
    %3674 = vmatpush1.bf16.msra.mxu0 %v2733
    %3675 = vmatprep.subr.bf16.mxu0 %v2742
    %3676 = vmatpush1.bf16.msra.mxu0 %v2741
    %3677 = vmatprep.subr.bf16.mxu0 %v2750
    %3678 = vmatpush1.bf16.msra.mxu0 %v2749
    %3679 = vmatprep.subr.bf16.mxu0 %v2758
    %3680 = vmatpush1.bf16.msra.mxu0 %v2757
    %3681 = vmatprep.mubr.bf16.mxu0 %v328
    %3682 = vmatmul.mubr.bf16.gmra.mrb[0].mxu0 %v327
    %v3683 = vpop.f32.mrb[0].mxu0
    %v3684 = vadd.f32 %v3643, %v3683
    %v3685 = vpop.f32.mrb[0].mxu0
    %v3686 = vadd.f32 %v3645, %v3685
    %v3687 = vpop.f32.mrb[0].mxu0
    %v3688 = vpop.f32.mrb[0].mxu0
    %3689 = vdwg.mxu0
    %3690 = vmatprep.subr.bf16.mxu0 %v2766
    %3691 = vmatpush1.bf16.msra.mxu0 %v2765
    %3692 = vmatprep.subr.bf16.mxu0 %v2774
    %3693 = vmatpush1.bf16.msra.mxu0 %v2773
    %3694 = vmatprep.subr.bf16.mxu0 %v2782
    %3695 = vmatpush1.bf16.msra.mxu0 %v2781
    %3696 = vmatprep.subr.bf16.mxu0 %v2790
    %3697 = vmatpush1.bf16.msra.mxu0 %v2789
    %3698 = vmatprep.subr.bf16.mxu0 %v2798
    %3699 = vmatpush1.bf16.msra.mxu0 %v2797
    %3700 = vmatprep.subr.bf16.mxu0 %v2806
    %3701 = vmatpush1.bf16.msra.mxu0 %v2805
    %3702 = vmatprep.subr.bf16.mxu0 %v2814
    %3703 = vmatpush1.bf16.msra.mxu0 %v2813
    %3704 = vmatprep.subr.bf16.mxu0 %v2822
    %3705 = vmatpush1.bf16.msra.mxu0 %v2821
    %3706 = vmatprep.subr.bf16.mxu0 %v2830
    %3707 = vmatpush1.bf16.msra.mxu0 %v2829
    %3708 = vmatprep.subr.bf16.mxu0 %v2838
    %3709 = vmatpush1.bf16.msra.mxu0 %v2837
    %3710 = vmatprep.subr.bf16.mxu0 %v2846
    %3711 = vmatpush1.bf16.msra.mxu0 %v2845
    %3712 = vmatprep.subr.bf16.mxu0 %v2854
    %3713 = vmatpush1.bf16.msra.mxu0 %v2853
    %3714 = vmatprep.subr.bf16.mxu0 %v2862
    %3715 = vmatpush1.bf16.msra.mxu0 %v2861
    %3716 = vmatprep.subr.bf16.mxu0 %v2870
    %3717 = vmatpush1.bf16.msra.mxu0 %v2869
    %3718 = vmatprep.subr.bf16.mxu0 %v2878
    %3719 = vmatpush1.bf16.msra.mxu0 %v2877
    %3720 = vmatprep.subr.bf16.mxu0 %v2886
    %3721 = vmatpush1.bf16.msra.mxu0 %v2885
    %3722 = vmatprep.mubr.bf16.mxu0 %v330
    %3723 = vmatmul.mubr.bf16.gmra.mrb[0].mxu0 %v329
    %v3724 = vpop.f32.mrb[0].mxu0
    %v3725 = vadd.f32 %v3684, %v3724
    %v3726 = vpop.f32.mrb[0].mxu0
    %v3727 = vadd.f32 %v3686, %v3726
    %v3728 = vpop.f32.mrb[0].mxu0
    %v3729 = vpop.f32.mrb[0].mxu0
    %3730 = vdwg.mxu0
    %3731 = vmatprep.subr.bf16.mxu0 %v2384
    %3732 = vmatpush1.bf16.msra.mxu0 %v2383
    %3733 = vmatprep.subr.bf16.mxu0 %v2392
    %3734 = vmatpush1.bf16.msra.mxu0 %v2391
    %3735 = vmatprep.subr.bf16.mxu0 %v2400
    %3736 = vmatpush1.bf16.msra.mxu0 %v2399
    %3737 = vmatprep.subr.bf16.mxu0 %v2408
    %3738 = vmatpush1.bf16.msra.mxu0 %v2407
    %3739 = vmatprep.subr.bf16.mxu0 %v2416
    %3740 = vmatpush1.bf16.msra.mxu0 %v2415
    %3741 = vmatprep.subr.bf16.mxu0 %v2424
    %3742 = vmatpush1.bf16.msra.mxu0 %v2423
    %3743 = vmatprep.subr.bf16.mxu0 %v2432
    %3744 = vmatpush1.bf16.msra.mxu0 %v2431
    %3745 = vmatprep.subr.bf16.mxu0 %v2440
    %3746 = vmatpush1.bf16.msra.mxu0 %v2439
    %3747 = vmatprep.subr.bf16.mxu0 %v2448
    %3748 = vmatpush1.bf16.msra.mxu0 %v2447
    %3749 = vmatprep.subr.bf16.mxu0 %v2456
    %3750 = vmatpush1.bf16.msra.mxu0 %v2455
    %3751 = vmatprep.subr.bf16.mxu0 %v2464
    %3752 = vmatpush1.bf16.msra.mxu0 %v2463
    %3753 = vmatprep.subr.bf16.mxu0 %v2472
    %3754 = vmatpush1.bf16.msra.mxu0 %v2471
    %3755 = vmatprep.subr.bf16.mxu0 %v2480
    %3756 = vmatpush1.bf16.msra.mxu0 %v2479
    %3757 = vmatprep.subr.bf16.mxu0 %v2488
    %3758 = vmatpush1.bf16.msra.mxu0 %v2487
    %3759 = vmatprep.subr.bf16.mxu0 %v2496
    %3760 = vmatpush1.bf16.msra.mxu0 %v2495
    %3761 = vmatprep.subr.bf16.mxu0 %v2504
    %3762 = vmatpush1.bf16.msra.mxu0 %v2503
    %3763 = vmatprep.mubr.bf16.mxu0 %v324
    %3764 = vmatmul.mubr.bf16.gmra.mrb[0].mxu0 %v323
    %v3765 = vpop.f32.mrb[0].mxu0
    %v3766 = vadd.f32 0.0, %v3765
    %v3767 = vpop.f32.mrb[0].mxu0
    %v3768 = vadd.f32 0.0, %v3767
    %v3769 = vpop.f32.mrb[0].mxu0
    %v3770 = vpop.f32.mrb[0].mxu0
    %3771 = vdwg.mxu0
    %3772 = vmatprep.subr.bf16.mxu0 %v2512
    %3773 = vmatpush1.bf16.msra.mxu0 %v2511
    %3774 = vmatprep.subr.bf16.mxu0 %v2520
    %3775 = vmatpush1.bf16.msra.mxu0 %v2519
    %3776 = vmatprep.subr.bf16.mxu0 %v2528
    %3777 = vmatpush1.bf16.msra.mxu0 %v2527
    %3778 = vmatprep.subr.bf16.mxu0 %v2536
    %3779 = vmatpush1.bf16.msra.mxu0 %v2535
    %3780 = vmatprep.subr.bf16.mxu0 %v2544
    %3781 = vmatpush1.bf16.msra.mxu0 %v2543
    %3782 = vmatprep.subr.bf16.mxu0 %v2552
    %3783 = vmatpush1.bf16.msra.mxu0 %v2551
    %3784 = vmatprep.subr.bf16.mxu0 %v2560
    %3785 = vmatpush1.bf16.msra.mxu0 %v2559
    %3786 = vmatprep.subr.bf16.mxu0 %v2568
    %3787 = vmatpush1.bf16.msra.mxu0 %v2567
    %3788 = vmatprep.subr.bf16.mxu0 %v2576
    %3789 = vmatpush1.bf16.msra.mxu0 %v2575
    %3790 = vmatprep.subr.bf16.mxu0 %v2584
    %3791 = vmatpush1.bf16.msra.mxu0 %v2583
    %3792 = vmatprep.subr.bf16.mxu0 %v2592
    %3793 = vmatpush1.bf16.msra.mxu0 %v2591
    %3794 = vmatprep.subr.bf16.mxu0 %v2600
    %3795 = vmatpush1.bf16.msra.mxu0 %v2599
    %3796 = vmatprep.subr.bf16.mxu0 %v2608
    %3797 = vmatpush1.bf16.msra.mxu0 %v2607
    %3798 = vmatprep.subr.bf16.mxu0 %v2616
    %3799 = vmatpush1.bf16.msra.mxu0 %v2615
    %3800 = vmatprep.subr.bf16.mxu0 %v2624
    %3801 = vmatpush1.bf16.msra.mxu0 %v2623
    %3802 = vmatprep.subr.bf16.mxu0 %v2632
    %3803 = vmatpush1.bf16.msra.mxu0 %v2631
    %3804 = vmatprep.mubr.bf16.mxu0 %v326
    %3805 = vmatmul.mubr.bf16.gmra.mrb[0].mxu0 %v325
    %v3806 = vpop.f32.mrb[0].mxu0
    %v3807 = vadd.f32 %v3766, %v3806
    %v3808 = vpop.f32.mrb[0].mxu0
    %v3809 = vadd.f32 %v3768, %v3808
    %v3810 = vpop.f32.mrb[0].mxu0
    %v3811 = vpop.f32.mrb[0].mxu0
    %3812 = vdwg.mxu0
    %3813 = vmatprep.subr.bf16.mxu0 %v2640
    %3814 = vmatpush1.bf16.msra.mxu0 %v2639
    %3815 = vmatprep.subr.bf16.mxu0 %v2648
    %3816 = vmatpush1.bf16.msra.mxu0 %v2647
    %3817 = vmatprep.subr.bf16.mxu0 %v2656
    %3818 = vmatpush1.bf16.msra.mxu0 %v2655
    %3819 = vmatprep.subr.bf16.mxu0 %v2664
    %3820 = vmatpush1.bf16.msra.mxu0 %v2663
    %3821 = vmatprep.subr.bf16.mxu0 %v2672
    %3822 = vmatpush1.bf16.msra.mxu0 %v2671
    %3823 = vmatprep.subr.bf16.mxu0 %v2680
    %3824 = vmatpush1.bf16.msra.mxu0 %v2679
    %3825 = vmatprep.subr.bf16.mxu0 %v2688
    %3826 = vmatpush1.bf16.msra.mxu0 %v2687
    %3827 = vmatprep.subr.bf16.mxu0 %v2696
    %3828 = vmatpush1.bf16.msra.mxu0 %v2695
    %3829 = vmatprep.subr.bf16.mxu0 %v2704
    %3830 = vmatpush1.bf16.msra.mxu0 %v2703
    %3831 = vmatprep.subr.bf16.mxu0 %v2712
    %3832 = vmatpush1.bf16.msra.mxu0 %v2711
    %3833 = vmatprep.subr.bf16.mxu0 %v2720
    %3834 = vmatpush1.bf16.msra.mxu0 %v2719
    %3835 = vmatprep.subr.bf16.mxu0 %v2728
    %3836 = vmatpush1.bf16.msra.mxu0 %v2727
    %3837 = vmatprep.subr.bf16.mxu0 %v2736
    %3838 = vmatpush1.bf16.msra.mxu0 %v2735
    %3839 = vmatprep.subr.bf16.mxu0 %v2744
    %3840 = vmatpush1.bf16.msra.mxu0 %v2743
    %3841 = vmatprep.subr.bf16.mxu0 %v2752
    %3842 = vmatpush1.bf16.msra.mxu0 %v2751
    %3843 = vmatprep.subr.bf16.mxu0 %v2760
    %3844 = vmatpush1.bf16.msra.mxu0 %v2759
    %3845 = vmatprep.mubr.bf16.mxu0 %v328
    %3846 = vmatmul.mubr.bf16.gmra.mrb[0].mxu0 %v327
    %v3847 = vpop.f32.mrb[0].mxu0
    %v3848 = vadd.f32 %v3807, %v3847
    %v3849 = vpop.f32.mrb[0].mxu0
    %v3850 = vadd.f32 %v3809, %v3849
    %v3851 = vpop.f32.mrb[0].mxu0
    %v3852 = vpop.f32.mrb[0].mxu0
    %3853 = vdwg.mxu0
    %3854 = vmatprep.subr.bf16.mxu0 %v2768
    %3855 = vmatpush1.bf16.msra.mxu0 %v2767
    %3856 = vmatprep.subr.bf16.mxu0 %v2776
    %3857 = vmatpush1.bf16.msra.mxu0 %v2775
    %3858 = vmatprep.subr.bf16.mxu0 %v2784
    %3859 = vmatpush1.bf16.msra.mxu0 %v2783
    %3860 = vmatprep.subr.bf16.mxu0 %v2792
    %3861 = vmatpush1.bf16.msra.mxu0 %v2791
    %3862 = vmatprep.subr.bf16.mxu0 %v2800
    %3863 = vmatpush1.bf16.msra.mxu0 %v2799
    %3864 = vmatprep.subr.bf16.mxu0 %v2808
    %3865 = vmatpush1.bf16.msra.mxu0 %v2807
    %3866 = vmatprep.subr.bf16.mxu0 %v2816
    %3867 = vmatpush1.bf16.msra.mxu0 %v2815
    %3868 = vmatprep.subr.bf16.mxu0 %v2824
    %3869 = vmatpush1.bf16.msra.mxu0 %v2823
    %3870 = vmatprep.subr.bf16.mxu0 %v2832
    %3871 = vmatpush1.bf16.msra.mxu0 %v2831
    %3872 = vmatprep.subr.bf16.mxu0 %v2840
    %3873 = vmatpush1.bf16.msra.mxu0 %v2839
    %3874 = vmatprep.subr.bf16.mxu0 %v2848
    %3875 = vmatpush1.bf16.msra.mxu0 %v2847
    %3876 = vmatprep.subr.bf16.mxu0 %v2856
    %3877 = vmatpush1.bf16.msra.mxu0 %v2855
    %3878 = vmatprep.subr.bf16.mxu0 %v2864
    %3879 = vmatpush1.bf16.msra.mxu0 %v2863
    %3880 = vmatprep.subr.bf16.mxu0 %v2872
    %3881 = vmatpush1.bf16.msra.mxu0 %v2871
    %3882 = vmatprep.subr.bf16.mxu0 %v2880
    %3883 = vmatpush1.bf16.msra.mxu0 %v2879
    %3884 = vmatprep.subr.bf16.mxu0 %v2888
    %3885 = vmatpush1.bf16.msra.mxu0 %v2887
    %3886 = vmatprep.mubr.bf16.mxu0 %v330
    %3887 = vmatmul.mubr.bf16.gmra.mrb[0].mxu0 %v329
    %v3888 = vpop.f32.mrb[0].mxu0
    %v3889 = vadd.f32 %v3848, %v3888
    %v3890 = vpop.f32.mrb[0].mxu0
    %v3891 = vadd.f32 %v3850, %v3890
    %v3892 = vpop.f32.mrb[0].mxu0
    %v3893 = vpop.f32.mrb[0].mxu0
    %3894 = vdwg.mxu0
    %3895 = vmatprep.subr.bf16.mxu0 %v2386
    %3896 = vmatpush1.bf16.msra.mxu0 %v2385
    %3897 = vmatprep.subr.bf16.mxu0 %v2394
    %3898 = vmatpush1.bf16.msra.mxu0 %v2393
    %3899 = vmatprep.subr.bf16.mxu0 %v2402
    %3900 = vmatpush1.bf16.msra.mxu0 %v2401
    %3901 = vmatprep.subr.bf16.mxu0 %v2410
    %3902 = vmatpush1.bf16.msra.mxu0 %v2409
    %3903 = vmatprep.subr.bf16.mxu0 %v2418
    %3904 = vmatpush1.bf16.msra.mxu0 %v2417
    %3905 = vmatprep.subr.bf16.mxu0 %v2426
    %3906 = vmatpush1.bf16.msra.mxu0 %v2425
    %3907 = vmatprep.subr.bf16.mxu0 %v2434
    %3908 = vmatpush1.bf16.msra.mxu0 %v2433
    %3909 = vmatprep.subr.bf16.mxu0 %v2442
    %3910 = vmatpush1.bf16.msra.mxu0 %v2441
    %3911 = vmatprep.subr.bf16.mxu0 %v2450
    %3912 = vmatpush1.bf16.msra.mxu0 %v2449
    %3913 = vmatprep.subr.bf16.mxu0 %v2458
    %3914 = vmatpush1.bf16.msra.mxu0 %v2457
    %3915 = vmatprep.subr.bf16.mxu0 %v2466
    %3916 = vmatpush1.bf16.msra.mxu0 %v2465
    %3917 = vmatprep.subr.bf16.mxu0 %v2474
    %3918 = vmatpush1.bf16.msra.mxu0 %v2473
    %3919 = vmatprep.subr.bf16.mxu0 %v2482
    %3920 = vmatpush1.bf16.msra.mxu0 %v2481
    %3921 = vmatprep.subr.bf16.mxu0 %v2490
    %3922 = vmatpush1.bf16.msra.mxu0 %v2489
    %3923 = vmatprep.subr.bf16.mxu0 %v2498
    %3924 = vmatpush1.bf16.msra.mxu0 %v2497
    %3925 = vmatprep.subr.bf16.mxu0 %v2506
    %3926 = vmatpush1.bf16.msra.mxu0 %v2505
    %3927 = vmatprep.mubr.bf16.mxu0 %v324
    %3928 = vmatmul.mubr.bf16.gmra.mrb[0].mxu0 %v323
    %v3929 = vpop.f32.mrb[0].mxu0
    %v3930 = vadd.f32 0.0, %v3929
    %v3931 = vpop.f32.mrb[0].mxu0
    %v3932 = vadd.f32 0.0, %v3931
    %v3933 = vpop.f32.mrb[0].mxu0
    %v3934 = vpop.f32.mrb[0].mxu0
    %3935 = vdwg.mxu0
    %3936 = vmatprep.subr.bf16.mxu0 %v2514
    %3937 = vmatpush1.bf16.msra.mxu0 %v2513
    %3938 = vmatprep.subr.bf16.mxu0 %v2522
    %3939 = vmatpush1.bf16.msra.mxu0 %v2521
    %3940 = vmatprep.subr.bf16.mxu0 %v2530
    %3941 = vmatpush1.bf16.msra.mxu0 %v2529
    %3942 = vmatprep.subr.bf16.mxu0 %v2538
    %3943 = vmatpush1.bf16.msra.mxu0 %v2537
    %3944 = vmatprep.subr.bf16.mxu0 %v2546
    %3945 = vmatpush1.bf16.msra.mxu0 %v2545
    %3946 = vmatprep.subr.bf16.mxu0 %v2554
    %3947 = vmatpush1.bf16.msra.mxu0 %v2553
    %3948 = vmatprep.subr.bf16.mxu0 %v2562
    %3949 = vmatpush1.bf16.msra.mxu0 %v2561
    %3950 = vmatprep.subr.bf16.mxu0 %v2570
    %3951 = vmatpush1.bf16.msra.mxu0 %v2569
    %3952 = vmatprep.subr.bf16.mxu0 %v2578
    %3953 = vmatpush1.bf16.msra.mxu0 %v2577
    %3954 = vmatprep.subr.bf16.mxu0 %v2586
    %3955 = vmatpush1.bf16.msra.mxu0 %v2585
    %3956 = vmatprep.subr.bf16.mxu0 %v2594
    %3957 = vmatpush1.bf16.msra.mxu0 %v2593
    %3958 = vmatprep.subr.bf16.mxu0 %v2602
    %3959 = vmatpush1.bf16.msra.mxu0 %v2601
    %3960 = vmatprep.subr.bf16.mxu0 %v2610
    %3961 = vmatpush1.bf16.msra.mxu0 %v2609
    %3962 = vmatprep.subr.bf16.mxu0 %v2618
    %3963 = vmatpush1.bf16.msra.mxu0 %v2617
    %3964 = vmatprep.subr.bf16.mxu0 %v2626
    %3965 = vmatpush1.bf16.msra.mxu0 %v2625
    %3966 = vmatprep.subr.bf16.mxu0 %v2634
    %3967 = vmatpush1.bf16.msra.mxu0 %v2633
    %3968 = vmatprep.mubr.bf16.mxu0 %v326
    %3969 = vmatmul.mubr.bf16.gmra.mrb[0].mxu0 %v325
    %v3970 = vpop.f32.mrb[0].mxu0
    %v3971 = vadd.f32 %v3930, %v3970
    %v3972 = vpop.f32.mrb[0].mxu0
    %v3973 = vadd.f32 %v3932, %v3972
    %v3974 = vpop.f32.mrb[0].mxu0
    %v3975 = vpop.f32.mrb[0].mxu0
    %3976 = vdwg.mxu0
    %3977 = vmatprep.subr.bf16.mxu0 %v2642
    %3978 = vmatpush1.bf16.msra.mxu0 %v2641
    %3979 = vmatprep.subr.bf16.mxu0 %v2650
    %3980 = vmatpush1.bf16.msra.mxu0 %v2649
    %3981 = vmatprep.subr.bf16.mxu0 %v2658
    %3982 = vmatpush1.bf16.msra.mxu0 %v2657
    %3983 = vmatprep.subr.bf16.mxu0 %v2666
    %3984 = vmatpush1.bf16.msra.mxu0 %v2665
    %3985 = vmatprep.subr.bf16.mxu0 %v2674
    %3986 = vmatpush1.bf16.msra.mxu0 %v2673
    %3987 = vmatprep.subr.bf16.mxu0 %v2682
    %3988 = vmatpush1.bf16.msra.mxu0 %v2681
    %3989 = vmatprep.subr.bf16.mxu0 %v2690
    %3990 = vmatpush1.bf16.msra.mxu0 %v2689
    %3991 = vmatprep.subr.bf16.mxu0 %v2698
    %3992 = vmatpush1.bf16.msra.mxu0 %v2697
    %3993 = vmatprep.subr.bf16.mxu0 %v2706
    %3994 = vmatpush1.bf16.msra.mxu0 %v2705
    %3995 = vmatprep.subr.bf16.mxu0 %v2714
    %3996 = vmatpush1.bf16.msra.mxu0 %v2713
    %3997 = vmatprep.subr.bf16.mxu0 %v2722
    %3998 = vmatpush1.bf16.msra.mxu0 %v2721
    %3999 = vmatprep.subr.bf16.mxu0 %v2730
    %4000 = vmatpush1.bf16.msra.mxu0 %v2729
    %4001 = vmatprep.subr.bf16.mxu0 %v2738
    %4002 = vmatpush1.bf16.msra.mxu0 %v2737
    %4003 = vmatprep.subr.bf16.mxu0 %v2746
    %4004 = vmatpush1.bf16.msra.mxu0 %v2745
    %4005 = vmatprep.subr.bf16.mxu0 %v2754
    %4006 = vmatpush1.bf16.msra.mxu0 %v2753
    %4007 = vmatprep.subr.bf16.mxu0 %v2762
    %4008 = vmatpush1.bf16.msra.mxu0 %v2761
    %4009 = vmatprep.mubr.bf16.mxu0 %v328
    %4010 = vmatmul.mubr.bf16.gmra.mrb[0].mxu0 %v327
    %v4011 = vpop.f32.mrb[0].mxu0
    %v4012 = vadd.f32 %v3971, %v4011
    %v4013 = vpop.f32.mrb[0].mxu0
    %v4014 = vadd.f32 %v3973, %v4013
    %v4015 = vpop.f32.mrb[0].mxu0
    %v4016 = vpop.f32.mrb[0].mxu0
    %4017 = vdwg.mxu0
    %4018 = vmatprep.subr.bf16.mxu0 %v2770
    %4019 = vmatpush1.bf16.msra.mxu0 %v2769
    %4020 = vmatprep.subr.bf16.mxu0 %v2778
    %4021 = vmatpush1.bf16.msra.mxu0 %v2777
    %4022 = vmatprep.subr.bf16.mxu0 %v2786
    %4023 = vmatpush1.bf16.msra.mxu0 %v2785
    %4024 = vmatprep.subr.bf16.mxu0 %v2794
    %4025 = vmatpush1.bf16.msra.mxu0 %v2793
    %4026 = vmatprep.subr.bf16.mxu0 %v2802
    %4027 = vmatpush1.bf16.msra.mxu0 %v2801
    %4028 = vmatprep.subr.bf16.mxu0 %v2810
    %4029 = vmatpush1.bf16.msra.mxu0 %v2809
    %4030 = vmatprep.subr.bf16.mxu0 %v2818
    %4031 = vmatpush1.bf16.msra.mxu0 %v2817
    %4032 = vmatprep.subr.bf16.mxu0 %v2826
    %4033 = vmatpush1.bf16.msra.mxu0 %v2825
    %4034 = vmatprep.subr.bf16.mxu0 %v2834
    %4035 = vmatpush1.bf16.msra.mxu0 %v2833
    %4036 = vmatprep.subr.bf16.mxu0 %v2842
    %4037 = vmatpush1.bf16.msra.mxu0 %v2841
    %4038 = vmatprep.subr.bf16.mxu0 %v2850
    %4039 = vmatpush1.bf16.msra.mxu0 %v2849
    %4040 = vmatprep.subr.bf16.mxu0 %v2858
    %4041 = vmatpush1.bf16.msra.mxu0 %v2857
    %4042 = vmatprep.subr.bf16.mxu0 %v2866
    %4043 = vmatpush1.bf16.msra.mxu0 %v2865
    %4044 = vmatprep.subr.bf16.mxu0 %v2874
    %4045 = vmatpush1.bf16.msra.mxu0 %v2873
    %4046 = vmatprep.subr.bf16.mxu0 %v2882
    %4047 = vmatpush1.bf16.msra.mxu0 %v2881
    %4048 = vmatprep.subr.bf16.mxu0 %v2890
    %4049 = vmatpush1.bf16.msra.mxu0 %v2889
    %4050 = vmatprep.mubr.bf16.mxu0 %v330
    %4051 = vmatmul.mubr.bf16.gmra.mrb[0].mxu0 %v329
    %v4052 = vpop.f32.mrb[0].mxu0
    %v4053 = vadd.f32 %v4012, %v4052
    %v4054 = vpop.f32.mrb[0].mxu0
    %v4055 = vadd.f32 %v4014, %v4054
    %v4056 = vpop.f32.mrb[0].mxu0
    %v4057 = vpop.f32.mrb[0].mxu0
    %4058 = vdwg.mxu0
    %v4059 = vpack.c.bf16 %v3563, %v3561
    %v4060 = vpack.c.bf16 %v3727, %v3725
    %v4061 = vpack.c.bf16 %v3891, %v3889
    %v4062 = vpack.c.bf16 %v4055, %v4053
    %v4063 = vld [vmem:[#allocation10] sm:$0xf]
    %v4064 = vld [vmem:[#allocation10 + $0x4] sm:$0xf]
    %v4065 = vld [vmem:[#allocation10 + $0x8] sm:$0xf]
    %v4066 = vld [vmem:[#allocation10 + $0xc] sm:$0xf]
    %v4067 = vld [vmem:[#allocation10 + $0x10] sm:$0xf]
    %v4068 = vld [vmem:[#allocation10 + $0x14] sm:$0xf]
    %v4069 = vld [vmem:[#allocation10 + $0x18] sm:$0xf]
    %v4070 = vld [vmem:[#allocation10 + $0x1c] sm:$0xf]
    %v4071 = vld [vmem:[#allocation10 + $0x20] sm:$0xf]
    %v4072 = vld [vmem:[#allocation10 + $0x24] sm:$0xf]
    %v4073 = vld [vmem:[#allocation10 + $0x28] sm:$0xf]
    %v4074 = vld [vmem:[#allocation10 + $0x2c] sm:$0xf]
    %v4075 = vld [vmem:[#allocation10 + $0x30] sm:$0xf]
    %v4076 = vld [vmem:[#allocation10 + $0x34] sm:$0xf]
    %v4077 = vld [vmem:[#allocation10 + $0x38] sm:$0xf]
    %v4078 = vld [vmem:[#allocation10 + $0x3c] sm:$0xf]
    %v4095 = vunpack.c.l.b16 %v4063
    %v4096 = vunpack.c.l.b16 %v4064
    %v4097 = vunpack.c.l.b16 %v4065
    %v4098 = vunpack.c.l.b16 %v4066
    %v4099 = vunpack.c.l.b16 %v4067
    %v4100 = vunpack.c.l.b16 %v4068
    %v4101 = vunpack.c.l.b16 %v4069
    %v4102 = vunpack.c.l.b16 %v4070
    %v4103 = vunpack.c.l.b16 %v4071
    %v4104 = vunpack.c.l.b16 %v4072
    %v4105 = vunpack.c.l.b16 %v4073
    %v4106 = vunpack.c.l.b16 %v4074
    %v4107 = vunpack.c.l.b16 %v4075
    %v4108 = vunpack.c.l.b16 %v4076
    %v4109 = vunpack.c.l.b16 %v4077
    %v4110 = vunpack.c.l.b16 %v4078
    %v4111 = vpack.c.b16 %v4096, %v4095
    %v4112 = vpack.c.b16 %v4098, %v4097
    %v4113 = vpack.c.b16 %v4100, %v4099
    %v4114 = vpack.c.b16 %v4102, %v4101
    %v4115 = vpack.c.b16 %v4104, %v4103
    %v4116 = vpack.c.b16 %v4106, %v4105
    %v4117 = vpack.c.b16 %v4108, %v4107
    %v4118 = vpack.c.b16 %v4110, %v4109
    %4127 = vmatprep.subr.bf16.mxu0 0
    %4128 = vmatpush1.bf16.msra.mxu0 %v4111
    %4129 = vmatprep.subr.bf16.mxu0 0
    %4130 = vmatpush1.bf16.msra.mxu0 %v4112
    %4131 = vmatprep.subr.bf16.mxu0 0
    %4132 = vmatpush1.bf16.msra.mxu0 %v4113
    %4133 = vmatprep.subr.bf16.mxu0 0
    %4134 = vmatpush1.bf16.msra.mxu0 %v4114
    %4135 = vmatprep.subr.bf16.mxu0 0
    %4136 = vmatpush1.bf16.msra.mxu0 %v4115
    %4137 = vmatprep.subr.bf16.mxu0 0
    %4138 = vmatpush1.bf16.msra.mxu0 %v4116
    %4139 = vmatprep.subr.bf16.mxu0 0
    %4140 = vmatpush1.bf16.msra.mxu0 %v4117
    %4141 = vmatprep.subr.bf16.mxu0 0
    %4142 = vmatpush1.bf16.msra.mxu0 %v4118
    %4143 = vmatprep.subr.bf16.mxu0 0
    %4144 = vmatpush1.bf16.msra.mxu0 0
    %4145 = vmatprep.subr.bf16.mxu0 0
    %4146 = vmatpush1.bf16.msra.mxu0 0
    %4147 = vmatprep.subr.bf16.mxu0 0
    %4148 = vmatpush1.bf16.msra.mxu0 0
    %4149 = vmatprep.subr.bf16.mxu0 0
    %4150 = vmatpush1.bf16.msra.mxu0 0
    %4151 = vmatprep.subr.bf16.mxu0 0
    %4152 = vmatpush1.bf16.msra.mxu0 0
    %4153 = vmatprep.subr.bf16.mxu0 0
    %4154 = vmatpush1.bf16.msra.mxu0 0
    %4155 = vmatprep.subr.bf16.mxu0 0
    %4156 = vmatpush1.bf16.msra.mxu0 0
    %4157 = vmatprep.subr.bf16.mxu0 0
    %4158 = vmatpush1.bf16.msra.mxu0 0
    %4159 = vmatprep.mubr.bf16.mxu0 0
    %4160 = vmatmul.mubr.bf16.gmra.mrb[0].mxu0 %v4059
    %v4161 = vpop.f32.mrb[0].mxu0
    %v4162 = vadd.f32 0.0, %v4161
    %v4163 = vpop.f32.mrb[0].mxu0
    %v4164 = vpop.f32.mrb[0].mxu0
    %v4165 = vadd.f32 0.0, %v4164
    %v4166 = vpop.f32.mrb[0].mxu0
    %4167 = vmatprep.mubr.bf16.mxu0 0
    %4168 = vmatmul.mubr.bf16.gmra.mrb[0].mxu0 %v4060
    %v4169 = vpop.f32.mrb[0].mxu0
    %v4170 = vadd.f32 0.0, %v4169
    %v4171 = vpop.f32.mrb[0].mxu0
    %v4172 = vpop.f32.mrb[0].mxu0
    %v4173 = vadd.f32 0.0, %v4172
    %v4174 = vpop.f32.mrb[0].mxu0
    %4175 = vmatprep.mubr.bf16.mxu0 0
    %4176 = vmatmul.mubr.bf16.gmra.mrb[0].mxu0 %v4061
    %v4177 = vpop.f32.mrb[0].mxu0
    %v4178 = vadd.f32 0.0, %v4177
    %v4179 = vpop.f32.mrb[0].mxu0
    %v4180 = vpop.f32.mrb[0].mxu0
    %v4181 = vadd.f32 0.0, %v4180
    %v4182 = vpop.f32.mrb[0].mxu0
    %4183 = vmatprep.mubr.bf16.mxu0 0
    %4184 = vmatmul.mubr.bf16.gmra.mrb[0].mxu0 %v4062
    %v4185 = vpop.f32.mrb[0].mxu0
    %v4186 = vadd.f32 0.0, %v4185
    %v4187 = vpop.f32.mrb[0].mxu0
    %v4188 = vpop.f32.mrb[0].mxu0
    %v4189 = vadd.f32 0.0, %v4188
    %v4190 = vpop.f32.mrb[0].mxu0
    %4191 = vdwg.mxu0
    %v4192 = vadd.f32 %v293, %v4162
    %v4193 = vadd.f32 %v296, %v4165
    %v4194 = vadd.f32 %v301, %v4170
    %v4195 = vadd.f32 %v304, %v4173
    %v4196 = vadd.f32 %v309, %v4178
    %v4197 = vadd.f32 %v312, %v4181
    %v4198 = vadd.f32 %v317, %v4186
    %v4199 = vadd.f32 %v320, %v4189
    %4200 = vmax.xlane.f32.xlu0 %v4192
    %v4201 = vpop.xlane.xlu0 %4200
    %4202 = vmax.xlane.f32.xlu0 %v4193
    %v4203 = vpop.xlane.xlu0 %4202
    %4204 = vmax.xlane.f32.xlu0 %v4194
    %v4205 = vpop.xlane.xlu0 %4204
    %4206 = vmax.xlane.f32.xlu0 %v4195
    %v4207 = vpop.xlane.xlu0 %4206
    %4208 = vmax.xlane.f32.xlu0 %v4196
    %v4209 = vpop.xlane.xlu0 %4208
    %4210 = vmax.xlane.f32.xlu0 %v4197
    %v4211 = vpop.xlane.xlu0 %4210
    %4212 = vmax.xlane.f32.xlu0 %v4198
    %v4213 = vpop.xlane.xlu0 %4212
    %4214 = vmax.xlane.f32.xlu0 %v4199
    %v4215 = vpop.xlane.xlu0 %4214
    %v4216 = vsub.f32 %v4192, %v4201
    %v4217 = vsub.f32 %v4193, %v4203
    %v4218 = vsub.f32 %v4194, %v4205
    %v4219 = vsub.f32 %v4195, %v4207
    %v4220 = vsub.f32 %v4196, %v4209
    %v4221 = vsub.f32 %v4197, %v4211
    %v4222 = vsub.f32 %v4198, %v4213
    %v4223 = vsub.f32 %v4199, %v4215
    %v4224 = vmul.f32 %v4216, 1.442695
    %v4225 = vpow.pop %v4224
    %v4226 = vmul.f32 %v4217, 1.442695
    %v4227 = vpow.pop %v4226
    %v4228 = vmul.f32 %v4218, 1.442695
    %v4229 = vpow.pop %v4228
    %v4230 = vmul.f32 %v4219, 1.442695
    %v4231 = vpow.pop %v4230
    %v4232 = vmul.f32 %v4220, 1.442695
    %v4233 = vpow.pop %v4232
    %v4234 = vmul.f32 %v4221, 1.442695
    %v4235 = vpow.pop %v4234
    %v4236 = vmul.f32 %v4222, 1.442695
    %v4237 = vpow.pop %v4236
    %v4238 = vmul.f32 %v4223, 1.442695
    %v4239 = vpow.pop %v4238
    %4240 = vadd.xlane.f32.xlu0 %v4225
    %v4241 = vpop.xlane.xlu0 %4240
    %4242 = vadd.xlane.f32.xlu0 %v4227
    %v4243 = vpop.xlane.xlu0 %4242
    %4244 = vadd.xlane.f32.xlu0 %v4229
    %v4245 = vpop.xlane.xlu0 %4244
    %4246 = vadd.xlane.f32.xlu0 %v4231
    %v4247 = vpop.xlane.xlu0 %4246
    %4248 = vadd.xlane.f32.xlu0 %v4233
    %v4249 = vpop.xlane.xlu0 %4248
    %4250 = vadd.xlane.f32.xlu0 %v4235
    %v4251 = vpop.xlane.xlu0 %4250
    %4252 = vadd.xlane.f32.xlu0 %v4237
    %v4253 = vpop.xlane.xlu0 %4252
    %4254 = vadd.xlane.f32.xlu0 %v4239
    %v4255 = vpop.xlane.xlu0 %4254
    %v4256 = vlog2.pop %v4241
    %v4257 = vmul.f32 %v4256, 0.6931472
    %v4258 = vlog2.pop %v4243
    %v4259 = vmul.f32 %v4258, 0.6931472
    %v4260 = vlog2.pop %v4245
    %v4261 = vmul.f32 %v4260, 0.6931472
    %v4262 = vlog2.pop %v4247
    %v4263 = vmul.f32 %v4262, 0.6931472
    %v4264 = vlog2.pop %v4249
    %v4265 = vmul.f32 %v4264, 0.6931472
    %v4266 = vlog2.pop %v4251
    %v4267 = vmul.f32 %v4266, 0.6931472
    %v4268 = vlog2.pop %v4253
    %v4269 = vmul.f32 %v4268, 0.6931472
    %v4270 = vlog2.pop %v4255
    %v4271 = vmul.f32 %v4270, 0.6931472
    %v4272 = vsub.f32 %v4216, %v4257
    %v4273 = vsub.f32 %v4217, %v4259
    %v4274 = vsub.f32 %v4218, %v4261
    %v4275 = vsub.f32 %v4219, %v4263
    %v4276 = vsub.f32 %v4220, %v4265
    %v4277 = vsub.f32 %v4221, %v4267
    %v4278 = vsub.f32 %v4222, %v4269
    %v4279 = vsub.f32 %v4223, %v4271
    %4280 = vst [vmem:[#allocation13] sm:$0xff] %v4272
    %4281 = vst [vmem:[#allocation13 + $0x8] sm:$0xff] %v4273
    %4282 = vst [vmem:[#allocation13 + $0x10] sm:$0xff] %v4274
    %4283 = vst [vmem:[#allocation13 + $0x18] sm:$0xff] %v4275
    %4284 = vst [vmem:[#allocation13 + $0x20] sm:$0xff] %v4276
    %4285 = vst [vmem:[#allocation13 + $0x28] sm:$0xff] %v4277
    %4286 = vst [vmem:[#allocation13 + $0x30] sm:$0xff] %v4278
    %4287 = vst [vmem:[#allocation13 + $0x38] sm:$0xff] %v4279
    // Predicated region
    $region54: #{tpu_custom_call.1} parent=1 // pred_check
      _
    $region55: #{tpu_custom_call.1} parent=1 // pred_check_branch
      %4289 = sbr.rel (0) target = $region57
    $region56: #{tpu_custom_call.1} parent=1 // pred_region
      %s4291 = ssub.s32 1024, 1024
      %4292 = vsyncadd [#allocation4], %s4291
      %s4293 = sshll.u32 [#allocation13], 4
      %s4294 = int_to_ptr.vmem [resolvable:$true] %s4293
      %4299 = dma.vmem_to_hbm [thread:$0]  %s4294, 1024, %s7, [#allocation4], 128, 128, 8
    $region57: #{tpu_custom_call.1} parent=1 // pred_fallthru
      _
    // Predicated region
    $region58: #{tpu_custom_call.1} parent=1 // pred_check
      _
    $region59: #{tpu_custom_call.1} parent=1 // pred_check_branch
      %4301 = sbr.rel (0) target = $region61
    $region60: #{tpu_custom_call.1} parent=1 // pred_region
      %4302 = dma.done [#allocation4], 1024
    $region61: #{tpu_custom_call.1} parent=1 // pred_fallthru
      _
    %4303 = vsyncpa [#allocation3], 1
    %4304 = vsyncpa [#allocation6], 1
    %4305 = vsyncpa [#allocation9], 1
    %4306 = vsyncpa [#allocation12], 1
    %4307 = vsyncpa [#allocation4], 1

</llo_original>
